<compile_context>
chip_gen: v7x
topology: tpu7x:2x2x1
jax: 0.10.0
libtpu: 0.0.40
codegen_flags: <defaults>
</compile_context>

<pallas_src>
import jax
import jax.numpy as jnp
from jax import lax
from jax.experimental import pallas as pl
from jax.experimental.pallas import tpu as pltpu


# ----------------------------------------------------------------------------- shape helpers
def _tinyvgg_dims(h, w):
    c1a = (h - 2, w - 2)                 # block1 conv1 (valid 3x3)
    c1b = (h - 4, w - 4)                 # block1 conv2
    p1 = (c1b[0] // 2, c1b[1] // 2)      # block1 maxpool 2x2
    c2a = (p1[0] - 2, p1[1] - 2)         # block2 conv1
    c2b = (p1[0] - 4, p1[1] - 4)         # block2 conv2
    p2 = (c2b[0] // 2, c2b[1] // 2)      # block2 maxpool 2x2
    return c1a, c1b, p1, c2a, c2b, p2


# ----------------------------------------------------------------------------- fused kernel
def _build_tinyvgg_call(n, h, w, cin, hidden, odim):
    c1a, c1b, p1, c2a, c2b, p2 = _tinyvgg_dims(h, w)
    assert c1b[0] % 2 == 0 and c1b[1] % 2 == 0
    assert c2b[0] % 2 == 0 and c2b[1] % 2 == 0

    def kernel(x_ref, w1a_ref, b1a_ref, w1b_ref, b1b_ref,
               w2a_ref, b2a_ref, w2b_ref, b2b_ref, wl_ref, bl_ref,
               o_ref, a1_ref, a2_ref, a3_ref, a4_ref):
        # a1: conv1a out, a2: pool1 out, a3: conv2a out, a4: pool2 out  (all VMEM scratch)

        def conv_row(rows, w_mat, b_row, wo):
            # rows: 3 loaded source rows, each (W_src, Cin).  One im2col matmul per row.
            pieces = []
            for r in rows:                              # kh = 0, 1, 2
                for kw in range(3):
                    pieces.append(r[kw:kw + wo, :])
            patch = jnp.concatenate(pieces, axis=-1)    # (wo, 9*Cin)
            y = jnp.dot(patch, w_mat, preferred_element_type=jnp.float32) + b_row
            return jnp.maximum(y, 0.0)                  # ReLU fused

        def pool_selectors(npool, nin):
            # one-hot (npool, nin) f32 matrices selecting even / odd members of W pairs
            rows_i = lax.broadcasted_iota(jnp.int32, (npool, nin), 0)
            cols_i = lax.broadcasted_iota(jnp.int32, (npool, nin), 1)
            ev = (cols_i == 2 * rows_i).astype(jnp.float32)
            od = (cols_i == 2 * rows_i + 1).astype(jnp.float32)
            return ev, od

        w1a = w1a_ref[...]; b1a = b1a_ref[...]
        w1b = w1b_ref[...]; b1b = b1b_ref[...]
        w2a = w2a_ref[...]; b2a = b2a_ref[...]
        w2b = w2b_ref[...]; b2b = b2b_ref[...]
        sel1e, sel1o = pool_selectors(p1[1], c1b[1])
        sel2e, sel2o = pool_selectors(p2[1], c2b[1])

        # ---- block1 / conv1 + ReLU : x (h, w, cin) -> a1
        def body_1a(i, c):
            rows = [x_ref[i + k] for k in range(3)]
            a1_ref[i] = conv_row(rows, w1a, b1a, c1a[1])
            return c
        lax.fori_loop(0, c1a[0], body_1a, 0)

        # ---- block1 / conv2 + ReLU + MaxPool2x2 (fused): a1 -> a2
        def body_1b(i, c):
            h0 = 2 * i
            rows = [a1_ref[h0 + k] for k in range(4)]
            y0 = conv_row(rows[0:3], w1b, b1b, c1b[1])
            y1 = conv_row(rows[1:4], w1b, b1b, c1b[1])
            m = jnp.maximum(y0, y1)                     # pool along H
            a2_ref[i] = jnp.maximum(                    # pool along W via MXU selection
                jnp.dot(sel1e, m, preferred_element_type=jnp.float32),
                jnp.dot(sel1o, m, preferred_element_type=jnp.float32))
            return c
        lax.fori_loop(0, p1[0], body_1b, 0)

        # ---- block2 / conv1 + ReLU : a2 -> a3
        def body_2a(i, c):
            rows = [a2_ref[i + k] for k in range(3)]
            a3_ref[i] = conv_row(rows, w2a, b2a, c2a[1])
            return c
        lax.fori_loop(0, c2a[0], body_2a, 0)

        # ---- block2 / conv2 + ReLU + MaxPool2x2 (fused): a3 -> a4
        def body_2b(i, c):
            h0 = 2 * i
            rows = [a3_ref[h0 + k] for k in range(4)]
            y0 = conv_row(rows[0:3], w2b, b2b, c2b[1])
            y1 = conv_row(rows[1:4], w2b, b2b, c2b[1])
            m = jnp.maximum(y0, y1)
            a4_ref[i] = jnp.maximum(
                jnp.dot(sel2e, m, preferred_element_type=jnp.float32),
                jnp.dot(sel2o, m, preferred_element_type=jnp.float32))
            return c
        lax.fori_loop(0, p2[0], body_2b, 0)

        # ---- classifier: Flatten + Linear.  wl_ref is pre-permuted host-side to
        # (odim, p2_h, p2_w, hidden) matching PyTorch's (C,H,W) flatten order, so the
        # contraction is a broadcast-multiply + reductions (no activation transpose).
        feats = a4_ref[...]                             # (p2_h, p2_w, hidden)
        prod = feats * wl_ref[...]                      # (odim, p2_h, p2_w, hidden)
        s = jnp.sum(prod, axis=1)                       # (odim, p2_w, hidden)
        s = jnp.sum(s, axis=1)                          # (odim, hidden)
        s = jnp.sum(s, axis=1, keepdims=True)           # (odim, 1)
        o_ref[...] = s + bl_ref[...]

    return pl.pallas_call(
        kernel,
        out_shape=jax.ShapeDtypeStruct((n, odim, 1), jnp.float32),
        grid=(n,),
        in_specs=[
            pl.BlockSpec((None, h, w, cin), lambda i: (i, 0, 0, 0)),
            pl.BlockSpec((9 * cin, hidden), lambda i: (0, 0)),
            pl.BlockSpec((1, hidden), lambda i: (0, 0)),
            pl.BlockSpec((9 * hidden, hidden), lambda i: (0, 0)),
            pl.BlockSpec((1, hidden), lambda i: (0, 0)),
            pl.BlockSpec((9 * hidden, hidden), lambda i: (0, 0)),
            pl.BlockSpec((1, hidden), lambda i: (0, 0)),
            pl.BlockSpec((9 * hidden, hidden), lambda i: (0, 0)),
            pl.BlockSpec((1, hidden), lambda i: (0, 0)),
            pl.BlockSpec((odim, p2[0], p2[1], hidden), lambda i: (0, 0, 0, 0)),
            pl.BlockSpec((odim, 1), lambda i: (0, 0)),
        ],
        out_specs=pl.BlockSpec((None, odim, 1), lambda i: (i, 0, 0)),
        scratch_shapes=[
            pltpu.VMEM((c1a[0], c1a[1], hidden), jnp.float32),
            pltpu.VMEM((p1[0], p1[1], hidden), jnp.float32),
            pltpu.VMEM((c2a[0], c2a[1], hidden), jnp.float32),
            pltpu.VMEM((p2[0], p2[1], hidden), jnp.float32),
        ],
        compiler_params=pltpu.CompilerParams(
            dimension_semantics=("parallel",)),
    )


# ----------------------------------------------------------------------------- forward
@jax.jit
def tinyvgg_forward(x_nchw, params):
    x = jnp.transpose(x_nchw, (0, 2, 3, 1)).astype(jnp.float32)     # NCHW -> NHWC (once)
    n, h, w, cin = x.shape
    hidden = params["b1a"].shape[-1]
    odim = params["bl"].shape[-1]
    _, _, _, _, _, p2 = _tinyvgg_dims(h, w)

    # Host-side (trace-time) weight re-layouts, all tiny:
    #   conv HWIO (3,3,Cin,Cout) -> im2col (9*Cin, Cout)
    #   classifier (Cin*13*13, O) in PyTorch (C,H,W) flatten order -> (O, H, W, C)
    w1a = params["w1a"].reshape(9 * cin, hidden)
    w1b = params["w1b"].reshape(9 * hidden, hidden)
    w2a = params["w2a"].reshape(9 * hidden, hidden)
    w2b = params["w2b"].reshape(9 * hidden, hidden)
    wl = jnp.transpose(params["wl"].reshape(hidden, p2[0], p2[1], odim), (3, 1, 2, 0))
    bl = params["bl"].reshape(odim, 1)

    fwd = _build_tinyvgg_call(n, h, w, cin, hidden, odim)
    y = fwd(x, w1a, params["b1a"], w1b, params["b1b"],
            w2a, params["b2a"], w2b, params["b2b"], wl, bl)
    return y.reshape(n, odim)


# ----------------------------------------------------------------------------- params
def init_params(key, input_shape=3, hidden_units=8, output_shape=3):
    ks = jax.random.split(key, 10)
    s = 0.1

    def conv_w(k, cin, cout):
        return s * jax.random.normal(k, (3, 3, cin, cout), jnp.float32)   # HWIO

    return {
        "w1a": conv_w(ks[0], input_shape, hidden_units),
        "b1a": s * jax.random.normal(ks[1], (1, hidden_units), jnp.float32),
        "w1b": conv_w(ks[2], hidden_units, hidden_units),
        "b1b": s * jax.random.normal(ks[3], (1, hidden_units), jnp.float32),
        "w2a": conv_w(ks[4], hidden_units, hidden_units),
        "b2a": s * jax.random.normal(ks[5], (1, hidden_units), jnp.float32),
        "w2b": conv_w(ks[6], hidden_units, hidden_units),
        "b2b": s * jax.random.normal(ks[7], (1, hidden_units), jnp.float32),
        # classifier weight indexed in PyTorch's NCHW flatten order: (C*13*13, out)
        "wl": s * jax.random.normal(ks[8], (hidden_units * 13 * 13, output_shape),
                                    jnp.float32),
        "bl": s * jax.random.normal(ks[9], (1, output_shape), jnp.float32),
    }


# ----------------------------------------------------------------------------- reference (pure JAX / XLA)
def tinyvgg_reference(x_nchw, params):
    def conv(x, w_hwio, b):
        y = jax.lax.conv_general_dilated(
            x, w_hwio, window_strides=(1, 1), padding="VALID",
            dimension_numbers=("NCHW", "HWIO", "NCHW"))
        return jax.nn.relu(y + b.reshape(1, -1, 1, 1))

    def pool(x):
        return jax.lax.reduce_window(
            x, -jnp.inf, jax.lax.max,
            window_dimensions=(1, 1, 2, 2), window_strides=(1, 1, 2, 2),
            padding="VALID")

    x = x_nchw.astype(jnp.float32)
    x = pool(conv(conv(x, params["w1a"], params["b1a"]),
                  params["w1b"], params["b1b"]))
    x = pool(conv(conv(x, params["w2a"], params["b2a"]),
                  params["w2b"], params["b2b"]))
    x = x.reshape(x.shape[0], -1)                       # NCHW flatten = (C,H,W) order
    return x @ params["wl"] + params["bl"]


# ----------------------------------------------------------------------------- main
if __name__ == "__main__":
    key = jax.random.PRNGKey(0)
    k_x, k_p = jax.random.split(key)

    # 64x64 input is what the module implies: 64->62->60->30->28->26->13 (13*13 flatten)
    N, C_IN, H, W = 2, 3, 64, 64
    HIDDEN, OUT = 8, 3

    x = jax.random.normal(k_x, (N, C_IN, H, W), jnp.float32)        # NCHW like PyTorch
    params = init_params(k_p, input_shape=C_IN, hidden_units=HIDDEN, output_shape=OUT)

    y = jax.block_until_ready(tinyvgg_forward(x, params))
    y_ref = jax.block_until_ready(tinyvgg_reference(x, params))

    assert y.shape == (N, OUT), y.shape
    assert jnp.allclose(y, y_ref, atol=2e-3, rtol=2e-3), (y, y_ref)

    print("KERNEL_OK")
</pallas_src>

<mosaic_0001>
module attributes {stable_mosaic.version = 11 : i64} {
  func.func @kernel(%arg0: i32, %arg1: memref<1x64x64x3xf32, #tpu.memory_space<vmem>>, %arg2: memref<27x8xf32, #tpu.memory_space<vmem>>, %arg3: memref<1x8xf32, #tpu.memory_space<vmem>>, %arg4: memref<72x8xf32, #tpu.memory_space<vmem>>, %arg5: memref<1x8xf32, #tpu.memory_space<vmem>>, %arg6: memref<72x8xf32, #tpu.memory_space<vmem>>, %arg7: memref<1x8xf32, #tpu.memory_space<vmem>>, %arg8: memref<72x8xf32, #tpu.memory_space<vmem>>, %arg9: memref<1x8xf32, #tpu.memory_space<vmem>>, %arg10: memref<3x13x13x8xf32, #tpu.memory_space<vmem>>, %arg11: memref<3x1xf32, #tpu.memory_space<vmem>>, %arg12: memref<1x3x1xf32, #tpu.memory_space<vmem>>, %arg13: memref<62x62x8xf32, #tpu.memory_space<vmem>>, %arg14: memref<30x30x8xf32, #tpu.memory_space<vmem>>, %arg15: memref<28x28x8xf32, #tpu.memory_space<vmem>>, %arg16: memref<13x13x8xf32, #tpu.memory_space<vmem>>) attributes {dimension_semantics = [#tpu.dimension_semantics<parallel>], iteration_bounds = array<i64: 2>, scalar_prefetch = 0 : i64, scratch_operands = 4 : i64, tpu.core_type = #tpu.core_type<tc>, window_params = [{transform_indices = @transform_0, window_bounds = array<i64: 1, 64, 64, 3>}, {pipeline_mode = #tpu.pipeline_mode<synchronous>, transform_indices = @transform_1, window_bounds = array<i64: 27, 8>}, {pipeline_mode = #tpu.pipeline_mode<synchronous>, transform_indices = @transform_2, window_bounds = array<i64: 1, 8>}, {pipeline_mode = #tpu.pipeline_mode<synchronous>, transform_indices = @transform_3, window_bounds = array<i64: 72, 8>}, {pipeline_mode = #tpu.pipeline_mode<synchronous>, transform_indices = @transform_4, window_bounds = array<i64: 1, 8>}, {pipeline_mode = #tpu.pipeline_mode<synchronous>, transform_indices = @transform_5, window_bounds = array<i64: 72, 8>}, {pipeline_mode = #tpu.pipeline_mode<synchronous>, transform_indices = @transform_6, window_bounds = array<i64: 1, 8>}, {pipeline_mode = #tpu.pipeline_mode<synchronous>, transform_indices = @transform_7, window_bounds = array<i64: 72, 8>}, {pipeline_mode = #tpu.pipeline_mode<synchronous>, transform_indices = @transform_8, window_bounds = array<i64: 1, 8>}, {pipeline_mode = #tpu.pipeline_mode<synchronous>, transform_indices = @transform_9, window_bounds = array<i64: 3, 13, 13, 8>}, {pipeline_mode = #tpu.pipeline_mode<synchronous>, transform_indices = @transform_10, window_bounds = array<i64: 3, 1>}, {transform_indices = @transform_11, window_bounds = array<i64: 1, 3, 1>}]} {
    %c0 = arith.constant 0 : index
    %c0_0 = arith.constant 0 : index
    %0 = vector.load %arg2[%c0, %c0_0] : memref<27x8xf32, #tpu.memory_space<vmem>>, vector<27x8xf32>
    %c0_1 = arith.constant 0 : index
    %c0_2 = arith.constant 0 : index
    %1 = vector.load %arg3[%c0_1, %c0_2] : memref<1x8xf32, #tpu.memory_space<vmem>>, vector<1x8xf32>
    %c0_3 = arith.constant 0 : index
    %c0_4 = arith.constant 0 : index
    %2 = vector.load %arg4[%c0_3, %c0_4] : memref<72x8xf32, #tpu.memory_space<vmem>>, vector<72x8xf32>
    %c0_5 = arith.constant 0 : index
    %c0_6 = arith.constant 0 : index
    %3 = vector.load %arg5[%c0_5, %c0_6] : memref<1x8xf32, #tpu.memory_space<vmem>>, vector<1x8xf32>
    %c0_7 = arith.constant 0 : index
    %c0_8 = arith.constant 0 : index
    %4 = vector.load %arg6[%c0_7, %c0_8] : memref<72x8xf32, #tpu.memory_space<vmem>>, vector<72x8xf32>
    %c0_9 = arith.constant 0 : index
    %c0_10 = arith.constant 0 : index
    %5 = vector.load %arg7[%c0_9, %c0_10] : memref<1x8xf32, #tpu.memory_space<vmem>>, vector<1x8xf32>
    %c0_11 = arith.constant 0 : index
    %c0_12 = arith.constant 0 : index
    %6 = vector.load %arg8[%c0_11, %c0_12] : memref<72x8xf32, #tpu.memory_space<vmem>>, vector<72x8xf32>
    %c0_13 = arith.constant 0 : index
    %c0_14 = arith.constant 0 : index
    %7 = vector.load %arg9[%c0_13, %c0_14] : memref<1x8xf32, #tpu.memory_space<vmem>>, vector<1x8xf32>
    %8 = tpu.iota {dimensions = array<i32: 0>} : vector<30x60xi32>
    %9 = tpu.iota {dimensions = array<i32: 1>} : vector<30x60xi32>
    %c2_i32 = arith.constant 2 : i32
    %10 = vector.broadcast %c2_i32 : i32 to vector<30x60xi32>
    %11 = arith.muli %10, %8 : vector<30x60xi32>
    %12 = arith.cmpi eq, %9, %11 : vector<30x60xi32>
    %13 = arith.extui %12 : vector<30x60xi1> to vector<30x60xi32>
    %14 = arith.sitofp %13 : vector<30x60xi32> to vector<30x60xf32>
    %c2_i32_15 = arith.constant 2 : i32
    %15 = vector.broadcast %c2_i32_15 : i32 to vector<30x60xi32>
    %16 = arith.muli %15, %8 : vector<30x60xi32>
    %c1_i32 = arith.constant 1 : i32
    %17 = vector.broadcast %c1_i32 : i32 to vector<30x60xi32>
    %18 = arith.addi %16, %17 : vector<30x60xi32>
    %19 = arith.cmpi eq, %9, %18 : vector<30x60xi32>
    %20 = arith.extui %19 : vector<30x60xi1> to vector<30x60xi32>
    %21 = arith.sitofp %20 : vector<30x60xi32> to vector<30x60xf32>
    %22 = tpu.iota {dimensions = array<i32: 0>} : vector<13x26xi32>
    %23 = tpu.iota {dimensions = array<i32: 1>} : vector<13x26xi32>
    %c2_i32_16 = arith.constant 2 : i32
    %24 = vector.broadcast %c2_i32_16 : i32 to vector<13x26xi32>
    %25 = arith.muli %24, %22 : vector<13x26xi32>
    %26 = arith.cmpi eq, %23, %25 : vector<13x26xi32>
    %27 = arith.extui %26 : vector<13x26xi1> to vector<13x26xi32>
    %28 = arith.sitofp %27 : vector<13x26xi32> to vector<13x26xf32>
    %c2_i32_17 = arith.constant 2 : i32
    %29 = vector.broadcast %c2_i32_17 : i32 to vector<13x26xi32>
    %30 = arith.muli %29, %22 : vector<13x26xi32>
    %c1_i32_18 = arith.constant 1 : i32
    %31 = vector.broadcast %c1_i32_18 : i32 to vector<13x26xi32>
    %32 = arith.addi %30, %31 : vector<13x26xi32>
    %33 = arith.cmpi eq, %23, %32 : vector<13x26xi32>
    %34 = arith.extui %33 : vector<13x26xi1> to vector<13x26xi32>
    %35 = arith.sitofp %34 : vector<13x26xi32> to vector<13x26xf32>
    %c0_i32 = arith.constant 0 : i32
    %c62_i32 = arith.constant 62 : i32
    %36 = arith.addi %c0_i32, %c62_i32 : i32
    %c1_i32_19 = arith.constant 1 : i32
    scf.for %arg17 = %c0_i32 to %36 step %c1_i32_19  : i32 {
      %c0_i32_44 = arith.constant 0 : i32
      %54 = arith.addi %arg17, %c0_i32_44 : i32
      %c0_45 = arith.constant 0 : index
      %55 = arith.index_cast %54 : i32 to index
      %c0_46 = arith.constant 0 : index
      %c0_47 = arith.constant 0 : index
      %56 = vector.load %arg1[%c0_45, %55, %c0_46, %c0_47] : memref<1x64x64x3xf32, #tpu.memory_space<vmem>>, vector<1x1x64x3xf32>
      %57 = vector.shape_cast %56 : vector<1x1x64x3xf32> to vector<64x3xf32>
      %c1_i32_48 = arith.constant 1 : i32
      %58 = arith.addi %arg17, %c1_i32_48 : i32
      %c0_49 = arith.constant 0 : index
      %59 = arith.index_cast %58 : i32 to index
      %c0_50 = arith.constant 0 : index
      %c0_51 = arith.constant 0 : index
      %60 = vector.load %arg1[%c0_49, %59, %c0_50, %c0_51] : memref<1x64x64x3xf32, #tpu.memory_space<vmem>>, vector<1x1x64x3xf32>
      %61 = vector.shape_cast %60 : vector<1x1x64x3xf32> to vector<64x3xf32>
      %c2_i32_52 = arith.constant 2 : i32
      %62 = arith.addi %arg17, %c2_i32_52 : i32
      %c0_53 = arith.constant 0 : index
      %63 = arith.index_cast %62 : i32 to index
      %c0_54 = arith.constant 0 : index
      %c0_55 = arith.constant 0 : index
      %64 = vector.load %arg1[%c0_53, %63, %c0_54, %c0_55] : memref<1x64x64x3xf32, #tpu.memory_space<vmem>>, vector<1x1x64x3xf32>
      %65 = vector.shape_cast %64 : vector<1x1x64x3xf32> to vector<64x3xf32>
      %66 = vector.extract_strided_slice %57 {offsets = [0, 0], sizes = [62, 3], strides = [1, 1]} : vector<64x3xf32> to vector<62x3xf32>
      %67 = vector.extract_strided_slice %57 {offsets = [1, 0], sizes = [62, 3], strides = [1, 1]} : vector<64x3xf32> to vector<62x3xf32>
      %68 = vector.extract_strided_slice %57 {offsets = [2, 0], sizes = [62, 3], strides = [1, 1]} : vector<64x3xf32> to vector<62x3xf32>
      %69 = vector.extract_strided_slice %61 {offsets = [0, 0], sizes = [62, 3], strides = [1, 1]} : vector<64x3xf32> to vector<62x3xf32>
      %70 = vector.extract_strided_slice %61 {offsets = [1, 0], sizes = [62, 3], strides = [1, 1]} : vector<64x3xf32> to vector<62x3xf32>
      %71 = vector.extract_strided_slice %61 {offsets = [2, 0], sizes = [62, 3], strides = [1, 1]} : vector<64x3xf32> to vector<62x3xf32>
      %72 = vector.extract_strided_slice %65 {offsets = [0, 0], sizes = [62, 3], strides = [1, 1]} : vector<64x3xf32> to vector<62x3xf32>
      %73 = vector.extract_strided_slice %65 {offsets = [1, 0], sizes = [62, 3], strides = [1, 1]} : vector<64x3xf32> to vector<62x3xf32>
      %74 = vector.extract_strided_slice %65 {offsets = [2, 0], sizes = [62, 3], strides = [1, 1]} : vector<64x3xf32> to vector<62x3xf32>
      %75 = tpu.concatenate %66, %67, %68, %69, %70, %71, %72, %73, %74 in 1 : vector<62x3xf32>, vector<62x3xf32>, vector<62x3xf32>, vector<62x3xf32>, vector<62x3xf32>, vector<62x3xf32>, vector<62x3xf32>, vector<62x3xf32>, vector<62x3xf32> -> vector<62x27xf32>
      %cst_56 = arith.constant dense<0.000000e+00> : vector<62x8xf32>
      %76 = tpu.matmul %75, %0, %cst_56 {dimension_numbers = #tpu.dot_dimension_numbers<[1], [0], [0], [1], [0, 0, 1, 1], [], []>} : vector<62x27xf32>, vector<27x8xf32>, vector<62x8xf32> -> vector<62x8xf32>
      %77 = vector.broadcast %1 : vector<1x8xf32> to vector<62x8xf32>
      %78 = arith.addf %76, %77 : vector<62x8xf32>
      %cst_57 = arith.constant 0.000000e+00 : f32
      %79 = vector.broadcast %cst_57 : f32 to vector<62x8xf32>
      %80 = arith.maximumf %78, %79 : vector<62x8xf32>
      %81 = arith.index_cast %arg17 : i32 to index
      %c0_58 = arith.constant 0 : index
      %c0_59 = arith.constant 0 : index
      %82 = vector.load %arg13[%81, %c0_58, %c0_59] : memref<62x62x8xf32, #tpu.memory_space<vmem>>, vector<1x62x8xf32>
      %83 = vector.shape_cast %82 : vector<1x62x8xf32> to vector<62x8xf32>
      %84 = vector.shape_cast %80 : vector<62x8xf32> to vector<1x62x8xf32>
      tpu.vector_store %arg13[%81, %c0_58, %c0_59], %84 {strides = array<i32>} : memref<62x62x8xf32, #tpu.memory_space<vmem>>, vector<1x62x8xf32>,
    }
    %c62_i32_20 = arith.constant 62 : i32
    %c0_i32_21 = arith.constant 0 : i32
    %c30_i32 = arith.constant 30 : i32
    %37 = arith.addi %c0_i32_21, %c30_i32 : i32
    %c1_i32_22 = arith.constant 1 : i32
    scf.for %arg17 = %c0_i32_21 to %37 step %c1_i32_22  : i32 {
      %c2_i32_44 = arith.constant 2 : i32
      %54 = arith.muli %c2_i32_44, %arg17 : i32
      %c0_i32_45 = arith.constant 0 : i32
      %55 = arith.addi %54, %c0_i32_45 : i32
      %56 = arith.index_cast %55 : i32 to index
      %c0_46 = arith.constant 0 : index
      %c0_47 = arith.constant 0 : index
      %57 = vector.load %arg13[%56, %c0_46, %c0_47] : memref<62x62x8xf32, #tpu.memory_space<vmem>>, vector<1x62x8xf32>
      %58 = vector.shape_cast %57 : vector<1x62x8xf32> to vector<62x8xf32>
      %c1_i32_48 = arith.constant 1 : i32
      %59 = arith.addi %54, %c1_i32_48 : i32
      %60 = arith.index_cast %59 : i32 to index
      %c0_49 = arith.constant 0 : index
      %c0_50 = arith.constant 0 : index
      %61 = vector.load %arg13[%60, %c0_49, %c0_50] : memref<62x62x8xf32, #tpu.memory_space<vmem>>, vector<1x62x8xf32>
      %62 = vector.shape_cast %61 : vector<1x62x8xf32> to vector<62x8xf32>
      %c2_i32_51 = arith.constant 2 : i32
      %63 = arith.addi %54, %c2_i32_51 : i32
      %64 = arith.index_cast %63 : i32 to index
      %c0_52 = arith.constant 0 : index
      %c0_53 = arith.constant 0 : index
      %65 = vector.load %arg13[%64, %c0_52, %c0_53] : memref<62x62x8xf32, #tpu.memory_space<vmem>>, vector<1x62x8xf32>
      %66 = vector.shape_cast %65 : vector<1x62x8xf32> to vector<62x8xf32>
      %c3_i32 = arith.constant 3 : i32
      %67 = arith.addi %54, %c3_i32 : i32
      %68 = arith.index_cast %67 : i32 to index
      %c0_54 = arith.constant 0 : index
      %c0_55 = arith.constant 0 : index
      %69 = vector.load %arg13[%68, %c0_54, %c0_55] : memref<62x62x8xf32, #tpu.memory_space<vmem>>, vector<1x62x8xf32>
      %70 = vector.shape_cast %69 : vector<1x62x8xf32> to vector<62x8xf32>
      %71 = vector.extract_strided_slice %58 {offsets = [0, 0], sizes = [60, 8], strides = [1, 1]} : vector<62x8xf32> to vector<60x8xf32>
      %72 = vector.extract_strided_slice %58 {offsets = [1, 0], sizes = [60, 8], strides = [1, 1]} : vector<62x8xf32> to vector<60x8xf32>
      %73 = vector.extract_strided_slice %58 {offsets = [2, 0], sizes = [60, 8], strides = [1, 1]} : vector<62x8xf32> to vector<60x8xf32>
      %74 = vector.extract_strided_slice %62 {offsets = [0, 0], sizes = [60, 8], strides = [1, 1]} : vector<62x8xf32> to vector<60x8xf32>
      %75 = vector.extract_strided_slice %62 {offsets = [1, 0], sizes = [60, 8], strides = [1, 1]} : vector<62x8xf32> to vector<60x8xf32>
      %76 = vector.extract_strided_slice %62 {offsets = [2, 0], sizes = [60, 8], strides = [1, 1]} : vector<62x8xf32> to vector<60x8xf32>
      %77 = vector.extract_strided_slice %66 {offsets = [0, 0], sizes = [60, 8], strides = [1, 1]} : vector<62x8xf32> to vector<60x8xf32>
      %78 = vector.extract_strided_slice %66 {offsets = [1, 0], sizes = [60, 8], strides = [1, 1]} : vector<62x8xf32> to vector<60x8xf32>
      %79 = vector.extract_strided_slice %66 {offsets = [2, 0], sizes = [60, 8], strides = [1, 1]} : vector<62x8xf32> to vector<60x8xf32>
      %80 = tpu.concatenate %71, %72, %73, %74, %75, %76, %77, %78, %79 in 1 : vector<60x8xf32>, vector<60x8xf32>, vector<60x8xf32>, vector<60x8xf32>, vector<60x8xf32>, vector<60x8xf32>, vector<60x8xf32>, vector<60x8xf32>, vector<60x8xf32> -> vector<60x72xf32>
      %cst_56 = arith.constant dense<0.000000e+00> : vector<60x8xf32>
      %81 = tpu.matmul %80, %2, %cst_56 {dimension_numbers = #tpu.dot_dimension_numbers<[1], [0], [0], [1], [0, 0, 1, 1], [], []>} : vector<60x72xf32>, vector<72x8xf32>, vector<60x8xf32> -> vector<60x8xf32>
      %82 = vector.broadcast %3 : vector<1x8xf32> to vector<60x8xf32>
      %83 = arith.addf %81, %82 : vector<60x8xf32>
      %cst_57 = arith.constant 0.000000e+00 : f32
      %84 = vector.broadcast %cst_57 : f32 to vector<60x8xf32>
      %85 = arith.maximumf %83, %84 : vector<60x8xf32>
      %86 = vector.extract_strided_slice %62 {offsets = [0, 0], sizes = [60, 8], strides = [1, 1]} : vector<62x8xf32> to vector<60x8xf32>
      %87 = vector.extract_strided_slice %62 {offsets = [1, 0], sizes = [60, 8], strides = [1, 1]} : vector<62x8xf32> to vector<60x8xf32>
      %88 = vector.extract_strided_slice %62 {offsets = [2, 0], sizes = [60, 8], strides = [1, 1]} : vector<62x8xf32> to vector<60x8xf32>
      %89 = vector.extract_strided_slice %66 {offsets = [0, 0], sizes = [60, 8], strides = [1, 1]} : vector<62x8xf32> to vector<60x8xf32>
      %90 = vector.extract_strided_slice %66 {offsets = [1, 0], sizes = [60, 8], strides = [1, 1]} : vector<62x8xf32> to vector<60x8xf32>
      %91 = vector.extract_strided_slice %66 {offsets = [2, 0], sizes = [60, 8], strides = [1, 1]} : vector<62x8xf32> to vector<60x8xf32>
      %92 = vector.extract_strided_slice %70 {offsets = [0, 0], sizes = [60, 8], strides = [1, 1]} : vector<62x8xf32> to vector<60x8xf32>
      %93 = vector.extract_strided_slice %70 {offsets = [1, 0], sizes = [60, 8], strides = [1, 1]} : vector<62x8xf32> to vector<60x8xf32>
      %94 = vector.extract_strided_slice %70 {offsets = [2, 0], sizes = [60, 8], strides = [1, 1]} : vector<62x8xf32> to vector<60x8xf32>
      %95 = tpu.concatenate %86, %87, %88, %89, %90, %91, %92, %93, %94 in 1 : vector<60x8xf32>, vector<60x8xf32>, vector<60x8xf32>, vector<60x8xf32>, vector<60x8xf32>, vector<60x8xf32>, vector<60x8xf32>, vector<60x8xf32>, vector<60x8xf32> -> vector<60x72xf32>
      %cst_58 = arith.constant dense<0.000000e+00> : vector<60x8xf32>
      %96 = tpu.matmul %95, %2, %cst_58 {dimension_numbers = #tpu.dot_dimension_numbers<[1], [0], [0], [1], [0, 0, 1, 1], [], []>} : vector<60x72xf32>, vector<72x8xf32>, vector<60x8xf32> -> vector<60x8xf32>
      %97 = vector.broadcast %3 : vector<1x8xf32> to vector<60x8xf32>
      %98 = arith.addf %96, %97 : vector<60x8xf32>
      %cst_59 = arith.constant 0.000000e+00 : f32
      %99 = vector.broadcast %cst_59 : f32 to vector<60x8xf32>
      %100 = arith.maximumf %98, %99 : vector<60x8xf32>
      %101 = arith.maximumf %85, %100 : vector<60x8xf32>
      %cst_60 = arith.constant dense<0.000000e+00> : vector<30x8xf32>
      %102 = tpu.matmul %14, %101, %cst_60 {dimension_numbers = #tpu.dot_dimension_numbers<[1], [0], [0], [1], [0, 0, 1, 1], [], []>} : vector<30x60xf32>, vector<60x8xf32>, vector<30x8xf32> -> vector<30x8xf32>
      %cst_61 = arith.constant dense<0.000000e+00> : vector<30x8xf32>
      %103 = tpu.matmul %21, %101, %cst_61 {dimension_numbers = #tpu.dot_dimension_numbers<[1], [0], [0], [1], [0, 0, 1, 1], [], []>} : vector<30x60xf32>, vector<60x8xf32>, vector<30x8xf32> -> vector<30x8xf32>
      %104 = arith.maximumf %102, %103 : vector<30x8xf32>
      %105 = arith.index_cast %arg17 : i32 to index
      %c0_62 = arith.constant 0 : index
      %c0_63 = arith.constant 0 : index
      %106 = vector.load %arg14[%105, %c0_62, %c0_63] : memref<30x30x8xf32, #tpu.memory_space<vmem>>, vector<1x30x8xf32>
      %107 = vector.shape_cast %106 : vector<1x30x8xf32> to vector<30x8xf32>
      %108 = vector.shape_cast %104 : vector<30x8xf32> to vector<1x30x8xf32>
      tpu.vector_store %arg14[%105, %c0_62, %c0_63], %108 {strides = array<i32>} : memref<30x30x8xf32, #tpu.memory_space<vmem>>, vector<1x30x8xf32>,
    }
    %c30_i32_23 = arith.constant 30 : i32
    %c0_i32_24 = arith.constant 0 : i32
    %c28_i32 = arith.constant 28 : i32
    %38 = arith.addi %c0_i32_24, %c28_i32 : i32
    %c1_i32_25 = arith.constant 1 : i32
    scf.for %arg17 = %c0_i32_24 to %38 step %c1_i32_25  : i32 {
      %c0_i32_44 = arith.constant 0 : i32
      %54 = arith.addi %arg17, %c0_i32_44 : i32
      %55 = arith.index_cast %54 : i32 to index
      %c0_45 = arith.constant 0 : index
      %c0_46 = arith.constant 0 : index
      %56 = vector.load %arg14[%55, %c0_45, %c0_46] : memref<30x30x8xf32, #tpu.memory_space<vmem>>, vector<1x30x8xf32>
      %57 = vector.shape_cast %56 : vector<1x30x8xf32> to vector<30x8xf32>
      %c1_i32_47 = arith.constant 1 : i32
      %58 = arith.addi %arg17, %c1_i32_47 : i32
      %59 = arith.index_cast %58 : i32 to index
      %c0_48 = arith.constant 0 : index
      %c0_49 = arith.constant 0 : index
      %60 = vector.load %arg14[%59, %c0_48, %c0_49] : memref<30x30x8xf32, #tpu.memory_space<vmem>>, vector<1x30x8xf32>
      %61 = vector.shape_cast %60 : vector<1x30x8xf32> to vector<30x8xf32>
      %c2_i32_50 = arith.constant 2 : i32
      %62 = arith.addi %arg17, %c2_i32_50 : i32
      %63 = arith.index_cast %62 : i32 to index
      %c0_51 = arith.constant 0 : index
      %c0_52 = arith.constant 0 : index
      %64 = vector.load %arg14[%63, %c0_51, %c0_52] : memref<30x30x8xf32, #tpu.memory_space<vmem>>, vector<1x30x8xf32>
      %65 = vector.shape_cast %64 : vector<1x30x8xf32> to vector<30x8xf32>
      %66 = vector.extract_strided_slice %57 {offsets = [0, 0], sizes = [28, 8], strides = [1, 1]} : vector<30x8xf32> to vector<28x8xf32>
      %67 = vector.extract_strided_slice %57 {offsets = [1, 0], sizes = [28, 8], strides = [1, 1]} : vector<30x8xf32> to vector<28x8xf32>
      %68 = vector.extract_strided_slice %57 {offsets = [2, 0], sizes = [28, 8], strides = [1, 1]} : vector<30x8xf32> to vector<28x8xf32>
      %69 = vector.extract_strided_slice %61 {offsets = [0, 0], sizes = [28, 8], strides = [1, 1]} : vector<30x8xf32> to vector<28x8xf32>
      %70 = vector.extract_strided_slice %61 {offsets = [1, 0], sizes = [28, 8], strides = [1, 1]} : vector<30x8xf32> to vector<28x8xf32>
      %71 = vector.extract_strided_slice %61 {offsets = [2, 0], sizes = [28, 8], strides = [1, 1]} : vector<30x8xf32> to vector<28x8xf32>
      %72 = vector.extract_strided_slice %65 {offsets = [0, 0], sizes = [28, 8], strides = [1, 1]} : vector<30x8xf32> to vector<28x8xf32>
      %73 = vector.extract_strided_slice %65 {offsets = [1, 0], sizes = [28, 8], strides = [1, 1]} : vector<30x8xf32> to vector<28x8xf32>
      %74 = vector.extract_strided_slice %65 {offsets = [2, 0], sizes = [28, 8], strides = [1, 1]} : vector<30x8xf32> to vector<28x8xf32>
      %75 = tpu.concatenate %66, %67, %68, %69, %70, %71, %72, %73, %74 in 1 : vector<28x8xf32>, vector<28x8xf32>, vector<28x8xf32>, vector<28x8xf32>, vector<28x8xf32>, vector<28x8xf32>, vector<28x8xf32>, vector<28x8xf32>, vector<28x8xf32> -> vector<28x72xf32>
      %cst_53 = arith.constant dense<0.000000e+00> : vector<28x8xf32>
      %76 = tpu.matmul %75, %4, %cst_53 {dimension_numbers = #tpu.dot_dimension_numbers<[1], [0], [0], [1], [0, 0, 1, 1], [], []>} : vector<28x72xf32>, vector<72x8xf32>, vector<28x8xf32> -> vector<28x8xf32>
      %77 = vector.broadcast %5 : vector<1x8xf32> to vector<28x8xf32>
      %78 = arith.addf %76, %77 : vector<28x8xf32>
      %cst_54 = arith.constant 0.000000e+00 : f32
      %79 = vector.broadcast %cst_54 : f32 to vector<28x8xf32>
      %80 = arith.maximumf %78, %79 : vector<28x8xf32>
      %81 = arith.index_cast %arg17 : i32 to index
      %c0_55 = arith.constant 0 : index
      %c0_56 = arith.constant 0 : index
      %82 = vector.load %arg15[%81, %c0_55, %c0_56] : memref<28x28x8xf32, #tpu.memory_space<vmem>>, vector<1x28x8xf32>
      %83 = vector.shape_cast %82 : vector<1x28x8xf32> to vector<28x8xf32>
      %84 = vector.shape_cast %80 : vector<28x8xf32> to vector<1x28x8xf32>
      tpu.vector_store %arg15[%81, %c0_55, %c0_56], %84 {strides = array<i32>} : memref<28x28x8xf32, #tpu.memory_space<vmem>>, vector<1x28x8xf32>,
    }
    %c28_i32_26 = arith.constant 28 : i32
    %c0_i32_27 = arith.constant 0 : i32
    %c13_i32 = arith.constant 13 : i32
    %39 = arith.addi %c0_i32_27, %c13_i32 : i32
    %c1_i32_28 = arith.constant 1 : i32
    scf.for %arg17 = %c0_i32_27 to %39 step %c1_i32_28  : i32 {
      %c2_i32_44 = arith.constant 2 : i32
      %54 = arith.muli %c2_i32_44, %arg17 : i32
      %c0_i32_45 = arith.constant 0 : i32
      %55 = arith.addi %54, %c0_i32_45 : i32
      %56 = arith.index_cast %55 : i32 to index
      %c0_46 = arith.constant 0 : index
      %c0_47 = arith.constant 0 : index
      %57 = vector.load %arg15[%56, %c0_46, %c0_47] : memref<28x28x8xf32, #tpu.memory_space<vmem>>, vector<1x28x8xf32>
      %58 = vector.shape_cast %57 : vector<1x28x8xf32> to vector<28x8xf32>
      %c1_i32_48 = arith.constant 1 : i32
      %59 = arith.addi %54, %c1_i32_48 : i32
      %60 = arith.index_cast %59 : i32 to index
      %c0_49 = arith.constant 0 : index
      %c0_50 = arith.constant 0 : index
      %61 = vector.load %arg15[%60, %c0_49, %c0_50] : memref<28x28x8xf32, #tpu.memory_space<vmem>>, vector<1x28x8xf32>
      %62 = vector.shape_cast %61 : vector<1x28x8xf32> to vector<28x8xf32>
      %c2_i32_51 = arith.constant 2 : i32
      %63 = arith.addi %54, %c2_i32_51 : i32
      %64 = arith.index_cast %63 : i32 to index
      %c0_52 = arith.constant 0 : index
      %c0_53 = arith.constant 0 : index
      %65 = vector.load %arg15[%64, %c0_52, %c0_53] : memref<28x28x8xf32, #tpu.memory_space<vmem>>, vector<1x28x8xf32>
      %66 = vector.shape_cast %65 : vector<1x28x8xf32> to vector<28x8xf32>
      %c3_i32 = arith.constant 3 : i32
      %67 = arith.addi %54, %c3_i32 : i32
      %68 = arith.index_cast %67 : i32 to index
      %c0_54 = arith.constant 0 : index
      %c0_55 = arith.constant 0 : index
      %69 = vector.load %arg15[%68, %c0_54, %c0_55] : memref<28x28x8xf32, #tpu.memory_space<vmem>>, vector<1x28x8xf32>
      %70 = vector.shape_cast %69 : vector<1x28x8xf32> to vector<28x8xf32>
      %71 = vector.extract_strided_slice %58 {offsets = [0, 0], sizes = [26, 8], strides = [1, 1]} : vector<28x8xf32> to vector<26x8xf32>
      %72 = vector.extract_strided_slice %58 {offsets = [1, 0], sizes = [26, 8], strides = [1, 1]} : vector<28x8xf32> to vector<26x8xf32>
      %73 = vector.extract_strided_slice %58 {offsets = [2, 0], sizes = [26, 8], strides = [1, 1]} : vector<28x8xf32> to vector<26x8xf32>
      %74 = vector.extract_strided_slice %62 {offsets = [0, 0], sizes = [26, 8], strides = [1, 1]} : vector<28x8xf32> to vector<26x8xf32>
      %75 = vector.extract_strided_slice %62 {offsets = [1, 0], sizes = [26, 8], strides = [1, 1]} : vector<28x8xf32> to vector<26x8xf32>
      %76 = vector.extract_strided_slice %62 {offsets = [2, 0], sizes = [26, 8], strides = [1, 1]} : vector<28x8xf32> to vector<26x8xf32>
      %77 = vector.extract_strided_slice %66 {offsets = [0, 0], sizes = [26, 8], strides = [1, 1]} : vector<28x8xf32> to vector<26x8xf32>
      %78 = vector.extract_strided_slice %66 {offsets = [1, 0], sizes = [26, 8], strides = [1, 1]} : vector<28x8xf32> to vector<26x8xf32>
      %79 = vector.extract_strided_slice %66 {offsets = [2, 0], sizes = [26, 8], strides = [1, 1]} : vector<28x8xf32> to vector<26x8xf32>
      %80 = tpu.concatenate %71, %72, %73, %74, %75, %76, %77, %78, %79 in 1 : vector<26x8xf32>, vector<26x8xf32>, vector<26x8xf32>, vector<26x8xf32>, vector<26x8xf32>, vector<26x8xf32>, vector<26x8xf32>, vector<26x8xf32>, vector<26x8xf32> -> vector<26x72xf32>
      %cst_56 = arith.constant dense<0.000000e+00> : vector<26x8xf32>
      %81 = tpu.matmul %80, %6, %cst_56 {dimension_numbers = #tpu.dot_dimension_numbers<[1], [0], [0], [1], [0, 0, 1, 1], [], []>} : vector<26x72xf32>, vector<72x8xf32>, vector<26x8xf32> -> vector<26x8xf32>
      %82 = vector.broadcast %7 : vector<1x8xf32> to vector<26x8xf32>
      %83 = arith.addf %81, %82 : vector<26x8xf32>
      %cst_57 = arith.constant 0.000000e+00 : f32
      %84 = vector.broadcast %cst_57 : f32 to vector<26x8xf32>
      %85 = arith.maximumf %83, %84 : vector<26x8xf32>
      %86 = vector.extract_strided_slice %62 {offsets = [0, 0], sizes = [26, 8], strides = [1, 1]} : vector<28x8xf32> to vector<26x8xf32>
      %87 = vector.extract_strided_slice %62 {offsets = [1, 0], sizes = [26, 8], strides = [1, 1]} : vector<28x8xf32> to vector<26x8xf32>
      %88 = vector.extract_strided_slice %62 {offsets = [2, 0], sizes = [26, 8], strides = [1, 1]} : vector<28x8xf32> to vector<26x8xf32>
      %89 = vector.extract_strided_slice %66 {offsets = [0, 0], sizes = [26, 8], strides = [1, 1]} : vector<28x8xf32> to vector<26x8xf32>
      %90 = vector.extract_strided_slice %66 {offsets = [1, 0], sizes = [26, 8], strides = [1, 1]} : vector<28x8xf32> to vector<26x8xf32>
      %91 = vector.extract_strided_slice %66 {offsets = [2, 0], sizes = [26, 8], strides = [1, 1]} : vector<28x8xf32> to vector<26x8xf32>
      %92 = vector.extract_strided_slice %70 {offsets = [0, 0], sizes = [26, 8], strides = [1, 1]} : vector<28x8xf32> to vector<26x8xf32>
      %93 = vector.extract_strided_slice %70 {offsets = [1, 0], sizes = [26, 8], strides = [1, 1]} : vector<28x8xf32> to vector<26x8xf32>
      %94 = vector.extract_strided_slice %70 {offsets = [2, 0], sizes = [26, 8], strides = [1, 1]} : vector<28x8xf32> to vector<26x8xf32>
      %95 = tpu.concatenate %86, %87, %88, %89, %90, %91, %92, %93, %94 in 1 : vector<26x8xf32>, vector<26x8xf32>, vector<26x8xf32>, vector<26x8xf32>, vector<26x8xf32>, vector<26x8xf32>, vector<26x8xf32>, vector<26x8xf32>, vector<26x8xf32> -> vector<26x72xf32>
      %cst_58 = arith.constant dense<0.000000e+00> : vector<26x8xf32>
      %96 = tpu.matmul %95, %6, %cst_58 {dimension_numbers = #tpu.dot_dimension_numbers<[1], [0], [0], [1], [0, 0, 1, 1], [], []>} : vector<26x72xf32>, vector<72x8xf32>, vector<26x8xf32> -> vector<26x8xf32>
      %97 = vector.broadcast %7 : vector<1x8xf32> to vector<26x8xf32>
      %98 = arith.addf %96, %97 : vector<26x8xf32>
      %cst_59 = arith.constant 0.000000e+00 : f32
      %99 = vector.broadcast %cst_59 : f32 to vector<26x8xf32>
      %100 = arith.maximumf %98, %99 : vector<26x8xf32>
      %101 = arith.maximumf %85, %100 : vector<26x8xf32>
      %cst_60 = arith.constant dense<0.000000e+00> : vector<13x8xf32>
      %102 = tpu.matmul %28, %101, %cst_60 {dimension_numbers = #tpu.dot_dimension_numbers<[1], [0], [0], [1], [0, 0, 1, 1], [], []>} : vector<13x26xf32>, vector<26x8xf32>, vector<13x8xf32> -> vector<13x8xf32>
      %cst_61 = arith.constant dense<0.000000e+00> : vector<13x8xf32>
      %103 = tpu.matmul %35, %101, %cst_61 {dimension_numbers = #tpu.dot_dimension_numbers<[1], [0], [0], [1], [0, 0, 1, 1], [], []>} : vector<13x26xf32>, vector<26x8xf32>, vector<13x8xf32> -> vector<13x8xf32>
      %104 = arith.maximumf %102, %103 : vector<13x8xf32>
      %105 = arith.index_cast %arg17 : i32 to index
      %c0_62 = arith.constant 0 : index
      %c0_63 = arith.constant 0 : index
      %106 = vector.load %arg16[%105, %c0_62, %c0_63] : memref<13x13x8xf32, #tpu.memory_space<vmem>>, vector<1x13x8xf32>
      %107 = vector.shape_cast %106 : vector<1x13x8xf32> to vector<13x8xf32>
      %108 = vector.shape_cast %104 : vector<13x8xf32> to vector<1x13x8xf32>
      tpu.vector_store %arg16[%105, %c0_62, %c0_63], %108 {strides = array<i32>} : memref<13x13x8xf32, #tpu.memory_space<vmem>>, vector<1x13x8xf32>,
    }
    %c13_i32_29 = arith.constant 13 : i32
    %c0_30 = arith.constant 0 : index
    %c0_31 = arith.constant 0 : index
    %c0_32 = arith.constant 0 : index
    %40 = vector.load %arg16[%c0_30, %c0_31, %c0_32] : memref<13x13x8xf32, #tpu.memory_space<vmem>>, vector<13x13x8xf32>
    %c0_33 = arith.constant 0 : index
    %c0_34 = arith.constant 0 : index
    %c0_35 = arith.constant 0 : index
    %c0_36 = arith.constant 0 : index
    %41 = vector.load %arg10[%c0_33, %c0_34, %c0_35, %c0_36] : memref<3x13x13x8xf32, #tpu.memory_space<vmem>>, vector<3x13x13x8xf32>
    %42 = vector.shape_cast %40 : vector<13x13x8xf32> to vector<1x13x13x8xf32>
    %43 = vector.broadcast %42 : vector<1x13x13x8xf32> to vector<3x13x13x8xf32>
    %44 = arith.mulf %43, %41 : vector<3x13x13x8xf32>
    %cst = arith.constant dense<0.000000e+00> : vector<3x13x8xf32>
    %45 = vector.multi_reduction <add>, %44, %cst [1] : vector<3x13x13x8xf32> to vector<3x13x8xf32>
    %cst_37 = arith.constant dense<0.000000e+00> : vector<3x8xf32>
    %46 = vector.multi_reduction <add>, %45, %cst_37 [1] : vector<3x13x8xf32> to vector<3x8xf32>
    %cst_38 = arith.constant dense<0.000000e+00> : vector<3xf32>
    %47 = vector.multi_reduction <add>, %46, %cst_38 [1] : vector<3x8xf32> to vector<3xf32>
    %48 = vector.shape_cast %47 : vector<3xf32> to vector<3x1xf32>
    %c0_39 = arith.constant 0 : index
    %c0_40 = arith.constant 0 : index
    %49 = vector.load %arg11[%c0_39, %c0_40] : memref<3x1xf32, #tpu.memory_space<vmem>>, vector<3x1xf32>
    %50 = arith.addf %48, %49 : vector<3x1xf32>
    %c0_41 = arith.constant 0 : index
    %c0_42 = arith.constant 0 : index
    %c0_43 = arith.constant 0 : index
    %51 = vector.load %arg12[%c0_41, %c0_42, %c0_43] : memref<1x3x1xf32, #tpu.memory_space<vmem>>, vector<1x3x1xf32>
    %52 = vector.shape_cast %51 : vector<1x3x1xf32> to vector<3x1xf32>
    %53 = vector.shape_cast %50 : vector<3x1xf32> to vector<1x3x1xf32>
    tpu.vector_store %arg12[%c0_41, %c0_42, %c0_43], %53 {strides = array<i32>} : memref<1x3x1xf32, #tpu.memory_space<vmem>>, vector<1x3x1xf32>,
    return
  }
  func.func @transform_0(%arg0: i32) -> (i32, i32, i32, i32) {
    %c0_i32 = arith.constant 0 : i32
    %c0_i32_0 = arith.constant 0 : i32
    %c0_i32_1 = arith.constant 0 : i32
    %c0_i32_2 = arith.constant 0 : i32
    return %arg0, %c0_i32, %c0_i32_0, %c0_i32_1 : i32, i32, i32, i32
  }
  func.func @transform_1(%arg0: i32) -> (i32, i32) {
    %c0_i32 = arith.constant 0 : i32
    %c0_i32_0 = arith.constant 0 : i32
    %c0_i32_1 = arith.constant 0 : i32
    return %c0_i32, %c0_i32_0 : i32, i32
  }
  func.func @transform_2(%arg0: i32) -> (i32, i32) {
    %c0_i32 = arith.constant 0 : i32
    %c0_i32_0 = arith.constant 0 : i32
    %c0_i32_1 = arith.constant 0 : i32
    return %c0_i32, %c0_i32_0 : i32, i32
  }
  func.func @transform_3(%arg0: i32) -> (i32, i32) {
    %c0_i32 = arith.constant 0 : i32
    %c0_i32_0 = arith.constant 0 : i32
    %c0_i32_1 = arith.constant 0 : i32
    return %c0_i32, %c0_i32_0 : i32, i32
  }
  func.func @transform_4(%arg0: i32) -> (i32, i32) {
    %c0_i32 = arith.constant 0 : i32
    %c0_i32_0 = arith.constant 0 : i32
    %c0_i32_1 = arith.constant 0 : i32
    return %c0_i32, %c0_i32_0 : i32, i32
  }
  func.func @transform_5(%arg0: i32) -> (i32, i32) {
    %c0_i32 = arith.constant 0 : i32
    %c0_i32_0 = arith.constant 0 : i32
    %c0_i32_1 = arith.constant 0 : i32
    return %c0_i32, %c0_i32_0 : i32, i32
  }
  func.func @transform_6(%arg0: i32) -> (i32, i32) {
    %c0_i32 = arith.constant 0 : i32
    %c0_i32_0 = arith.constant 0 : i32
    %c0_i32_1 = arith.constant 0 : i32
    return %c0_i32, %c0_i32_0 : i32, i32
  }
  func.func @transform_7(%arg0: i32) -> (i32, i32) {
    %c0_i32 = arith.constant 0 : i32
    %c0_i32_0 = arith.constant 0 : i32
    %c0_i32_1 = arith.constant 0 : i32
    return %c0_i32, %c0_i32_0 : i32, i32
  }
  func.func @transform_8(%arg0: i32) -> (i32, i32) {
    %c0_i32 = arith.constant 0 : i32
    %c0_i32_0 = arith.constant 0 : i32
    %c0_i32_1 = arith.constant 0 : i32
    return %c0_i32, %c0_i32_0 : i32, i32
  }
  func.func @transform_9(%arg0: i32) -> (i32, i32, i32, i32) {
    %c0_i32 = arith.constant 0 : i32
    %c0_i32_0 = arith.constant 0 : i32
    %c0_i32_1 = arith.constant 0 : i32
    %c0_i32_2 = arith.constant 0 : i32
    %c0_i32_3 = arith.constant 0 : i32
    return %c0_i32, %c0_i32_0, %c0_i32_1, %c0_i32_2 : i32, i32, i32, i32
  }
  func.func @transform_10(%arg0: i32) -> (i32, i32) {
    %c0_i32 = arith.constant 0 : i32
    %c0_i32_0 = arith.constant 0 : i32
    %c0_i32_1 = arith.constant 0 : i32
    return %c0_i32, %c0_i32_0 : i32, i32
  }
  func.func @transform_11(%arg0: i32) -> (i32, i32, i32) {
    %c0_i32 = arith.constant 0 : i32
    %c0_i32_0 = arith.constant 0 : i32
    %c0_i32_1 = arith.constant 0 : i32
    return %arg0, %c0_i32, %c0_i32_0 : i32, i32, i32
  }
}

</mosaic_0001>

<llo_original>
// kernel: tinyvgg_forward.1
$region0: #{tinyvgg_forward.1}
  #allocation0 [shape = 'u32[]', space=smem, size = 0x4, offset = 0x4, fixed_abs, tag = 'smem constant byte address 0x4 - core index']
  #allocation1 [shape = 'u32[144,128]{1,0:T(1,128)}', space=vmem, size = 0x12000, scoped, tag = 'internal scratch']
  #allocation2 [shape = 'f32[62,62,8]{2,1,0:T(8,128)}', space=vmem, size = 0x1f0000, scoped, tag = 'scratch operand']
  #allocation3 [shape = 'f32[30,30,8]{2,1,0:T(8,128)}', space=vmem, size = 0x78000, scoped, tag = 'scratch operand']
  #allocation4 [shape = 'f32[28,28,8]{2,1,0:T(8,128)}', space=vmem, size = 0x70000, scoped, tag = 'scratch operand']
  #allocation5 [shape = 'f32[13,13,8]{2,1,0:T(8,128)}', space=vmem, size = 0x1a000, scoped, tag = 'scratch operand']
  %s0 = inlined_call_operand.vmem [shape: f32[2,64,64,3], index: 0, kind: input, shape index: {}]
  %s1 = inlined_call_operand.vmem [shape: f32[27,8], index: 1, kind: input, shape index: {}]
  %s2 = inlined_call_operand.vmem [shape: f32[1,8], index: 2, kind: input, shape index: {}]
  %s3 = inlined_call_operand.vmem [shape: f32[72,8], index: 3, kind: input, shape index: {}]
  %s4 = inlined_call_operand.vmem [shape: f32[1,8], index: 4, kind: input, shape index: {}]
  %s5 = inlined_call_operand.vmem [shape: f32[72,8], index: 5, kind: input, shape index: {}]
  %s6 = inlined_call_operand.vmem [shape: f32[1,8], index: 6, kind: input, shape index: {}]
  %s7 = inlined_call_operand.vmem [shape: f32[72,8], index: 7, kind: input, shape index: {}]
  %s8 = inlined_call_operand.vmem [shape: f32[1,8], index: 8, kind: input, shape index: {}]
  %s9 = inlined_call_operand.vmem [shape: f32[3,13,13,8], index: 9, kind: input, shape index: {}]
  %s10 = inlined_call_operand.vmem [shape: f32[3,1], index: 10, kind: input, shape index: {}]
  %s11 = inlined_call_operand.vmem [shape: f32[2,3,1], index: 11, kind: output, shape index: {}]
  %s12 = sld [smem:[#allocation0]]
  $region105: #{tinyvgg_forward.1} parent=0
    _
  %s14 = ssub.s32 1, %s12
  %s15 = scalar_select 0, %s14, %s12
  loop: start=0, step=1, limit=4
  $region2: #{tinyvgg_forward.1} parent=0 // loop_pre_header
    _
  $region3: #{tinyvgg_forward.1} parent=0 // loop_header
    %s17 = sphi 0, %s21
    %p18 = scmp.ge.s32.totalorder %s17, 4
    %s27 = sphi 0, %s29
    %s30 = sphi 0, %s27
    %s31 = sphi 0, %s30
    %s47 = sphi 0, %s31
    %s51 = sphi 0, %s51
    %s53 = sphi 0, %s51
    %s54 = sphi 0, %s53
    %s68 = sphi 0, %s54
    %s72 = sphi 0, %s72
    %s74 = sphi 0, %s72
    %s75 = sphi 0, %s74
    %s89 = sphi 0, %s75
    %s93 = sphi 0, %s93
    %s95 = sphi 0, %s93
    %s96 = sphi 0, %s95
    %s110 = sphi 0, %s96
    %s114 = sphi 0, %s114
    %s116 = sphi 0, %s114
    %s117 = sphi 0, %s116
    %s131 = sphi 0, %s117
    %s135 = sphi 0, %s135
    %s137 = sphi 0, %s135
    %s138 = sphi 0, %s137
    %s152 = sphi 0, %s138
    %s156 = sphi 0, %s156
    %s158 = sphi 0, %s156
    %s159 = sphi 0, %s158
    %s173 = sphi 0, %s159
    %s177 = sphi 0, %s177
    %s179 = sphi 0, %s177
    %s180 = sphi 0, %s179
    %s194 = sphi 0, %s180
    %s198 = sphi 0, %s198
    %s200 = sphi 0, %s198
    %s201 = sphi 0, %s200
    %s215 = sphi 0, %s201
    %s219 = sphi 0, %s219
    %s221 = sphi 0, %s219
    %s222 = sphi 0, %s221
    %s236 = sphi 0, %s222
    %s240 = sphi 0, %s240
    %s242 = sphi 0, %s240
    %s243 = sphi 0, %s242
    %s257 = sphi 0, %s243
    %s263 = sphi 0, %s265
    %s266 = sphi 0, %s263
    %s267 = sphi 0, %s266
    %s283 = sphi 0, %s267
  $region4: #{tinyvgg_forward.1} parent=0 // loop_header_branch
    %20 = sbr.rel (%p18) target = $region8
  $region5: #{tinyvgg_forward.1} parent=0 // loop_body
    %s22 = ssub.s32 %s17, 1
    %s23 = ssub.s32 %s17, 2
    %s24 = sadd.s32 %s17, 1
    %s25 = ssub.s32 %s17, %s24
    %p26 = scmp.eq.s32.totalorder %s25, 0
    %s28 = sadd.s32 %s27, 1
    %s29 = scalar_select %p26, %s27, %s28
    %p32 = pneg %p26
    %p33 = scmp.eq.s32.totalorder %s17, 1
    %p34 = por %p32, %p33
    %p35 = scmp.ne.s32.totalorder %s27, %s30
    %p36 = scmp.eq.s32.totalorder %s17, 0
    %p37 = por %p35, %p36
    %p38 = scmp.ne.s32.totalorder %s27, %s30
    %p39 = scmp.eq.s32.totalorder %s22, 1
    %p40 = por %p38, %p39
    %p41 = scmp.ne.s32.totalorder %s30, %s31
    %p42 = scmp.eq.s32.totalorder %s22, 0
    %p43 = por %p41, %p42
    %p44 = scmp.ne.s32.totalorder %s30, %s31
    %p45 = scmp.eq.s32.totalorder %s23, 1
    %p46 = por %p44, %p45
    %p48 = scmp.ne.s32.totalorder %s31, %s47
    %p49 = scmp.eq.s32.totalorder %s23, 0
    %p50 = por %p48, %p49
    %s52 = sadd.s32 %s51, 1
    %p55 = scmp.eq.s32.totalorder %s17, 1
    %p56 = scmp.ne.s32.totalorder %s51, %s53
    %p57 = scmp.eq.s32.totalorder %s17, 0
    %p58 = por %p56, %p57
    %p59 = scmp.ne.s32.totalorder %s51, %s53
    %p60 = scmp.eq.s32.totalorder %s22, 1
    %p61 = por %p59, %p60
    %p62 = scmp.ne.s32.totalorder %s53, %s54
    %p63 = scmp.eq.s32.totalorder %s22, 0
    %p64 = por %p62, %p63
    %p65 = scmp.ne.s32.totalorder %s53, %s54
    %p66 = scmp.eq.s32.totalorder %s23, 1
    %p67 = por %p65, %p66
    %p69 = scmp.ne.s32.totalorder %s54, %s68
    %p70 = scmp.eq.s32.totalorder %s23, 0
    %p71 = por %p69, %p70
    %s73 = sadd.s32 %s72, 1
    %p76 = scmp.eq.s32.totalorder %s17, 1
    %p77 = scmp.ne.s32.totalorder %s72, %s74
    %p78 = scmp.eq.s32.totalorder %s17, 0
    %p79 = por %p77, %p78
    %p80 = scmp.ne.s32.totalorder %s72, %s74
    %p81 = scmp.eq.s32.totalorder %s22, 1
    %p82 = por %p80, %p81
    %p83 = scmp.ne.s32.totalorder %s74, %s75
    %p84 = scmp.eq.s32.totalorder %s22, 0
    %p85 = por %p83, %p84
    %p86 = scmp.ne.s32.totalorder %s74, %s75
    %p87 = scmp.eq.s32.totalorder %s23, 1
    %p88 = por %p86, %p87
    %p90 = scmp.ne.s32.totalorder %s75, %s89
    %p91 = scmp.eq.s32.totalorder %s23, 0
    %p92 = por %p90, %p91
    %s94 = sadd.s32 %s93, 1
    %p97 = scmp.eq.s32.totalorder %s17, 1
    %p98 = scmp.ne.s32.totalorder %s93, %s95
    %p99 = scmp.eq.s32.totalorder %s17, 0
    %p100 = por %p98, %p99
    %p101 = scmp.ne.s32.totalorder %s93, %s95
    %p102 = scmp.eq.s32.totalorder %s22, 1
    %p103 = por %p101, %p102
    %p104 = scmp.ne.s32.totalorder %s95, %s96
    %p105 = scmp.eq.s32.totalorder %s22, 0
    %p106 = por %p104, %p105
    %p107 = scmp.ne.s32.totalorder %s95, %s96
    %p108 = scmp.eq.s32.totalorder %s23, 1
    %p109 = por %p107, %p108
    %p111 = scmp.ne.s32.totalorder %s96, %s110
    %p112 = scmp.eq.s32.totalorder %s23, 0
    %p113 = por %p111, %p112
    %s115 = sadd.s32 %s114, 1
    %p118 = scmp.eq.s32.totalorder %s17, 1
    %p119 = scmp.ne.s32.totalorder %s114, %s116
    %p120 = scmp.eq.s32.totalorder %s17, 0
    %p121 = por %p119, %p120
    %p122 = scmp.ne.s32.totalorder %s114, %s116
    %p123 = scmp.eq.s32.totalorder %s22, 1
    %p124 = por %p122, %p123
    %p125 = scmp.ne.s32.totalorder %s116, %s117
    %p126 = scmp.eq.s32.totalorder %s22, 0
    %p127 = por %p125, %p126
    %p128 = scmp.ne.s32.totalorder %s116, %s117
    %p129 = scmp.eq.s32.totalorder %s23, 1
    %p130 = por %p128, %p129
    %p132 = scmp.ne.s32.totalorder %s117, %s131
    %p133 = scmp.eq.s32.totalorder %s23, 0
    %p134 = por %p132, %p133
    %s136 = sadd.s32 %s135, 1
    %p139 = scmp.eq.s32.totalorder %s17, 1
    %p140 = scmp.ne.s32.totalorder %s135, %s137
    %p141 = scmp.eq.s32.totalorder %s17, 0
    %p142 = por %p140, %p141
    %p143 = scmp.ne.s32.totalorder %s135, %s137
    %p144 = scmp.eq.s32.totalorder %s22, 1
    %p145 = por %p143, %p144
    %p146 = scmp.ne.s32.totalorder %s137, %s138
    %p147 = scmp.eq.s32.totalorder %s22, 0
    %p148 = por %p146, %p147
    %p149 = scmp.ne.s32.totalorder %s137, %s138
    %p150 = scmp.eq.s32.totalorder %s23, 1
    %p151 = por %p149, %p150
    %p153 = scmp.ne.s32.totalorder %s138, %s152
    %p154 = scmp.eq.s32.totalorder %s23, 0
    %p155 = por %p153, %p154
    %s157 = sadd.s32 %s156, 1
    %p160 = scmp.eq.s32.totalorder %s17, 1
    %p161 = scmp.ne.s32.totalorder %s156, %s158
    %p162 = scmp.eq.s32.totalorder %s17, 0
    %p163 = por %p161, %p162
    %p164 = scmp.ne.s32.totalorder %s156, %s158
    %p165 = scmp.eq.s32.totalorder %s22, 1
    %p166 = por %p164, %p165
    %p167 = scmp.ne.s32.totalorder %s158, %s159
    %p168 = scmp.eq.s32.totalorder %s22, 0
    %p169 = por %p167, %p168
    %p170 = scmp.ne.s32.totalorder %s158, %s159
    %p171 = scmp.eq.s32.totalorder %s23, 1
    %p172 = por %p170, %p171
    %p174 = scmp.ne.s32.totalorder %s159, %s173
    %p175 = scmp.eq.s32.totalorder %s23, 0
    %p176 = por %p174, %p175
    %s178 = sadd.s32 %s177, 1
    %p181 = scmp.eq.s32.totalorder %s17, 1
    %p182 = scmp.ne.s32.totalorder %s177, %s179
    %p183 = scmp.eq.s32.totalorder %s17, 0
    %p184 = por %p182, %p183
    %p185 = scmp.ne.s32.totalorder %s177, %s179
    %p186 = scmp.eq.s32.totalorder %s22, 1
    %p187 = por %p185, %p186
    %p188 = scmp.ne.s32.totalorder %s179, %s180
    %p189 = scmp.eq.s32.totalorder %s22, 0
    %p190 = por %p188, %p189
    %p191 = scmp.ne.s32.totalorder %s179, %s180
    %p192 = scmp.eq.s32.totalorder %s23, 1
    %p193 = por %p191, %p192
    %p195 = scmp.ne.s32.totalorder %s180, %s194
    %p196 = scmp.eq.s32.totalorder %s23, 0
    %p197 = por %p195, %p196
    %s199 = sadd.s32 %s198, 1
    %p202 = scmp.eq.s32.totalorder %s17, 1
    %p203 = scmp.ne.s32.totalorder %s198, %s200
    %p204 = scmp.eq.s32.totalorder %s17, 0
    %p205 = por %p203, %p204
    %p206 = scmp.ne.s32.totalorder %s198, %s200
    %p207 = scmp.eq.s32.totalorder %s22, 1
    %p208 = por %p206, %p207
    %p209 = scmp.ne.s32.totalorder %s200, %s201
    %p210 = scmp.eq.s32.totalorder %s22, 0
    %p211 = por %p209, %p210
    %p212 = scmp.ne.s32.totalorder %s200, %s201
    %p213 = scmp.eq.s32.totalorder %s23, 1
    %p214 = por %p212, %p213
    %p216 = scmp.ne.s32.totalorder %s201, %s215
    %p217 = scmp.eq.s32.totalorder %s23, 0
    %p218 = por %p216, %p217
    %s220 = sadd.s32 %s219, 1
    %p223 = scmp.eq.s32.totalorder %s17, 1
    %p224 = scmp.ne.s32.totalorder %s219, %s221
    %p225 = scmp.eq.s32.totalorder %s17, 0
    %p226 = por %p224, %p225
    %p227 = scmp.ne.s32.totalorder %s219, %s221
    %p228 = scmp.eq.s32.totalorder %s22, 1
    %p229 = por %p227, %p228
    %p230 = scmp.ne.s32.totalorder %s221, %s222
    %p231 = scmp.eq.s32.totalorder %s22, 0
    %p232 = por %p230, %p231
    %p233 = scmp.ne.s32.totalorder %s221, %s222
    %p234 = scmp.eq.s32.totalorder %s23, 1
    %p235 = por %p233, %p234
    %p237 = scmp.ne.s32.totalorder %s222, %s236
    %p238 = scmp.eq.s32.totalorder %s23, 0
    %p239 = por %p237, %p238
    %s241 = sadd.s32 %s240, 1
    %p244 = scmp.eq.s32.totalorder %s17, 1
    %p245 = scmp.ne.s32.totalorder %s240, %s242
    %p246 = scmp.eq.s32.totalorder %s17, 0
    %p247 = por %p245, %p246
    %p248 = scmp.ne.s32.totalorder %s240, %s242
    %p249 = scmp.eq.s32.totalorder %s22, 1
    %p250 = por %p248, %p249
    %p251 = scmp.ne.s32.totalorder %s242, %s243
    %p252 = scmp.eq.s32.totalorder %s22, 0
    %p253 = por %p251, %p252
    %p254 = scmp.ne.s32.totalorder %s242, %s243
    %p255 = scmp.eq.s32.totalorder %s23, 1
    %p256 = por %p254, %p255
    %p258 = scmp.ne.s32.totalorder %s243, %s257
    %p259 = scmp.eq.s32.totalorder %s23, 0
    %p260 = por %p258, %p259
    %s261 = ssub.s32 %s17, %s24
    %p262 = scmp.eq.s32.totalorder %s261, 0
    %s264 = sadd.s32 %s263, 1
    %s265 = scalar_select %p262, %s263, %s264
    %p268 = pneg %p262
    %p269 = scmp.eq.s32.totalorder %s17, 1
    %p270 = por %p268, %p269
    %p271 = scmp.ne.s32.totalorder %s263, %s266
    %p272 = scmp.eq.s32.totalorder %s17, 0
    %p273 = por %p271, %p272
    %p274 = scmp.ne.s32.totalorder %s263, %s266
    %p275 = scmp.eq.s32.totalorder %s22, 1
    %p276 = por %p274, %p275
    %p277 = scmp.ne.s32.totalorder %s266, %s267
    %p278 = scmp.eq.s32.totalorder %s22, 0
    %p279 = por %p277, %p278
    %p280 = scmp.ne.s32.totalorder %s266, %s267
    %p281 = scmp.eq.s32.totalorder %s23, 1
    %p282 = por %p280, %p281
    %p284 = scmp.ne.s32.totalorder %s267, %s283
    %p285 = scmp.eq.s32.totalorder %s23, 0
    %p286 = por %p284, %p285
    %p287 = scmp.le.s32.totalorder 1, %s17
    %p288 = scmp.lt.s32.totalorder %s17, 3
    %p289 = pnand %p287, %p288
    %p290 = pneg %p289
    // Predicated region
    $region9: #{tinyvgg_forward.1} parent=5 // pred_check
      _
    $region10: #{tinyvgg_forward.1} parent=5 // pred_check_branch
      %292 = sbr.rel (%p289) target = $region12
    $region11: #{tinyvgg_forward.1} parent=5 // pred_region
      %s293 = ssub.s32 %s17, 1
      // Predicated region
      $region13: #{tinyvgg_forward.1} parent=11 // pred_check
        %p294 = pneg %p64
      $region14: #{tinyvgg_forward.1} parent=11 // pred_check_branch
        %296 = sbr.rel (%p294) target = $region16
      $region15: #{tinyvgg_forward.1} parent=11 // pred_region
        _
      $region16: #{tinyvgg_forward.1} parent=11 // pred_fallthru
        _
      // Predicated region
      $region17: #{tinyvgg_forward.1} parent=11 // pred_check
        %p297 = pneg %p85
      $region18: #{tinyvgg_forward.1} parent=11 // pred_check_branch
        %299 = sbr.rel (%p297) target = $region20
      $region19: #{tinyvgg_forward.1} parent=11 // pred_region
        _
      $region20: #{tinyvgg_forward.1} parent=11 // pred_fallthru
        _
      // Predicated region
      $region21: #{tinyvgg_forward.1} parent=11 // pred_check
        %p300 = pneg %p106
      $region22: #{tinyvgg_forward.1} parent=11 // pred_check_branch
        %302 = sbr.rel (%p300) target = $region24
      $region23: #{tinyvgg_forward.1} parent=11 // pred_region
        _
      $region24: #{tinyvgg_forward.1} parent=11 // pred_fallthru
        _
      // Predicated region
      $region25: #{tinyvgg_forward.1} parent=11 // pred_check
        %p303 = pneg %p127
      $region26: #{tinyvgg_forward.1} parent=11 // pred_check_branch
        %305 = sbr.rel (%p303) target = $region28
      $region27: #{tinyvgg_forward.1} parent=11 // pred_region
        _
      $region28: #{tinyvgg_forward.1} parent=11 // pred_fallthru
        _
      // Predicated region
      $region29: #{tinyvgg_forward.1} parent=11 // pred_check
        %p306 = pneg %p148
      $region30: #{tinyvgg_forward.1} parent=11 // pred_check_branch
        %308 = sbr.rel (%p306) target = $region32
      $region31: #{tinyvgg_forward.1} parent=11 // pred_region
        _
      $region32: #{tinyvgg_forward.1} parent=11 // pred_fallthru
        _
      // Predicated region
      $region33: #{tinyvgg_forward.1} parent=11 // pred_check
        %p309 = pneg %p169
      $region34: #{tinyvgg_forward.1} parent=11 // pred_check_branch
        %311 = sbr.rel (%p309) target = $region36
      $region35: #{tinyvgg_forward.1} parent=11 // pred_region
        _
      $region36: #{tinyvgg_forward.1} parent=11 // pred_fallthru
        _
      // Predicated region
      $region37: #{tinyvgg_forward.1} parent=11 // pred_check
        %p312 = pneg %p190
      $region38: #{tinyvgg_forward.1} parent=11 // pred_check_branch
        %314 = sbr.rel (%p312) target = $region40
      $region39: #{tinyvgg_forward.1} parent=11 // pred_region
        _
      $region40: #{tinyvgg_forward.1} parent=11 // pred_fallthru
        _
      // Predicated region
      $region41: #{tinyvgg_forward.1} parent=11 // pred_check
        %p315 = pneg %p211
      $region42: #{tinyvgg_forward.1} parent=11 // pred_check_branch
        %317 = sbr.rel (%p315) target = $region44
      $region43: #{tinyvgg_forward.1} parent=11 // pred_region
        _
      $region44: #{tinyvgg_forward.1} parent=11 // pred_fallthru
        _
      // Predicated region
      $region45: #{tinyvgg_forward.1} parent=11 // pred_check
        %p318 = pneg %p232
      $region46: #{tinyvgg_forward.1} parent=11 // pred_check_branch
        %320 = sbr.rel (%p318) target = $region48
      $region47: #{tinyvgg_forward.1} parent=11 // pred_region
        _
      $region48: #{tinyvgg_forward.1} parent=11 // pred_fallthru
        _
      // Predicated region
      $region49: #{tinyvgg_forward.1} parent=11 // pred_check
        %p321 = pneg %p253
      $region50: #{tinyvgg_forward.1} parent=11 // pred_check_branch
        %323 = sbr.rel (%p321) target = $region52
      $region51: #{tinyvgg_forward.1} parent=11 // pred_region
        _
      $region52: #{tinyvgg_forward.1} parent=11 // pred_fallthru
        _
    $region12: #{tinyvgg_forward.1} parent=5 // pred_fallthru
      _
    %p324 = scmp.lt.s32.totalorder %s17, 2
    // Predicated region
    $region53: #{tinyvgg_forward.1} parent=5 // pred_check
      %p325 = pneg %p324
    $region54: #{tinyvgg_forward.1} parent=5 // pred_check_branch
      %327 = sbr.rel (%p325) target = $region56
    $region55: #{tinyvgg_forward.1} parent=5 // pred_region
      // Predicated region
      $region57: #{tinyvgg_forward.1} parent=55 // pred_check
        %p328 = pneg %p37
      $region58: #{tinyvgg_forward.1} parent=55 // pred_check_branch
        %330 = sbr.rel (%p328) target = $region60
      $region59: #{tinyvgg_forward.1} parent=55 // pred_region
        %p331 = scmp.lt.s32.totalorder %s17, 1
        %s332 = scalar_select %p331, %s17, 1
        %s333 = smul.addr %s332, 512
        %s334 = smul.addr %s333, 8
        %s335 = scalar_lea.vmem %s0, %s334
      $region60: #{tinyvgg_forward.1} parent=55 // pred_fallthru
        _
    $region56: #{tinyvgg_forward.1} parent=5 // pred_fallthru
      _
    %p336 = scmp.le.s32.totalorder 1, %s17
    %p337 = scmp.lt.s32.totalorder %s17, 3
    %p338 = pnand %p336, %p337
    %p339 = pneg %p338
    // Predicated region
    $region61: #{tinyvgg_forward.1} parent=5 // pred_check
      _
    $region62: #{tinyvgg_forward.1} parent=5 // pred_check_branch
      %341 = sbr.rel (%p338) target = $region64
    $region63: #{tinyvgg_forward.1} parent=5 // pred_region
      %s342 = ssub.s32 %s17, 1
      %p343 = scmp.lt.s32.totalorder %s22, 1
      %s344 = scalar_select %p343, %s22, 1
      %s345 = smul.addr %s344, 512
      %s346 = smul.addr %s345, 8
      %s347 = scalar_lea.vmem %s0, %s346
      %p348 = pneg %p43
      %p349 = pneg %p40
      %p350 = pneg %p64
      %p351 = pneg %p61
      %p352 = pneg %p85
      %p353 = pneg %p82
      %p354 = pneg %p106
      %p355 = pneg %p103
      %p356 = pneg %p127
      %p357 = pneg %p124
      %p358 = pneg %p148
      %p359 = pneg %p145
      %p360 = pneg %p169
      %p361 = pneg %p166
      %p362 = pneg %p190
      %p363 = pneg %p187
      %p364 = pneg %p211
      %p365 = pneg %p208
      %p366 = pneg %p232
      %p367 = pneg %p229
      %p368 = pneg %p253
      %p369 = pneg %p250
      %p370 = pneg %p279
      %p371 = pneg %p276
      %p372 = scmp.lt.s32.totalorder %s22, 1
      %s373 = scalar_select %p372, %s22, 1
      %s374 = smul.addr %s373, 4
      %s375 = scalar_lea.vmem %s11, %s374
      %p376 = scmp.lt.s32.totalorder %s22, 1
      %s377 = scalar_select %p376, %s22, 1
      %s378 = smul.addr %s377, 512
      %s379 = smul.addr %s378, 8
      %s380 = scalar_lea.vmem %s0, %s379
      %p381 = scmp.lt.s32.totalorder %s22, 1
      %s382 = scalar_select %p381, %s22, 1
      %s383 = smul.addr %s382, 4
      %s384 = scalar_lea.vmem %s11, %s383
      %v385 = vld [vmem:[%s1] sm:$0xff]
      %v386 = vld [vmem:[%s1 + $0x8] sm:$0xff]
      %v387 = vld [vmem:[%s1 + $0x10] sm:$0xff]
      %v388 = vld [vmem:[%s1 + $0x18] sm:$0x7]
      %v389 = vld [vmem:[%s2] sm:$0x1]
      %v390 = vld [vmem:[%s3] sm:$0xff]
      %v391 = vld [vmem:[%s3 + $0x8] sm:$0xff]
      %v392 = vld [vmem:[%s3 + $0x10] sm:$0xff]
      %v393 = vld [vmem:[%s3 + $0x18] sm:$0xff]
      %v394 = vld [vmem:[%s3 + $0x20] sm:$0xff]
      %v395 = vld [vmem:[%s3 + $0x28] sm:$0xff]
      %v396 = vld [vmem:[%s3 + $0x30] sm:$0xff]
      %v397 = vld [vmem:[%s3 + $0x38] sm:$0xff]
      %v398 = vld [vmem:[%s3 + $0x40] sm:$0xff]
      %v399 = vld [vmem:[%s4] sm:$0x1]
      %v400 = vld [vmem:[%s5] sm:$0xff]
      %v401 = vld [vmem:[%s5 + $0x8] sm:$0xff]
      %v402 = vld [vmem:[%s5 + $0x10] sm:$0xff]
      %v403 = vld [vmem:[%s5 + $0x18] sm:$0xff]
      %v404 = vld [vmem:[%s5 + $0x20] sm:$0xff]
      %v405 = vld [vmem:[%s5 + $0x28] sm:$0xff]
      %v406 = vld [vmem:[%s5 + $0x30] sm:$0xff]
      %v407 = vld [vmem:[%s5 + $0x38] sm:$0xff]
      %v408 = vld [vmem:[%s5 + $0x40] sm:$0xff]
      %v409 = vld [vmem:[%s6] sm:$0x1]
      %v410 = vld [vmem:[%s7] sm:$0xff]
      %v411 = vld [vmem:[%s7 + $0x8] sm:$0xff]
      %v412 = vld [vmem:[%s7 + $0x10] sm:$0xff]
      %v413 = vld [vmem:[%s7 + $0x18] sm:$0xff]
      %v414 = vld [vmem:[%s7 + $0x20] sm:$0xff]
      %v415 = vld [vmem:[%s7 + $0x28] sm:$0xff]
      %v416 = vld [vmem:[%s7 + $0x30] sm:$0xff]
      %v417 = vld [vmem:[%s7 + $0x38] sm:$0xff]
      %v418 = vld [vmem:[%s7 + $0x40] sm:$0xff]
      %v419 = vld [vmem:[%s8] sm:$0x1]
      %v420 = vlaneseq
      %v421 = vshrl.u32 %v420, 7
      %v422 = vadd.s32 %v421, 8
      %v423 = vadd.s32 %v421, 16
      %v424 = vadd.s32 %v421, 24
      %v425 = vlaneseq
      %v426 = vand.u32 %v425, 127
      %v427 = vmul.u32 %v421, 2
      %v428 = vmul.u32 %v422, 2
      %v429 = vmul.u32 %v423, 2
      %v430 = vmul.u32 %v424, 2
      %vm431 = vcmp.eq.s32.totalorder %v426, %v427
      %vm432 = vcmp.eq.s32.totalorder %v426, %v428
      %vm433 = vcmp.eq.s32.totalorder %v426, %v429
      %vm434 = vcmp.eq.s32.totalorder %v426, %v430
      %v435 = vsel %vm431, 1, 0
      %v436 = vsel %vm432, 1, 0
      %v437 = vsel %vm433, 1, 0
      %v438 = vsel %vm434, 1, 0
      %v439 = vcvt.s32.f32 %v435
      %v440 = vcvt.s32.f32 %v436
      %v441 = vcvt.s32.f32 %v437
      %v442 = vcvt.s32.f32 %v438
      %v443 = vadd.s32 %v427, 1
      %v444 = vadd.s32 %v428, 1
      %v445 = vadd.s32 %v429, 1
      %v446 = vadd.s32 %v430, 1
      %vm447 = vcmp.eq.s32.totalorder %v426, %v443
      %vm448 = vcmp.eq.s32.totalorder %v426, %v444
      %vm449 = vcmp.eq.s32.totalorder %v426, %v445
      %vm450 = vcmp.eq.s32.totalorder %v426, %v446
      %v451 = vsel %vm447, 1, 0
      %v452 = vsel %vm448, 1, 0
      %v453 = vsel %vm449, 1, 0
      %v454 = vsel %vm450, 1, 0
      %v455 = vcvt.s32.f32 %v451
      %v456 = vcvt.s32.f32 %v452
      %v457 = vcvt.s32.f32 %v453
      %v458 = vcvt.s32.f32 %v454
      loop: start=0, step=1, limit=62
      $region65: #{tinyvgg_forward.1} parent=63 // loop_pre_header
        _
      $region66: #{tinyvgg_forward.1} parent=63 // loop_header
        %s460 = sphi 0, %s464
        %p461 = scmp.ge.s32.totalorder %s460, 62
      $region67: #{tinyvgg_forward.1} parent=63 // loop_header_branch
        %463 = sbr.rel (%p461) target = $region71
      $region68: #{tinyvgg_forward.1} parent=63 // loop_body
        %s465 = smul.u32 %s460, 64
        %s466 = scalar_lea.vmem %s380, %s465
        %v467 = vld [vmem:[%s466] sm:$0xff]
        %v468 = vld [vmem:[%s466 + $0x8] sm:$0xff]
        %v469 = vld [vmem:[%s466 + $0x10] sm:$0xff]
        %v470 = vld [vmem:[%s466 + $0x18] sm:$0xff]
        %v471 = vld [vmem:[%s466 + $0x20] sm:$0xff]
        %v472 = vld [vmem:[%s466 + $0x28] sm:$0xff]
        %v473 = vld [vmem:[%s466 + $0x30] sm:$0xff]
        %v474 = vld [vmem:[%s466 + $0x38] sm:$0xff]
        %s475 = sadd.s32 %s460, 1
        %s476 = smul.u32 %s475, 64
        %s477 = scalar_lea.vmem %s380, %s476
        %v478 = vld [vmem:[%s477] sm:$0xff]
        %v479 = vld [vmem:[%s477 + $0x8] sm:$0xff]
        %v480 = vld [vmem:[%s477 + $0x10] sm:$0xff]
        %v481 = vld [vmem:[%s477 + $0x18] sm:$0xff]
        %v482 = vld [vmem:[%s477 + $0x20] sm:$0xff]
        %v483 = vld [vmem:[%s477 + $0x28] sm:$0xff]
        %v484 = vld [vmem:[%s477 + $0x30] sm:$0xff]
        %v485 = vld [vmem:[%s477 + $0x38] sm:$0xff]
        %s486 = sadd.s32 %s460, 2
        %s487 = smul.u32 %s486, 64
        %s488 = scalar_lea.vmem %s380, %s487
        %v489 = vld [vmem:[%s488] sm:$0xff]
        %v490 = vld [vmem:[%s488 + $0x8] sm:$0xff]
        %v491 = vld [vmem:[%s488 + $0x10] sm:$0xff]
        %v492 = vld [vmem:[%s488 + $0x18] sm:$0xff]
        %v493 = vld [vmem:[%s488 + $0x20] sm:$0xff]
        %v494 = vld [vmem:[%s488 + $0x28] sm:$0xff]
        %v495 = vld [vmem:[%s488 + $0x30] sm:$0xff]
        %v496 = vld [vmem:[%s488 + $0x38] sm:$0xff]
        %vm505 = vcmask 1046528
        %v506 = vrot.slane %v467, 1
        %v507 = vrot.slane %v468, 1
        %v508 = vsel %vm505, %v506, %v507
        %v509 = vrot.slane %v469, 1
        %v510 = vsel %vm505, %v507, %v509
        %v511 = vrot.slane %v470, 1
        %v512 = vsel %vm505, %v509, %v511
        %v513 = vrot.slane %v471, 1
        %v514 = vsel %vm505, %v511, %v513
        %v515 = vrot.slane %v472, 1
        %v516 = vsel %vm505, %v513, %v515
        %v517 = vrot.slane %v473, 1
        %v518 = vsel %vm505, %v515, %v517
        %v519 = vrot.slane %v474, 1
        %v520 = vsel %vm505, %v517, %v519
        %521 = vrot.lane.b32.xlu0 %v508, 3
        %v522 = vpop.permute.xlu0 %521
        %523 = vrot.lane.b32.xlu0 %v510, 3
        %v524 = vpop.permute.xlu0 %523
        %525 = vrot.lane.b32.xlu0 %v512, 3
        %v526 = vpop.permute.xlu0 %525
        %527 = vrot.lane.b32.xlu0 %v514, 3
        %v528 = vpop.permute.xlu0 %527
        %529 = vrot.lane.b32.xlu0 %v516, 3
        %v530 = vpop.permute.xlu0 %529
        %531 = vrot.lane.b32.xlu0 %v518, 3
        %v532 = vpop.permute.xlu0 %531
        %533 = vrot.lane.b32.xlu0 %v520, 3
        %v534 = vpop.permute.xlu0 %533
        %535 = vrot.lane.b32.xlu0 %v519, 3
        %v536 = vpop.permute.xlu0 %535
        %vm545 = vcmask 1045504
        %v546 = vrot.slane %v467, 2
        %v547 = vrot.slane %v468, 2
        %v548 = vsel %vm545, %v546, %v547
        %v549 = vrot.slane %v469, 2
        %v550 = vsel %vm545, %v547, %v549
        %v551 = vrot.slane %v470, 2
        %v552 = vsel %vm545, %v549, %v551
        %v553 = vrot.slane %v471, 2
        %v554 = vsel %vm545, %v551, %v553
        %v555 = vrot.slane %v472, 2
        %v556 = vsel %vm545, %v553, %v555
        %v557 = vrot.slane %v473, 2
        %v558 = vsel %vm545, %v555, %v557
        %v559 = vrot.slane %v474, 2
        %v560 = vsel %vm545, %v557, %v559
        %561 = vrot.lane.b32.xlu0 %v548, 6
        %v562 = vpop.permute.xlu0 %561
        %563 = vrot.lane.b32.xlu0 %v550, 6
        %v564 = vpop.permute.xlu0 %563
        %565 = vrot.lane.b32.xlu0 %v552, 6
        %v566 = vpop.permute.xlu0 %565
        %567 = vrot.lane.b32.xlu0 %v554, 6
        %v568 = vpop.permute.xlu0 %567
        %569 = vrot.lane.b32.xlu0 %v556, 6
        %v570 = vpop.permute.xlu0 %569
        %571 = vrot.lane.b32.xlu0 %v558, 6
        %v572 = vpop.permute.xlu0 %571
        %573 = vrot.lane.b32.xlu0 %v560, 6
        %v574 = vpop.permute.xlu0 %573
        %575 = vrot.lane.b32.xlu0 %v559, 6
        %v576 = vpop.permute.xlu0 %575
        %593 = vrot.lane.b32.xlu0 %v478, 9
        %v594 = vpop.permute.xlu0 %593
        %595 = vrot.lane.b32.xlu0 %v479, 9
        %v596 = vpop.permute.xlu0 %595
        %597 = vrot.lane.b32.xlu0 %v480, 9
        %v598 = vpop.permute.xlu0 %597
        %599 = vrot.lane.b32.xlu0 %v481, 9
        %v600 = vpop.permute.xlu0 %599
        %601 = vrot.lane.b32.xlu0 %v482, 9
        %v602 = vpop.permute.xlu0 %601
        %603 = vrot.lane.b32.xlu0 %v483, 9
        %v604 = vpop.permute.xlu0 %603
        %605 = vrot.lane.b32.xlu0 %v484, 9
        %v606 = vpop.permute.xlu0 %605
        %607 = vrot.lane.b32.xlu0 %v485, 9
        %v608 = vpop.permute.xlu0 %607
        %v617 = vrot.slane %v478, 1
        %v618 = vrot.slane %v479, 1
        %v619 = vsel %vm505, %v617, %v618
        %v620 = vrot.slane %v480, 1
        %v621 = vsel %vm505, %v618, %v620
        %v622 = vrot.slane %v481, 1
        %v623 = vsel %vm505, %v620, %v622
        %v624 = vrot.slane %v482, 1
        %v625 = vsel %vm505, %v622, %v624
        %v626 = vrot.slane %v483, 1
        %v627 = vsel %vm505, %v624, %v626
        %v628 = vrot.slane %v484, 1
        %v629 = vsel %vm505, %v626, %v628
        %v630 = vrot.slane %v485, 1
        %v631 = vsel %vm505, %v628, %v630
        %632 = vrot.lane.b32.xlu0 %v619, 12
        %v633 = vpop.permute.xlu0 %632
        %634 = vrot.lane.b32.xlu0 %v621, 12
        %v635 = vpop.permute.xlu0 %634
        %636 = vrot.lane.b32.xlu0 %v623, 12
        %v637 = vpop.permute.xlu0 %636
        %638 = vrot.lane.b32.xlu0 %v625, 12
        %v639 = vpop.permute.xlu0 %638
        %640 = vrot.lane.b32.xlu0 %v627, 12
        %v641 = vpop.permute.xlu0 %640
        %642 = vrot.lane.b32.xlu0 %v629, 12
        %v643 = vpop.permute.xlu0 %642
        %644 = vrot.lane.b32.xlu0 %v631, 12
        %v645 = vpop.permute.xlu0 %644
        %646 = vrot.lane.b32.xlu0 %v630, 12
        %v647 = vpop.permute.xlu0 %646
        %v656 = vrot.slane %v478, 2
        %v657 = vrot.slane %v479, 2
        %v658 = vsel %vm545, %v656, %v657
        %v659 = vrot.slane %v480, 2
        %v660 = vsel %vm545, %v657, %v659
        %v661 = vrot.slane %v481, 2
        %v662 = vsel %vm545, %v659, %v661
        %v663 = vrot.slane %v482, 2
        %v664 = vsel %vm545, %v661, %v663
        %v665 = vrot.slane %v483, 2
        %v666 = vsel %vm545, %v663, %v665
        %v667 = vrot.slane %v484, 2
        %v668 = vsel %vm545, %v665, %v667
        %v669 = vrot.slane %v485, 2
        %v670 = vsel %vm545, %v667, %v669
        %671 = vrot.lane.b32.xlu0 %v658, 15
        %v672 = vpop.permute.xlu0 %671
        %673 = vrot.lane.b32.xlu0 %v660, 15
        %v674 = vpop.permute.xlu0 %673
        %675 = vrot.lane.b32.xlu0 %v662, 15
        %v676 = vpop.permute.xlu0 %675
        %677 = vrot.lane.b32.xlu0 %v664, 15
        %v678 = vpop.permute.xlu0 %677
        %679 = vrot.lane.b32.xlu0 %v666, 15
        %v680 = vpop.permute.xlu0 %679
        %681 = vrot.lane.b32.xlu0 %v668, 15
        %v682 = vpop.permute.xlu0 %681
        %683 = vrot.lane.b32.xlu0 %v670, 15
        %v684 = vpop.permute.xlu0 %683
        %685 = vrot.lane.b32.xlu0 %v669, 15
        %v686 = vpop.permute.xlu0 %685
        %703 = vrot.lane.b32.xlu0 %v489, 18
        %v704 = vpop.permute.xlu0 %703
        %705 = vrot.lane.b32.xlu0 %v490, 18
        %v706 = vpop.permute.xlu0 %705
        %707 = vrot.lane.b32.xlu0 %v491, 18
        %v708 = vpop.permute.xlu0 %707
        %709 = vrot.lane.b32.xlu0 %v492, 18
        %v710 = vpop.permute.xlu0 %709
        %711 = vrot.lane.b32.xlu0 %v493, 18
        %v712 = vpop.permute.xlu0 %711
        %713 = vrot.lane.b32.xlu0 %v494, 18
        %v714 = vpop.permute.xlu0 %713
        %715 = vrot.lane.b32.xlu0 %v495, 18
        %v716 = vpop.permute.xlu0 %715
        %717 = vrot.lane.b32.xlu0 %v496, 18
        %v718 = vpop.permute.xlu0 %717
        %v727 = vrot.slane %v489, 1
        %v728 = vrot.slane %v490, 1
        %v729 = vsel %vm505, %v727, %v728
        %v730 = vrot.slane %v491, 1
        %v731 = vsel %vm505, %v728, %v730
        %v732 = vrot.slane %v492, 1
        %v733 = vsel %vm505, %v730, %v732
        %v734 = vrot.slane %v493, 1
        %v735 = vsel %vm505, %v732, %v734
        %v736 = vrot.slane %v494, 1
        %v737 = vsel %vm505, %v734, %v736
        %v738 = vrot.slane %v495, 1
        %v739 = vsel %vm505, %v736, %v738
        %v740 = vrot.slane %v496, 1
        %v741 = vsel %vm505, %v738, %v740
        %742 = vrot.lane.b32.xlu0 %v729, 21
        %v743 = vpop.permute.xlu0 %742
        %744 = vrot.lane.b32.xlu0 %v731, 21
        %v745 = vpop.permute.xlu0 %744
        %746 = vrot.lane.b32.xlu0 %v733, 21
        %v747 = vpop.permute.xlu0 %746
        %748 = vrot.lane.b32.xlu0 %v735, 21
        %v749 = vpop.permute.xlu0 %748
        %750 = vrot.lane.b32.xlu0 %v737, 21
        %v751 = vpop.permute.xlu0 %750
        %752 = vrot.lane.b32.xlu0 %v739, 21
        %v753 = vpop.permute.xlu0 %752
        %754 = vrot.lane.b32.xlu0 %v741, 21
        %v755 = vpop.permute.xlu0 %754
        %756 = vrot.lane.b32.xlu0 %v740, 21
        %v757 = vpop.permute.xlu0 %756
        %v766 = vrot.slane %v489, 2
        %v767 = vrot.slane %v490, 2
        %v768 = vsel %vm545, %v766, %v767
        %v769 = vrot.slane %v491, 2
        %v770 = vsel %vm545, %v767, %v769
        %v771 = vrot.slane %v492, 2
        %v772 = vsel %vm545, %v769, %v771
        %v773 = vrot.slane %v493, 2
        %v774 = vsel %vm545, %v771, %v773
        %v775 = vrot.slane %v494, 2
        %v776 = vsel %vm545, %v773, %v775
        %v777 = vrot.slane %v495, 2
        %v778 = vsel %vm545, %v775, %v777
        %v779 = vrot.slane %v496, 2
        %v780 = vsel %vm545, %v777, %v779
        %781 = vrot.lane.b32.xlu0 %v768, 24
        %v782 = vpop.permute.xlu0 %781
        %783 = vrot.lane.b32.xlu0 %v770, 24
        %v784 = vpop.permute.xlu0 %783
        %785 = vrot.lane.b32.xlu0 %v772, 24
        %v786 = vpop.permute.xlu0 %785
        %787 = vrot.lane.b32.xlu0 %v774, 24
        %v788 = vpop.permute.xlu0 %787
        %789 = vrot.lane.b32.xlu0 %v776, 24
        %v790 = vpop.permute.xlu0 %789
        %791 = vrot.lane.b32.xlu0 %v778, 24
        %v792 = vpop.permute.xlu0 %791
        %793 = vrot.lane.b32.xlu0 %v780, 24
        %v794 = vpop.permute.xlu0 %793
        %795 = vrot.lane.b32.xlu0 %v779, 24
        %v796 = vpop.permute.xlu0 %795
        %vm805 = vcmask 23552
        %v806 = vsel %vm805, %v467, %v522
        %v807 = vsel %vm805, %v468, %v524
        %v808 = vsel %vm805, %v469, %v526
        %v809 = vsel %vm805, %v470, %v528
        %v810 = vsel %vm805, %v471, %v530
        %v811 = vsel %vm805, %v472, %v532
        %v812 = vsel %vm805, %v473, %v534
        %v813 = vsel %vm805, %v474, %v536
        %vm814 = vcmask 48128
        %v815 = vsel %vm814, %v806, %v562
        %v816 = vsel %vm814, %v807, %v564
        %v817 = vsel %vm814, %v808, %v566
        %v818 = vsel %vm814, %v809, %v568
        %v819 = vsel %vm814, %v810, %v570
        %v820 = vsel %vm814, %v811, %v572
        %v821 = vsel %vm814, %v812, %v574
        %v822 = vsel %vm814, %v813, %v576
        %vm823 = vcmask 72704
        %v824 = vsel %vm823, %v815, %v594
        %v825 = vsel %vm823, %v816, %v596
        %v826 = vsel %vm823, %v817, %v598
        %v827 = vsel %vm823, %v818, %v600
        %v828 = vsel %vm823, %v819, %v602
        %v829 = vsel %vm823, %v820, %v604
        %v830 = vsel %vm823, %v821, %v606
        %v831 = vsel %vm823, %v822, %v608
        %vm832 = vcmask 97280
        %v833 = vsel %vm832, %v824, %v633
        %v834 = vsel %vm832, %v825, %v635
        %v835 = vsel %vm832, %v826, %v637
        %v836 = vsel %vm832, %v827, %v639
        %v837 = vsel %vm832, %v828, %v641
        %v838 = vsel %vm832, %v829, %v643
        %v839 = vsel %vm832, %v830, %v645
        %v840 = vsel %vm832, %v831, %v647
        %vm841 = vcmask 121856
        %v842 = vsel %vm841, %v833, %v672
        %v843 = vsel %vm841, %v834, %v674
        %v844 = vsel %vm841, %v835, %v676
        %v845 = vsel %vm841, %v836, %v678
        %v846 = vsel %vm841, %v837, %v680
        %v847 = vsel %vm841, %v838, %v682
        %v848 = vsel %vm841, %v839, %v684
        %v849 = vsel %vm841, %v840, %v686
        %vm850 = vcmask 146432
        %v851 = vsel %vm850, %v842, %v704
        %v852 = vsel %vm850, %v843, %v706
        %v853 = vsel %vm850, %v844, %v708
        %v854 = vsel %vm850, %v845, %v710
        %v855 = vsel %vm850, %v846, %v712
        %v856 = vsel %vm850, %v847, %v714
        %v857 = vsel %vm850, %v848, %v716
        %v858 = vsel %vm850, %v849, %v718
        %vm859 = vcmask 171008
        %v860 = vsel %vm859, %v851, %v743
        %v861 = vsel %vm859, %v852, %v745
        %v862 = vsel %vm859, %v853, %v747
        %v863 = vsel %vm859, %v854, %v749
        %v864 = vsel %vm859, %v855, %v751
        %v865 = vsel %vm859, %v856, %v753
        %v866 = vsel %vm859, %v857, %v755
        %v867 = vsel %vm859, %v858, %v757
        %vm868 = vcmask 195584
        %v869 = vsel %vm868, %v860, %v782
        %v870 = vsel %vm868, %v861, %v784
        %v871 = vsel %vm868, %v862, %v786
        %v872 = vsel %vm868, %v863, %v788
        %v873 = vsel %vm868, %v864, %v790
        %v874 = vsel %vm868, %v865, %v792
        %v875 = vsel %vm868, %v866, %v794
        %v876 = vsel %vm868, %v867, %v796
        %v878 = vlaneseq
        %v879 = vshrl.u32 %v878, 7
        %v880 = vsub.s32 0, %v879
        %v881 = vrot.slane %v389, %v880
        %vm883 = vcmask 220160
        %v885 = vsel %vm883, %v869, 0
        %v888 = vsel %vm883, %v870, 0
        %v891 = vsel %vm883, %v871, 0
        %v894 = vsel %vm883, %v872, 0
        %v897 = vsel %vm883, %v873, 0
        %v900 = vsel %vm883, %v874, 0
        %v903 = vsel %vm883, %v875, 0
        %v906 = vsel %vm883, %v876, 0
        %vm908 = vcmask 1042432
        %v910 = vsel %vm908, %v388, 0
        %912 = vmatprep.subr.mxu0 0.0
        %913 = vmatpush1.msra.mxu0 %v385
        %914 = vmatprep.subr.mxu0 0.0
        %915 = vmatpush1.msra.mxu0 %v386
        %916 = vmatprep.subr.mxu0 0.0
        %917 = vmatpush1.msra.mxu0 %v387
        %918 = vmatprep.subr.mxu0 0.0
        %919 = vmatpush1.msra.mxu0 %v910
        %920 = vmatprep.subr.mxu0 0.0
        %921 = vmatpush1.msra.mxu0 0.0
        %922 = vmatprep.subr.mxu0 0.0
        %923 = vmatpush1.msra.mxu0 0.0
        %924 = vmatprep.subr.mxu0 0.0
        %925 = vmatpush1.msra.mxu0 0.0
        %926 = vmatprep.subr.mxu0 0.0
        %927 = vmatpush1.msra.mxu0 0.0
        %928 = vmatprep.subr.mxu0 0.0
        %929 = vmatpush1.msra.mxu0 0.0
        %930 = vmatprep.subr.mxu0 0.0
        %931 = vmatpush1.msra.mxu0 0.0
        %932 = vmatprep.subr.mxu0 0.0
        %933 = vmatpush1.msra.mxu0 0.0
        %934 = vmatprep.subr.mxu0 0.0
        %935 = vmatpush1.msra.mxu0 0.0
        %936 = vmatprep.subr.mxu0 0.0
        %937 = vmatpush1.msra.mxu0 0.0
        %938 = vmatprep.subr.mxu0 0.0
        %939 = vmatpush1.msra.mxu0 0.0
        %940 = vmatprep.subr.mxu0 0.0
        %941 = vmatpush1.msra.mxu0 0.0
        %942 = vmatprep.subr.mxu0 0.0
        %943 = vmatpush1.msra.mxu0 0.0
        %944 = vmatprep.subr.mxu0 0.0
        %945 = vmatpush1.msra.mxu0 0.0
        %946 = vmatprep.subr.mxu0 0.0
        %947 = vmatpush1.msra.mxu0 0.0
        %948 = vmatprep.subr.mxu0 0.0
        %949 = vmatpush1.msra.mxu0 0.0
        %950 = vmatprep.subr.mxu0 0.0
        %951 = vmatpush1.msra.mxu0 0.0
        %952 = vmatprep.subr.mxu0 0.0
        %953 = vmatpush1.msra.mxu0 0.0
        %954 = vmatprep.subr.mxu0 0.0
        %955 = vmatpush1.msra.mxu0 0.0
        %956 = vmatprep.subr.mxu0 0.0
        %957 = vmatpush1.msra.mxu0 0.0
        %958 = vmatprep.subr.mxu0 0.0
        %959 = vmatpush1.msra.mxu0 0.0
        %960 = vmatprep.subr.mxu0 0.0
        %961 = vmatpush1.msra.mxu0 0.0
        %962 = vmatprep.subr.mxu0 0.0
        %963 = vmatpush1.msra.mxu0 0.0
        %964 = vmatprep.subr.mxu0 0.0
        %965 = vmatpush1.msra.mxu0 0.0
        %966 = vmatprep.subr.mxu0 0.0
        %967 = vmatpush1.msra.mxu0 0.0
        %968 = vmatprep.subr.mxu0 0.0
        %969 = vmatpush1.msra.mxu0 0.0
        %970 = vmatprep.subr.mxu0 0.0
        %971 = vmatpush1.msra.mxu0 0.0
        %972 = vmatprep.subr.mxu0 0.0
        %973 = vmatpush1.msra.mxu0 0.0
        %974 = vmatprep.subr.mxu0 0.0
        %975 = vmatpush1.msra.mxu0 0.0
        %976 = vmatprep.mubr.f32.mxu0 0.0
        %977 = vmatmul.mubr.f32.gmra.mrb[0].mxu0 %v885
        %v978 = vpop.f32.mrb[0].mxu0
        %v979 = vadd.f32 %v881, %v978
        %v980 = vpop.f32.mrb[0].mxu0
        %981 = vmatprep.mubr.f32.mxu0 0.0
        %982 = vmatmul.mubr.f32.gmra.mrb[0].mxu0 %v888
        %v983 = vpop.f32.mrb[0].mxu0
        %v984 = vadd.f32 %v881, %v983
        %v985 = vpop.f32.mrb[0].mxu0
        %986 = vmatprep.mubr.f32.mxu0 0.0
        %987 = vmatmul.mubr.f32.gmra.mrb[0].mxu0 %v891
        %v988 = vpop.f32.mrb[0].mxu0
        %v989 = vadd.f32 %v881, %v988
        %v990 = vpop.f32.mrb[0].mxu0
        %991 = vmatprep.mubr.f32.mxu0 0.0
        %992 = vmatmul.mubr.f32.gmra.mrb[0].mxu0 %v894
        %v993 = vpop.f32.mrb[0].mxu0
        %v994 = vadd.f32 %v881, %v993
        %v995 = vpop.f32.mrb[0].mxu0
        %996 = vmatprep.mubr.f32.mxu0 0.0
        %997 = vmatmul.mubr.f32.gmra.mrb[0].mxu0 %v897
        %v998 = vpop.f32.mrb[0].mxu0
        %v999 = vadd.f32 %v881, %v998
        %v1000 = vpop.f32.mrb[0].mxu0
        %1001 = vmatprep.mubr.f32.mxu0 0.0
        %1002 = vmatmul.mubr.f32.gmra.mrb[0].mxu0 %v900
        %v1003 = vpop.f32.mrb[0].mxu0
        %v1004 = vadd.f32 %v881, %v1003
        %v1005 = vpop.f32.mrb[0].mxu0
        %1006 = vmatprep.mubr.f32.mxu0 0.0
        %1007 = vmatmul.mubr.f32.gmra.mrb[0].mxu0 %v903
        %v1008 = vpop.f32.mrb[0].mxu0
        %v1009 = vadd.f32 %v881, %v1008
        %v1010 = vpop.f32.mrb[0].mxu0
        %1011 = vmatprep.mubr.f32.mxu0 0.0
        %1012 = vmatmul.mubr.f32.gmra.mrb[0].mxu0 %v906
        %v1013 = vpop.f32.mrb[0].mxu0
        %v1014 = vadd.f32 %v881, %v1013
        %v1015 = vpop.f32.mrb[0].mxu0
        %1016 = vdwg.mxu0
        %v1017 = vmax.f32 %v979, 0.0
        %v1018 = vmax.f32 %v984, 0.0
        %v1019 = vmax.f32 %v989, 0.0
        %v1020 = vmax.f32 %v994, 0.0
        %v1021 = vmax.f32 %v999, 0.0
        %v1022 = vmax.f32 %v1004, 0.0
        %v1023 = vmax.f32 %v1009, 0.0
        %v1024 = vmax.f32 %v1014, 0.0
        %s1025 = scalar_lea.vmem [#allocation2], %s465
        %vm1026 = vcmask 64512
        %1027 = vst.msk [vmem:[%s1025] sm:$0xff] %vm1026, %v1017
        %1028 = vst.msk [vmem:[%s1025 + $0x8] sm:$0xff] %vm1026, %v1018
        %1029 = vst.msk [vmem:[%s1025 + $0x10] sm:$0xff] %vm1026, %v1019
        %1030 = vst.msk [vmem:[%s1025 + $0x18] sm:$0xff] %vm1026, %v1020
        %1031 = vst.msk [vmem:[%s1025 + $0x20] sm:$0xff] %vm1026, %v1021
        %1032 = vst.msk [vmem:[%s1025 + $0x28] sm:$0xff] %vm1026, %v1022
        %1033 = vst.msk [vmem:[%s1025 + $0x30] sm:$0xff] %vm1026, %v1023
        %vm1034 = vcmask 62464
        %1035 = vst.msk [vmem:[%s1025 + $0x38] sm:$0x3f] %vm1034, %v1024
      $region69: #{tinyvgg_forward.1} parent=63 // loop_footer
        %s464 = sadd.s32 1, %s460
      $region70: #{tinyvgg_forward.1} parent=63 // loop_footer_branch
        %459 = sbr.rel target = $region66
      $region71: #{tinyvgg_forward.1} parent=63 // loop_exit
        _
      loop: start=0, step=1, limit=30
      $region72: #{tinyvgg_forward.1} parent=63 // loop_pre_header
        _
      $region73: #{tinyvgg_forward.1} parent=63 // loop_header
        %s1037 = sphi 0, %s1041
        %p1038 = scmp.ge.s32.totalorder %s1037, 30
      $region74: #{tinyvgg_forward.1} parent=63 // loop_header_branch
        %1040 = sbr.rel (%p1038) target = $region78
      $region75: #{tinyvgg_forward.1} parent=63 // loop_body
        %s1042 = smul.u32 %s1037, 2
        %s1043 = smul.u32 %s1042, 64
        %s1044 = scalar_lea.vmem [#allocation2], %s1043
        %v1045 = vld [vmem:[%s1044] sm:$0xff]
        %v1046 = vld [vmem:[%s1044 + $0x8] sm:$0xff]
        %v1047 = vld [vmem:[%s1044 + $0x10] sm:$0xff]
        %v1048 = vld [vmem:[%s1044 + $0x18] sm:$0xff]
        %v1049 = vld [vmem:[%s1044 + $0x20] sm:$0xff]
        %v1050 = vld [vmem:[%s1044 + $0x28] sm:$0xff]
        %v1051 = vld [vmem:[%s1044 + $0x30] sm:$0xff]
        %v1052 = vld [vmem:[%s1044 + $0x38] sm:$0x3f]
        %s1053 = sadd.s32 %s1042, 1
        %s1054 = smul.u32 %s1053, 64
        %s1055 = scalar_lea.vmem [#allocation2], %s1054
        %v1056 = vld [vmem:[%s1055] sm:$0xff]
        %v1057 = vld [vmem:[%s1055 + $0x8] sm:$0xff]
        %v1058 = vld [vmem:[%s1055 + $0x10] sm:$0xff]
        %v1059 = vld [vmem:[%s1055 + $0x18] sm:$0xff]
        %v1060 = vld [vmem:[%s1055 + $0x20] sm:$0xff]
        %v1061 = vld [vmem:[%s1055 + $0x28] sm:$0xff]
        %v1062 = vld [vmem:[%s1055 + $0x30] sm:$0xff]
        %v1063 = vld [vmem:[%s1055 + $0x38] sm:$0x3f]
        %s1064 = sadd.s32 %s1042, 2
        %s1065 = smul.u32 %s1064, 64
        %s1066 = scalar_lea.vmem [#allocation2], %s1065
        %v1067 = vld [vmem:[%s1066] sm:$0xff]
        %v1068 = vld [vmem:[%s1066 + $0x8] sm:$0xff]
        %v1069 = vld [vmem:[%s1066 + $0x10] sm:$0xff]
        %v1070 = vld [vmem:[%s1066 + $0x18] sm:$0xff]
        %v1071 = vld [vmem:[%s1066 + $0x20] sm:$0xff]
        %v1072 = vld [vmem:[%s1066 + $0x28] sm:$0xff]
        %v1073 = vld [vmem:[%s1066 + $0x30] sm:$0xff]
        %v1074 = vld [vmem:[%s1066 + $0x38] sm:$0x3f]
        %s1075 = sadd.s32 %s1042, 3
        %s1076 = smul.u32 %s1075, 64
        %s1077 = scalar_lea.vmem [#allocation2], %s1076
        %v1078 = vld [vmem:[%s1077] sm:$0xff]
        %v1079 = vld [vmem:[%s1077 + $0x8] sm:$0xff]
        %v1080 = vld [vmem:[%s1077 + $0x10] sm:$0xff]
        %v1081 = vld [vmem:[%s1077 + $0x18] sm:$0xff]
        %v1082 = vld [vmem:[%s1077 + $0x20] sm:$0xff]
        %v1083 = vld [vmem:[%s1077 + $0x28] sm:$0xff]
        %v1084 = vld [vmem:[%s1077 + $0x30] sm:$0xff]
        %v1085 = vld [vmem:[%s1077 + $0x38] sm:$0x3f]
        %vm1094 = vcmask 1046528
        %v1095 = vrot.slane %v1045, 1
        %v1096 = vrot.slane %v1046, 1
        %v1097 = vsel %vm1094, %v1095, %v1096
        %v1098 = vrot.slane %v1047, 1
        %v1099 = vsel %vm1094, %v1096, %v1098
        %v1100 = vrot.slane %v1048, 1
        %v1101 = vsel %vm1094, %v1098, %v1100
        %v1102 = vrot.slane %v1049, 1
        %v1103 = vsel %vm1094, %v1100, %v1102
        %v1104 = vrot.slane %v1050, 1
        %v1105 = vsel %vm1094, %v1102, %v1104
        %v1106 = vrot.slane %v1051, 1
        %v1107 = vsel %vm1094, %v1104, %v1106
        %v1108 = vrot.slane %v1052, 1
        %v1109 = vsel %vm1094, %v1106, %v1108
        %1110 = vrot.lane.b32.xlu0 %v1097, 8
        %v1111 = vpop.permute.xlu0 %1110
        %1112 = vrot.lane.b32.xlu0 %v1099, 8
        %v1113 = vpop.permute.xlu0 %1112
        %1114 = vrot.lane.b32.xlu0 %v1101, 8
        %v1115 = vpop.permute.xlu0 %1114
        %1116 = vrot.lane.b32.xlu0 %v1103, 8
        %v1117 = vpop.permute.xlu0 %1116
        %1118 = vrot.lane.b32.xlu0 %v1105, 8
        %v1119 = vpop.permute.xlu0 %1118
        %1120 = vrot.lane.b32.xlu0 %v1107, 8
        %v1121 = vpop.permute.xlu0 %1120
        %1122 = vrot.lane.b32.xlu0 %v1109, 8
        %v1123 = vpop.permute.xlu0 %1122
        %1124 = vrot.lane.b32.xlu0 %v1108, 8
        %v1125 = vpop.permute.xlu0 %1124
        %vm1134 = vcmask 1045504
        %v1135 = vrot.slane %v1045, 2
        %v1136 = vrot.slane %v1046, 2
        %v1137 = vsel %vm1134, %v1135, %v1136
        %v1138 = vrot.slane %v1047, 2
        %v1139 = vsel %vm1134, %v1136, %v1138
        %v1140 = vrot.slane %v1048, 2
        %v1141 = vsel %vm1134, %v1138, %v1140
        %v1142 = vrot.slane %v1049, 2
        %v1143 = vsel %vm1134, %v1140, %v1142
        %v1144 = vrot.slane %v1050, 2
        %v1145 = vsel %vm1134, %v1142, %v1144
        %v1146 = vrot.slane %v1051, 2
        %v1147 = vsel %vm1134, %v1144, %v1146
        %v1148 = vrot.slane %v1052, 2
        %v1149 = vsel %vm1134, %v1146, %v1148
        %1150 = vrot.lane.b32.xlu0 %v1137, 16
        %v1151 = vpop.permute.xlu0 %1150
        %1152 = vrot.lane.b32.xlu0 %v1139, 16
        %v1153 = vpop.permute.xlu0 %1152
        %1154 = vrot.lane.b32.xlu0 %v1141, 16
        %v1155 = vpop.permute.xlu0 %1154
        %1156 = vrot.lane.b32.xlu0 %v1143, 16
        %v1157 = vpop.permute.xlu0 %1156
        %1158 = vrot.lane.b32.xlu0 %v1145, 16
        %v1159 = vpop.permute.xlu0 %1158
        %1160 = vrot.lane.b32.xlu0 %v1147, 16
        %v1161 = vpop.permute.xlu0 %1160
        %1162 = vrot.lane.b32.xlu0 %v1149, 16
        %v1163 = vpop.permute.xlu0 %1162
        %1164 = vrot.lane.b32.xlu0 %v1148, 16
        %v1165 = vpop.permute.xlu0 %1164
        %1182 = vrot.lane.b32.xlu0 %v1056, 24
        %v1183 = vpop.permute.xlu0 %1182
        %1184 = vrot.lane.b32.xlu0 %v1057, 24
        %v1185 = vpop.permute.xlu0 %1184
        %1186 = vrot.lane.b32.xlu0 %v1058, 24
        %v1187 = vpop.permute.xlu0 %1186
        %1188 = vrot.lane.b32.xlu0 %v1059, 24
        %v1189 = vpop.permute.xlu0 %1188
        %1190 = vrot.lane.b32.xlu0 %v1060, 24
        %v1191 = vpop.permute.xlu0 %1190
        %1192 = vrot.lane.b32.xlu0 %v1061, 24
        %v1193 = vpop.permute.xlu0 %1192
        %1194 = vrot.lane.b32.xlu0 %v1062, 24
        %v1195 = vpop.permute.xlu0 %1194
        %1196 = vrot.lane.b32.xlu0 %v1063, 24
        %v1197 = vpop.permute.xlu0 %1196
        %v1206 = vrot.slane %v1056, 1
        %v1207 = vrot.slane %v1057, 1
        %v1208 = vsel %vm1094, %v1206, %v1207
        %v1209 = vrot.slane %v1058, 1
        %v1210 = vsel %vm1094, %v1207, %v1209
        %v1211 = vrot.slane %v1059, 1
        %v1212 = vsel %vm1094, %v1209, %v1211
        %v1213 = vrot.slane %v1060, 1
        %v1214 = vsel %vm1094, %v1211, %v1213
        %v1215 = vrot.slane %v1061, 1
        %v1216 = vsel %vm1094, %v1213, %v1215
        %v1217 = vrot.slane %v1062, 1
        %v1218 = vsel %vm1094, %v1215, %v1217
        %v1219 = vrot.slane %v1063, 1
        %v1220 = vsel %vm1094, %v1217, %v1219
        %1221 = vrot.lane.b32.xlu0 %v1208, 32
        %v1222 = vpop.permute.xlu0 %1221
        %1223 = vrot.lane.b32.xlu0 %v1210, 32
        %v1224 = vpop.permute.xlu0 %1223
        %1225 = vrot.lane.b32.xlu0 %v1212, 32
        %v1226 = vpop.permute.xlu0 %1225
        %1227 = vrot.lane.b32.xlu0 %v1214, 32
        %v1228 = vpop.permute.xlu0 %1227
        %1229 = vrot.lane.b32.xlu0 %v1216, 32
        %v1230 = vpop.permute.xlu0 %1229
        %1231 = vrot.lane.b32.xlu0 %v1218, 32
        %v1232 = vpop.permute.xlu0 %1231
        %1233 = vrot.lane.b32.xlu0 %v1220, 32
        %v1234 = vpop.permute.xlu0 %1233
        %1235 = vrot.lane.b32.xlu0 %v1219, 32
        %v1236 = vpop.permute.xlu0 %1235
        %v1245 = vrot.slane %v1056, 2
        %v1246 = vrot.slane %v1057, 2
        %v1247 = vsel %vm1134, %v1245, %v1246
        %v1248 = vrot.slane %v1058, 2
        %v1249 = vsel %vm1134, %v1246, %v1248
        %v1250 = vrot.slane %v1059, 2
        %v1251 = vsel %vm1134, %v1248, %v1250
        %v1252 = vrot.slane %v1060, 2
        %v1253 = vsel %vm1134, %v1250, %v1252
        %v1254 = vrot.slane %v1061, 2
        %v1255 = vsel %vm1134, %v1252, %v1254
        %v1256 = vrot.slane %v1062, 2
        %v1257 = vsel %vm1134, %v1254, %v1256
        %v1258 = vrot.slane %v1063, 2
        %v1259 = vsel %vm1134, %v1256, %v1258
        %1260 = vrot.lane.b32.xlu0 %v1247, 40
        %v1261 = vpop.permute.xlu0 %1260
        %1262 = vrot.lane.b32.xlu0 %v1249, 40
        %v1263 = vpop.permute.xlu0 %1262
        %1264 = vrot.lane.b32.xlu0 %v1251, 40
        %v1265 = vpop.permute.xlu0 %1264
        %1266 = vrot.lane.b32.xlu0 %v1253, 40
        %v1267 = vpop.permute.xlu0 %1266
        %1268 = vrot.lane.b32.xlu0 %v1255, 40
        %v1269 = vpop.permute.xlu0 %1268
        %1270 = vrot.lane.b32.xlu0 %v1257, 40
        %v1271 = vpop.permute.xlu0 %1270
        %1272 = vrot.lane.b32.xlu0 %v1259, 40
        %v1273 = vpop.permute.xlu0 %1272
        %1274 = vrot.lane.b32.xlu0 %v1258, 40
        %v1275 = vpop.permute.xlu0 %1274
        %1292 = vrot.lane.b32.xlu0 %v1067, 48
        %v1293 = vpop.permute.xlu0 %1292
        %1294 = vrot.lane.b32.xlu0 %v1068, 48
        %v1295 = vpop.permute.xlu0 %1294
        %1296 = vrot.lane.b32.xlu0 %v1069, 48
        %v1297 = vpop.permute.xlu0 %1296
        %1298 = vrot.lane.b32.xlu0 %v1070, 48
        %v1299 = vpop.permute.xlu0 %1298
        %1300 = vrot.lane.b32.xlu0 %v1071, 48
        %v1301 = vpop.permute.xlu0 %1300
        %1302 = vrot.lane.b32.xlu0 %v1072, 48
        %v1303 = vpop.permute.xlu0 %1302
        %1304 = vrot.lane.b32.xlu0 %v1073, 48
        %v1305 = vpop.permute.xlu0 %1304
        %1306 = vrot.lane.b32.xlu0 %v1074, 48
        %v1307 = vpop.permute.xlu0 %1306
        %v1316 = vrot.slane %v1067, 1
        %v1317 = vrot.slane %v1068, 1
        %v1318 = vsel %vm1094, %v1316, %v1317
        %v1319 = vrot.slane %v1069, 1
        %v1320 = vsel %vm1094, %v1317, %v1319
        %v1321 = vrot.slane %v1070, 1
        %v1322 = vsel %vm1094, %v1319, %v1321
        %v1323 = vrot.slane %v1071, 1
        %v1324 = vsel %vm1094, %v1321, %v1323
        %v1325 = vrot.slane %v1072, 1
        %v1326 = vsel %vm1094, %v1323, %v1325
        %v1327 = vrot.slane %v1073, 1
        %v1328 = vsel %vm1094, %v1325, %v1327
        %v1329 = vrot.slane %v1074, 1
        %v1330 = vsel %vm1094, %v1327, %v1329
        %1331 = vrot.lane.b32.xlu0 %v1318, 56
        %v1332 = vpop.permute.xlu0 %1331
        %1333 = vrot.lane.b32.xlu0 %v1320, 56
        %v1334 = vpop.permute.xlu0 %1333
        %1335 = vrot.lane.b32.xlu0 %v1322, 56
        %v1336 = vpop.permute.xlu0 %1335
        %1337 = vrot.lane.b32.xlu0 %v1324, 56
        %v1338 = vpop.permute.xlu0 %1337
        %1339 = vrot.lane.b32.xlu0 %v1326, 56
        %v1340 = vpop.permute.xlu0 %1339
        %1341 = vrot.lane.b32.xlu0 %v1328, 56
        %v1342 = vpop.permute.xlu0 %1341
        %1343 = vrot.lane.b32.xlu0 %v1330, 56
        %v1344 = vpop.permute.xlu0 %1343
        %1345 = vrot.lane.b32.xlu0 %v1329, 56
        %v1346 = vpop.permute.xlu0 %1345
        %v1355 = vrot.slane %v1067, 2
        %v1356 = vrot.slane %v1068, 2
        %v1357 = vsel %vm1134, %v1355, %v1356
        %v1358 = vrot.slane %v1069, 2
        %v1359 = vsel %vm1134, %v1356, %v1358
        %v1360 = vrot.slane %v1070, 2
        %v1361 = vsel %vm1134, %v1358, %v1360
        %v1362 = vrot.slane %v1071, 2
        %v1363 = vsel %vm1134, %v1360, %v1362
        %v1364 = vrot.slane %v1072, 2
        %v1365 = vsel %vm1134, %v1362, %v1364
        %v1366 = vrot.slane %v1073, 2
        %v1367 = vsel %vm1134, %v1364, %v1366
        %v1368 = vrot.slane %v1074, 2
        %v1369 = vsel %vm1134, %v1366, %v1368
        %1370 = vrot.lane.b32.xlu0 %v1357, 64
        %v1371 = vpop.permute.xlu0 %1370
        %1372 = vrot.lane.b32.xlu0 %v1359, 64
        %v1373 = vpop.permute.xlu0 %1372
        %1374 = vrot.lane.b32.xlu0 %v1361, 64
        %v1375 = vpop.permute.xlu0 %1374
        %1376 = vrot.lane.b32.xlu0 %v1363, 64
        %v1377 = vpop.permute.xlu0 %1376
        %1378 = vrot.lane.b32.xlu0 %v1365, 64
        %v1379 = vpop.permute.xlu0 %1378
        %1380 = vrot.lane.b32.xlu0 %v1367, 64
        %v1381 = vpop.permute.xlu0 %1380
        %1382 = vrot.lane.b32.xlu0 %v1369, 64
        %v1383 = vpop.permute.xlu0 %1382
        %1384 = vrot.lane.b32.xlu0 %v1368, 64
        %v1385 = vpop.permute.xlu0 %1384
        %vm1394 = vcmask 64512
        %v1395 = vsel %vm1394, %v1045, %v1111
        %v1396 = vsel %vm1394, %v1046, %v1113
        %v1397 = vsel %vm1394, %v1047, %v1115
        %v1398 = vsel %vm1394, %v1048, %v1117
        %v1399 = vsel %vm1394, %v1049, %v1119
        %v1400 = vsel %vm1394, %v1050, %v1121
        %v1401 = vsel %vm1394, %v1051, %v1123
        %v1402 = vsel %vm1394, %v1052, %v1125
        %vm1403 = vcmask 130048
        %v1404 = vsel %vm1403, %v1395, %v1151
        %v1405 = vsel %vm1403, %v1396, %v1153
        %v1406 = vsel %vm1403, %v1397, %v1155
        %v1407 = vsel %vm1403, %v1398, %v1157
        %v1408 = vsel %vm1403, %v1399, %v1159
        %v1409 = vsel %vm1403, %v1400, %v1161
        %v1410 = vsel %vm1403, %v1401, %v1163
        %v1411 = vsel %vm1403, %v1402, %v1165
        %vm1412 = vcmask 195584
        %v1413 = vsel %vm1412, %v1404, %v1183
        %v1414 = vsel %vm1412, %v1405, %v1185
        %v1415 = vsel %vm1412, %v1406, %v1187
        %v1416 = vsel %vm1412, %v1407, %v1189
        %v1417 = vsel %vm1412, %v1408, %v1191
        %v1418 = vsel %vm1412, %v1409, %v1193
        %v1419 = vsel %vm1412, %v1410, %v1195
        %v1420 = vsel %vm1412, %v1411, %v1197
        %vm1421 = vcmask 261120
        %v1422 = vsel %vm1421, %v1413, %v1222
        %v1423 = vsel %vm1421, %v1414, %v1224
        %v1424 = vsel %vm1421, %v1415, %v1226
        %v1425 = vsel %vm1421, %v1416, %v1228
        %v1426 = vsel %vm1421, %v1417, %v1230
        %v1427 = vsel %vm1421, %v1418, %v1232
        %v1428 = vsel %vm1421, %v1419, %v1234
        %v1429 = vsel %vm1421, %v1420, %v1236
        %vm1430 = vcmask 326656
        %v1431 = vsel %vm1430, %v1422, %v1261
        %v1432 = vsel %vm1430, %v1423, %v1263
        %v1433 = vsel %vm1430, %v1424, %v1265
        %v1434 = vsel %vm1430, %v1425, %v1267
        %v1435 = vsel %vm1430, %v1426, %v1269
        %v1436 = vsel %vm1430, %v1427, %v1271
        %v1437 = vsel %vm1430, %v1428, %v1273
        %v1438 = vsel %vm1430, %v1429, %v1275
        %vm1439 = vcmask 392192
        %v1440 = vsel %vm1439, %v1431, %v1293
        %v1441 = vsel %vm1439, %v1432, %v1295
        %v1442 = vsel %vm1439, %v1433, %v1297
        %v1443 = vsel %vm1439, %v1434, %v1299
        %v1444 = vsel %vm1439, %v1435, %v1301
        %v1445 = vsel %vm1439, %v1436, %v1303
        %v1446 = vsel %vm1439, %v1437, %v1305
        %v1447 = vsel %vm1439, %v1438, %v1307
        %vm1448 = vcmask 457728
        %v1449 = vsel %vm1448, %v1440, %v1332
        %v1450 = vsel %vm1448, %v1441, %v1334
        %v1451 = vsel %vm1448, %v1442, %v1336
        %v1452 = vsel %vm1448, %v1443, %v1338
        %v1453 = vsel %vm1448, %v1444, %v1340
        %v1454 = vsel %vm1448, %v1445, %v1342
        %v1455 = vsel %vm1448, %v1446, %v1344
        %v1456 = vsel %vm1448, %v1447, %v1346
        %vm1457 = vcmask 523264
        %v1458 = vsel %vm1457, %v1449, %v1371
        %v1459 = vsel %vm1457, %v1450, %v1373
        %v1460 = vsel %vm1457, %v1451, %v1375
        %v1461 = vsel %vm1457, %v1452, %v1377
        %v1462 = vsel %vm1457, %v1453, %v1379
        %v1463 = vsel %vm1457, %v1454, %v1381
        %v1464 = vsel %vm1457, %v1455, %v1383
        %v1465 = vsel %vm1457, %v1456, %v1385
        %v1467 = vlaneseq
        %v1468 = vshrl.u32 %v1467, 7
        %v1469 = vsub.s32 0, %v1468
        %v1470 = vrot.slane %v399, %v1469
        %vm1472 = vcmask 588800
        %v1474 = vsel %vm1472, %v1458, 0
        %v1477 = vsel %vm1472, %v1459, 0
        %v1480 = vsel %vm1472, %v1460, 0
        %v1483 = vsel %vm1472, %v1461, 0
        %v1486 = vsel %vm1472, %v1462, 0
        %v1489 = vsel %vm1472, %v1463, 0
        %v1492 = vsel %vm1472, %v1464, 0
        %v1495 = vsel %vm1472, %v1465, 0
        %1497 = vmatprep.subr.mxu0 0.0
        %1498 = vmatpush1.msra.mxu0 %v390
        %1499 = vmatprep.subr.mxu0 0.0
        %1500 = vmatpush1.msra.mxu0 %v391
        %1501 = vmatprep.subr.mxu0 0.0
        %1502 = vmatpush1.msra.mxu0 %v392
        %1503 = vmatprep.subr.mxu0 0.0
        %1504 = vmatpush1.msra.mxu0 %v393
        %1505 = vmatprep.subr.mxu0 0.0
        %1506 = vmatpush1.msra.mxu0 %v394
        %1507 = vmatprep.subr.mxu0 0.0
        %1508 = vmatpush1.msra.mxu0 %v395
        %1509 = vmatprep.subr.mxu0 0.0
        %1510 = vmatpush1.msra.mxu0 %v396
        %1511 = vmatprep.subr.mxu0 0.0
        %1512 = vmatpush1.msra.mxu0 %v397
        %1513 = vmatprep.subr.mxu0 0.0
        %1514 = vmatpush1.msra.mxu0 %v398
        %1515 = vmatprep.subr.mxu0 0.0
        %1516 = vmatpush1.msra.mxu0 0.0
        %1517 = vmatprep.subr.mxu0 0.0
        %1518 = vmatpush1.msra.mxu0 0.0
        %1519 = vmatprep.subr.mxu0 0.0
        %1520 = vmatpush1.msra.mxu0 0.0
        %1521 = vmatprep.subr.mxu0 0.0
        %1522 = vmatpush1.msra.mxu0 0.0
        %1523 = vmatprep.subr.mxu0 0.0
        %1524 = vmatpush1.msra.mxu0 0.0
        %1525 = vmatprep.subr.mxu0 0.0
        %1526 = vmatpush1.msra.mxu0 0.0
        %1527 = vmatprep.subr.mxu0 0.0
        %1528 = vmatpush1.msra.mxu0 0.0
        %1529 = vmatprep.subr.mxu0 0.0
        %1530 = vmatpush1.msra.mxu0 0.0
        %1531 = vmatprep.subr.mxu0 0.0
        %1532 = vmatpush1.msra.mxu0 0.0
        %1533 = vmatprep.subr.mxu0 0.0
        %1534 = vmatpush1.msra.mxu0 0.0
        %1535 = vmatprep.subr.mxu0 0.0
        %1536 = vmatpush1.msra.mxu0 0.0
        %1537 = vmatprep.subr.mxu0 0.0
        %1538 = vmatpush1.msra.mxu0 0.0
        %1539 = vmatprep.subr.mxu0 0.0
        %1540 = vmatpush1.msra.mxu0 0.0
        %1541 = vmatprep.subr.mxu0 0.0
        %1542 = vmatpush1.msra.mxu0 0.0
        %1543 = vmatprep.subr.mxu0 0.0
        %1544 = vmatpush1.msra.mxu0 0.0
        %1545 = vmatprep.subr.mxu0 0.0
        %1546 = vmatpush1.msra.mxu0 0.0
        %1547 = vmatprep.subr.mxu0 0.0
        %1548 = vmatpush1.msra.mxu0 0.0
        %1549 = vmatprep.subr.mxu0 0.0
        %1550 = vmatpush1.msra.mxu0 0.0
        %1551 = vmatprep.subr.mxu0 0.0
        %1552 = vmatpush1.msra.mxu0 0.0
        %1553 = vmatprep.subr.mxu0 0.0
        %1554 = vmatpush1.msra.mxu0 0.0
        %1555 = vmatprep.subr.mxu0 0.0
        %1556 = vmatpush1.msra.mxu0 0.0
        %1557 = vmatprep.subr.mxu0 0.0
        %1558 = vmatpush1.msra.mxu0 0.0
        %1559 = vmatprep.subr.mxu0 0.0
        %1560 = vmatpush1.msra.mxu0 0.0
        %1561 = vmatprep.mubr.f32.mxu0 0.0
        %1562 = vmatmul.mubr.f32.gmra.mrb[0].mxu0 %v1474
        %v1563 = vpop.f32.mrb[0].mxu0
        %v1564 = vadd.f32 %v1470, %v1563
        %v1565 = vpop.f32.mrb[0].mxu0
        %1566 = vmatprep.mubr.f32.mxu0 0.0
        %1567 = vmatmul.mubr.f32.gmra.mrb[0].mxu0 %v1477
        %v1568 = vpop.f32.mrb[0].mxu0
        %v1569 = vadd.f32 %v1470, %v1568
        %v1570 = vpop.f32.mrb[0].mxu0
        %1571 = vmatprep.mubr.f32.mxu0 0.0
        %1572 = vmatmul.mubr.f32.gmra.mrb[0].mxu0 %v1480
        %v1573 = vpop.f32.mrb[0].mxu0
        %v1574 = vadd.f32 %v1470, %v1573
        %v1575 = vpop.f32.mrb[0].mxu0
        %1576 = vmatprep.mubr.f32.mxu0 0.0
        %1577 = vmatmul.mubr.f32.gmra.mrb[0].mxu0 %v1483
        %v1578 = vpop.f32.mrb[0].mxu0
        %v1579 = vadd.f32 %v1470, %v1578
        %v1580 = vpop.f32.mrb[0].mxu0
        %1581 = vmatprep.mubr.f32.mxu0 0.0
        %1582 = vmatmul.mubr.f32.gmra.mrb[0].mxu0 %v1486
        %v1583 = vpop.f32.mrb[0].mxu0
        %v1584 = vadd.f32 %v1470, %v1583
        %v1585 = vpop.f32.mrb[0].mxu0
        %1586 = vmatprep.mubr.f32.mxu0 0.0
        %1587 = vmatmul.mubr.f32.gmra.mrb[0].mxu0 %v1489
        %v1588 = vpop.f32.mrb[0].mxu0
        %v1589 = vadd.f32 %v1470, %v1588
        %v1590 = vpop.f32.mrb[0].mxu0
        %1591 = vmatprep.mubr.f32.mxu0 0.0
        %1592 = vmatmul.mubr.f32.gmra.mrb[0].mxu0 %v1492
        %v1593 = vpop.f32.mrb[0].mxu0
        %v1594 = vadd.f32 %v1470, %v1593
        %v1595 = vpop.f32.mrb[0].mxu0
        %1596 = vmatprep.mubr.f32.mxu0 0.0
        %1597 = vmatmul.mubr.f32.gmra.mrb[0].mxu0 %v1495
        %v1598 = vpop.f32.mrb[0].mxu0
        %v1599 = vadd.f32 %v1470, %v1598
        %v1600 = vpop.f32.mrb[0].mxu0
        %1601 = vdwg.mxu0
        %v1602 = vmax.f32 %v1564, 0.0
        %v1603 = vmax.f32 %v1569, 0.0
        %v1604 = vmax.f32 %v1574, 0.0
        %v1605 = vmax.f32 %v1579, 0.0
        %v1606 = vmax.f32 %v1584, 0.0
        %v1607 = vmax.f32 %v1589, 0.0
        %v1608 = vmax.f32 %v1594, 0.0
        %v1609 = vmax.f32 %v1599, 0.0
        %1610 = vrot.lane.b32.xlu0 %v1208, 8
        %v1611 = vpop.permute.xlu0 %1610
        %1612 = vrot.lane.b32.xlu0 %v1210, 8
        %v1613 = vpop.permute.xlu0 %1612
        %1614 = vrot.lane.b32.xlu0 %v1212, 8
        %v1615 = vpop.permute.xlu0 %1614
        %1616 = vrot.lane.b32.xlu0 %v1214, 8
        %v1617 = vpop.permute.xlu0 %1616
        %1618 = vrot.lane.b32.xlu0 %v1216, 8
        %v1619 = vpop.permute.xlu0 %1618
        %1620 = vrot.lane.b32.xlu0 %v1218, 8
        %v1621 = vpop.permute.xlu0 %1620
        %1622 = vrot.lane.b32.xlu0 %v1220, 8
        %v1623 = vpop.permute.xlu0 %1622
        %1624 = vrot.lane.b32.xlu0 %v1219, 8
        %v1625 = vpop.permute.xlu0 %1624
        %1634 = vrot.lane.b32.xlu0 %v1247, 16
        %v1635 = vpop.permute.xlu0 %1634
        %1636 = vrot.lane.b32.xlu0 %v1249, 16
        %v1637 = vpop.permute.xlu0 %1636
        %1638 = vrot.lane.b32.xlu0 %v1251, 16
        %v1639 = vpop.permute.xlu0 %1638
        %1640 = vrot.lane.b32.xlu0 %v1253, 16
        %v1641 = vpop.permute.xlu0 %1640
        %1642 = vrot.lane.b32.xlu0 %v1255, 16
        %v1643 = vpop.permute.xlu0 %1642
        %1644 = vrot.lane.b32.xlu0 %v1257, 16
        %v1645 = vpop.permute.xlu0 %1644
        %1646 = vrot.lane.b32.xlu0 %v1259, 16
        %v1647 = vpop.permute.xlu0 %1646
        %1648 = vrot.lane.b32.xlu0 %v1258, 16
        %v1649 = vpop.permute.xlu0 %1648
        %1658 = vrot.lane.b32.xlu0 %v1067, 24
        %v1659 = vpop.permute.xlu0 %1658
        %1660 = vrot.lane.b32.xlu0 %v1068, 24
        %v1661 = vpop.permute.xlu0 %1660
        %1662 = vrot.lane.b32.xlu0 %v1069, 24
        %v1663 = vpop.permute.xlu0 %1662
        %1664 = vrot.lane.b32.xlu0 %v1070, 24
        %v1665 = vpop.permute.xlu0 %1664
        %1666 = vrot.lane.b32.xlu0 %v1071, 24
        %v1667 = vpop.permute.xlu0 %1666
        %1668 = vrot.lane.b32.xlu0 %v1072, 24
        %v1669 = vpop.permute.xlu0 %1668
        %1670 = vrot.lane.b32.xlu0 %v1073, 24
        %v1671 = vpop.permute.xlu0 %1670
        %1672 = vrot.lane.b32.xlu0 %v1074, 24
        %v1673 = vpop.permute.xlu0 %1672
        %1682 = vrot.lane.b32.xlu0 %v1318, 32
        %v1683 = vpop.permute.xlu0 %1682
        %1684 = vrot.lane.b32.xlu0 %v1320, 32
        %v1685 = vpop.permute.xlu0 %1684
        %1686 = vrot.lane.b32.xlu0 %v1322, 32
        %v1687 = vpop.permute.xlu0 %1686
        %1688 = vrot.lane.b32.xlu0 %v1324, 32
        %v1689 = vpop.permute.xlu0 %1688
        %1690 = vrot.lane.b32.xlu0 %v1326, 32
        %v1691 = vpop.permute.xlu0 %1690
        %1692 = vrot.lane.b32.xlu0 %v1328, 32
        %v1693 = vpop.permute.xlu0 %1692
        %1694 = vrot.lane.b32.xlu0 %v1330, 32
        %v1695 = vpop.permute.xlu0 %1694
        %1696 = vrot.lane.b32.xlu0 %v1329, 32
        %v1697 = vpop.permute.xlu0 %1696
        %1706 = vrot.lane.b32.xlu0 %v1357, 40
        %v1707 = vpop.permute.xlu0 %1706
        %1708 = vrot.lane.b32.xlu0 %v1359, 40
        %v1709 = vpop.permute.xlu0 %1708
        %1710 = vrot.lane.b32.xlu0 %v1361, 40
        %v1711 = vpop.permute.xlu0 %1710
        %1712 = vrot.lane.b32.xlu0 %v1363, 40
        %v1713 = vpop.permute.xlu0 %1712
        %1714 = vrot.lane.b32.xlu0 %v1365, 40
        %v1715 = vpop.permute.xlu0 %1714
        %1716 = vrot.lane.b32.xlu0 %v1367, 40
        %v1717 = vpop.permute.xlu0 %1716
        %1718 = vrot.lane.b32.xlu0 %v1369, 40
        %v1719 = vpop.permute.xlu0 %1718
        %1720 = vrot.lane.b32.xlu0 %v1368, 40
        %v1721 = vpop.permute.xlu0 %1720
        %1738 = vrot.lane.b32.xlu0 %v1078, 48
        %v1739 = vpop.permute.xlu0 %1738
        %1740 = vrot.lane.b32.xlu0 %v1079, 48
        %v1741 = vpop.permute.xlu0 %1740
        %1742 = vrot.lane.b32.xlu0 %v1080, 48
        %v1743 = vpop.permute.xlu0 %1742
        %1744 = vrot.lane.b32.xlu0 %v1081, 48
        %v1745 = vpop.permute.xlu0 %1744
        %1746 = vrot.lane.b32.xlu0 %v1082, 48
        %v1747 = vpop.permute.xlu0 %1746
        %1748 = vrot.lane.b32.xlu0 %v1083, 48
        %v1749 = vpop.permute.xlu0 %1748
        %1750 = vrot.lane.b32.xlu0 %v1084, 48
        %v1751 = vpop.permute.xlu0 %1750
        %1752 = vrot.lane.b32.xlu0 %v1085, 48
        %v1753 = vpop.permute.xlu0 %1752
        %v1762 = vrot.slane %v1078, 1
        %v1763 = vrot.slane %v1079, 1
        %v1764 = vsel %vm1094, %v1762, %v1763
        %v1765 = vrot.slane %v1080, 1
        %v1766 = vsel %vm1094, %v1763, %v1765
        %v1767 = vrot.slane %v1081, 1
        %v1768 = vsel %vm1094, %v1765, %v1767
        %v1769 = vrot.slane %v1082, 1
        %v1770 = vsel %vm1094, %v1767, %v1769
        %v1771 = vrot.slane %v1083, 1
        %v1772 = vsel %vm1094, %v1769, %v1771
        %v1773 = vrot.slane %v1084, 1
        %v1774 = vsel %vm1094, %v1771, %v1773
        %v1775 = vrot.slane %v1085, 1
        %v1776 = vsel %vm1094, %v1773, %v1775
        %1777 = vrot.lane.b32.xlu0 %v1764, 56
        %v1778 = vpop.permute.xlu0 %1777
        %1779 = vrot.lane.b32.xlu0 %v1766, 56
        %v1780 = vpop.permute.xlu0 %1779
        %1781 = vrot.lane.b32.xlu0 %v1768, 56
        %v1782 = vpop.permute.xlu0 %1781
        %1783 = vrot.lane.b32.xlu0 %v1770, 56
        %v1784 = vpop.permute.xlu0 %1783
        %1785 = vrot.lane.b32.xlu0 %v1772, 56
        %v1786 = vpop.permute.xlu0 %1785
        %1787 = vrot.lane.b32.xlu0 %v1774, 56
        %v1788 = vpop.permute.xlu0 %1787
        %1789 = vrot.lane.b32.xlu0 %v1776, 56
        %v1790 = vpop.permute.xlu0 %1789
        %1791 = vrot.lane.b32.xlu0 %v1775, 56
        %v1792 = vpop.permute.xlu0 %1791
        %v1801 = vrot.slane %v1078, 2
        %v1802 = vrot.slane %v1079, 2
        %v1803 = vsel %vm1134, %v1801, %v1802
        %v1804 = vrot.slane %v1080, 2
        %v1805 = vsel %vm1134, %v1802, %v1804
        %v1806 = vrot.slane %v1081, 2
        %v1807 = vsel %vm1134, %v1804, %v1806
        %v1808 = vrot.slane %v1082, 2
        %v1809 = vsel %vm1134, %v1806, %v1808
        %v1810 = vrot.slane %v1083, 2
        %v1811 = vsel %vm1134, %v1808, %v1810
        %v1812 = vrot.slane %v1084, 2
        %v1813 = vsel %vm1134, %v1810, %v1812
        %v1814 = vrot.slane %v1085, 2
        %v1815 = vsel %vm1134, %v1812, %v1814
        %1816 = vrot.lane.b32.xlu0 %v1803, 64
        %v1817 = vpop.permute.xlu0 %1816
        %1818 = vrot.lane.b32.xlu0 %v1805, 64
        %v1819 = vpop.permute.xlu0 %1818
        %1820 = vrot.lane.b32.xlu0 %v1807, 64
        %v1821 = vpop.permute.xlu0 %1820
        %1822 = vrot.lane.b32.xlu0 %v1809, 64
        %v1823 = vpop.permute.xlu0 %1822
        %1824 = vrot.lane.b32.xlu0 %v1811, 64
        %v1825 = vpop.permute.xlu0 %1824
        %1826 = vrot.lane.b32.xlu0 %v1813, 64
        %v1827 = vpop.permute.xlu0 %1826
        %1828 = vrot.lane.b32.xlu0 %v1815, 64
        %v1829 = vpop.permute.xlu0 %1828
        %1830 = vrot.lane.b32.xlu0 %v1814, 64
        %v1831 = vpop.permute.xlu0 %1830
        %v1840 = vsel %vm1394, %v1056, %v1611
        %v1841 = vsel %vm1394, %v1057, %v1613
        %v1842 = vsel %vm1394, %v1058, %v1615
        %v1843 = vsel %vm1394, %v1059, %v1617
        %v1844 = vsel %vm1394, %v1060, %v1619
        %v1845 = vsel %vm1394, %v1061, %v1621
        %v1846 = vsel %vm1394, %v1062, %v1623
        %v1847 = vsel %vm1394, %v1063, %v1625
        %v1848 = vsel %vm1403, %v1840, %v1635
        %v1849 = vsel %vm1403, %v1841, %v1637
        %v1850 = vsel %vm1403, %v1842, %v1639
        %v1851 = vsel %vm1403, %v1843, %v1641
        %v1852 = vsel %vm1403, %v1844, %v1643
        %v1853 = vsel %vm1403, %v1845, %v1645
        %v1854 = vsel %vm1403, %v1846, %v1647
        %v1855 = vsel %vm1403, %v1847, %v1649
        %v1856 = vsel %vm1412, %v1848, %v1659
        %v1857 = vsel %vm1412, %v1849, %v1661
        %v1858 = vsel %vm1412, %v1850, %v1663
        %v1859 = vsel %vm1412, %v1851, %v1665
        %v1860 = vsel %vm1412, %v1852, %v1667
        %v1861 = vsel %vm1412, %v1853, %v1669
        %v1862 = vsel %vm1412, %v1854, %v1671
        %v1863 = vsel %vm1412, %v1855, %v1673
        %v1864 = vsel %vm1421, %v1856, %v1683
        %v1865 = vsel %vm1421, %v1857, %v1685
        %v1866 = vsel %vm1421, %v1858, %v1687
        %v1867 = vsel %vm1421, %v1859, %v1689
        %v1868 = vsel %vm1421, %v1860, %v1691
        %v1869 = vsel %vm1421, %v1861, %v1693
        %v1870 = vsel %vm1421, %v1862, %v1695
        %v1871 = vsel %vm1421, %v1863, %v1697
        %v1872 = vsel %vm1430, %v1864, %v1707
        %v1873 = vsel %vm1430, %v1865, %v1709
        %v1874 = vsel %vm1430, %v1866, %v1711
        %v1875 = vsel %vm1430, %v1867, %v1713
        %v1876 = vsel %vm1430, %v1868, %v1715
        %v1877 = vsel %vm1430, %v1869, %v1717
        %v1878 = vsel %vm1430, %v1870, %v1719
        %v1879 = vsel %vm1430, %v1871, %v1721
        %v1880 = vsel %vm1439, %v1872, %v1739
        %v1881 = vsel %vm1439, %v1873, %v1741
        %v1882 = vsel %vm1439, %v1874, %v1743
        %v1883 = vsel %vm1439, %v1875, %v1745
        %v1884 = vsel %vm1439, %v1876, %v1747
        %v1885 = vsel %vm1439, %v1877, %v1749
        %v1886 = vsel %vm1439, %v1878, %v1751
        %v1887 = vsel %vm1439, %v1879, %v1753
        %v1888 = vsel %vm1448, %v1880, %v1778
        %v1889 = vsel %vm1448, %v1881, %v1780
        %v1890 = vsel %vm1448, %v1882, %v1782
        %v1891 = vsel %vm1448, %v1883, %v1784
        %v1892 = vsel %vm1448, %v1884, %v1786
        %v1893 = vsel %vm1448, %v1885, %v1788
        %v1894 = vsel %vm1448, %v1886, %v1790
        %v1895 = vsel %vm1448, %v1887, %v1792
        %v1896 = vsel %vm1457, %v1888, %v1817
        %v1897 = vsel %vm1457, %v1889, %v1819
        %v1898 = vsel %vm1457, %v1890, %v1821
        %v1899 = vsel %vm1457, %v1891, %v1823
        %v1900 = vsel %vm1457, %v1892, %v1825
        %v1901 = vsel %vm1457, %v1893, %v1827
        %v1902 = vsel %vm1457, %v1894, %v1829
        %v1903 = vsel %vm1457, %v1895, %v1831
        %v1905 = vsel %vm1472, %v1896, 0
        %v1908 = vsel %vm1472, %v1897, 0
        %v1911 = vsel %vm1472, %v1898, 0
        %v1914 = vsel %vm1472, %v1899, 0
        %v1917 = vsel %vm1472, %v1900, 0
        %v1920 = vsel %vm1472, %v1901, 0
        %v1923 = vsel %vm1472, %v1902, 0
        %v1926 = vsel %vm1472, %v1903, 0
        %1928 = vmatprep.subr.mxu0 0.0
        %1929 = vmatpush1.msra.mxu0 %v390
        %1930 = vmatprep.subr.mxu0 0.0
        %1931 = vmatpush1.msra.mxu0 %v391
        %1932 = vmatprep.subr.mxu0 0.0
        %1933 = vmatpush1.msra.mxu0 %v392
        %1934 = vmatprep.subr.mxu0 0.0
        %1935 = vmatpush1.msra.mxu0 %v393
        %1936 = vmatprep.subr.mxu0 0.0
        %1937 = vmatpush1.msra.mxu0 %v394
        %1938 = vmatprep.subr.mxu0 0.0
        %1939 = vmatpush1.msra.mxu0 %v395
        %1940 = vmatprep.subr.mxu0 0.0
        %1941 = vmatpush1.msra.mxu0 %v396
        %1942 = vmatprep.subr.mxu0 0.0
        %1943 = vmatpush1.msra.mxu0 %v397
        %1944 = vmatprep.subr.mxu0 0.0
        %1945 = vmatpush1.msra.mxu0 %v398
        %1946 = vmatprep.subr.mxu0 0.0
        %1947 = vmatpush1.msra.mxu0 0.0
        %1948 = vmatprep.subr.mxu0 0.0
        %1949 = vmatpush1.msra.mxu0 0.0
        %1950 = vmatprep.subr.mxu0 0.0
        %1951 = vmatpush1.msra.mxu0 0.0
        %1952 = vmatprep.subr.mxu0 0.0
        %1953 = vmatpush1.msra.mxu0 0.0
        %1954 = vmatprep.subr.mxu0 0.0
        %1955 = vmatpush1.msra.mxu0 0.0
        %1956 = vmatprep.subr.mxu0 0.0
        %1957 = vmatpush1.msra.mxu0 0.0
        %1958 = vmatprep.subr.mxu0 0.0
        %1959 = vmatpush1.msra.mxu0 0.0
        %1960 = vmatprep.subr.mxu0 0.0
        %1961 = vmatpush1.msra.mxu0 0.0
        %1962 = vmatprep.subr.mxu0 0.0
        %1963 = vmatpush1.msra.mxu0 0.0
        %1964 = vmatprep.subr.mxu0 0.0
        %1965 = vmatpush1.msra.mxu0 0.0
        %1966 = vmatprep.subr.mxu0 0.0
        %1967 = vmatpush1.msra.mxu0 0.0
        %1968 = vmatprep.subr.mxu0 0.0
        %1969 = vmatpush1.msra.mxu0 0.0
        %1970 = vmatprep.subr.mxu0 0.0
        %1971 = vmatpush1.msra.mxu0 0.0
        %1972 = vmatprep.subr.mxu0 0.0
        %1973 = vmatpush1.msra.mxu0 0.0
        %1974 = vmatprep.subr.mxu0 0.0
        %1975 = vmatpush1.msra.mxu0 0.0
        %1976 = vmatprep.subr.mxu0 0.0
        %1977 = vmatpush1.msra.mxu0 0.0
        %1978 = vmatprep.subr.mxu0 0.0
        %1979 = vmatpush1.msra.mxu0 0.0
        %1980 = vmatprep.subr.mxu0 0.0
        %1981 = vmatpush1.msra.mxu0 0.0
        %1982 = vmatprep.subr.mxu0 0.0
        %1983 = vmatpush1.msra.mxu0 0.0
        %1984 = vmatprep.subr.mxu0 0.0
        %1985 = vmatpush1.msra.mxu0 0.0
        %1986 = vmatprep.subr.mxu0 0.0
        %1987 = vmatpush1.msra.mxu0 0.0
        %1988 = vmatprep.subr.mxu0 0.0
        %1989 = vmatpush1.msra.mxu0 0.0
        %1990 = vmatprep.subr.mxu0 0.0
        %1991 = vmatpush1.msra.mxu0 0.0
        %1992 = vmatprep.mubr.f32.mxu0 0.0
        %1993 = vmatmul.mubr.f32.gmra.mrb[0].mxu0 %v1905
        %v1994 = vpop.f32.mrb[0].mxu0
        %v1995 = vadd.f32 %v1470, %v1994
        %v1996 = vpop.f32.mrb[0].mxu0
        %1997 = vmatprep.mubr.f32.mxu0 0.0
        %1998 = vmatmul.mubr.f32.gmra.mrb[0].mxu0 %v1908
        %v1999 = vpop.f32.mrb[0].mxu0
        %v2000 = vadd.f32 %v1470, %v1999
        %v2001 = vpop.f32.mrb[0].mxu0
        %2002 = vmatprep.mubr.f32.mxu0 0.0
        %2003 = vmatmul.mubr.f32.gmra.mrb[0].mxu0 %v1911
        %v2004 = vpop.f32.mrb[0].mxu0
        %v2005 = vadd.f32 %v1470, %v2004
        %v2006 = vpop.f32.mrb[0].mxu0
        %2007 = vmatprep.mubr.f32.mxu0 0.0
        %2008 = vmatmul.mubr.f32.gmra.mrb[0].mxu0 %v1914
        %v2009 = vpop.f32.mrb[0].mxu0
        %v2010 = vadd.f32 %v1470, %v2009
        %v2011 = vpop.f32.mrb[0].mxu0
        %2012 = vmatprep.mubr.f32.mxu0 0.0
        %2013 = vmatmul.mubr.f32.gmra.mrb[0].mxu0 %v1917
        %v2014 = vpop.f32.mrb[0].mxu0
        %v2015 = vadd.f32 %v1470, %v2014
        %v2016 = vpop.f32.mrb[0].mxu0
        %2017 = vmatprep.mubr.f32.mxu0 0.0
        %2018 = vmatmul.mubr.f32.gmra.mrb[0].mxu0 %v1920
        %v2019 = vpop.f32.mrb[0].mxu0
        %v2020 = vadd.f32 %v1470, %v2019
        %v2021 = vpop.f32.mrb[0].mxu0
        %2022 = vmatprep.mubr.f32.mxu0 0.0
        %2023 = vmatmul.mubr.f32.gmra.mrb[0].mxu0 %v1923
        %v2024 = vpop.f32.mrb[0].mxu0
        %v2025 = vadd.f32 %v1470, %v2024
        %v2026 = vpop.f32.mrb[0].mxu0
        %2027 = vmatprep.mubr.f32.mxu0 0.0
        %2028 = vmatmul.mubr.f32.gmra.mrb[0].mxu0 %v1926
        %v2029 = vpop.f32.mrb[0].mxu0
        %v2030 = vadd.f32 %v1470, %v2029
        %v2031 = vpop.f32.mrb[0].mxu0
        %2032 = vdwg.mxu0
        %v2033 = vmax.f32 %v1995, 0.0
        %v2034 = vmax.f32 %v2000, 0.0
        %v2035 = vmax.f32 %v2005, 0.0
        %v2036 = vmax.f32 %v2010, 0.0
        %v2037 = vmax.f32 %v2015, 0.0
        %v2038 = vmax.f32 %v2020, 0.0
        %v2039 = vmax.f32 %v2025, 0.0
        %v2040 = vmax.f32 %v2030, 0.0
        %v2041 = vmax.f32 %v1602, %v2033
        %v2042 = vmax.f32 %v1603, %v2034
        %v2043 = vmax.f32 %v1604, %v2035
        %v2044 = vmax.f32 %v1605, %v2036
        %v2045 = vmax.f32 %v1606, %v2037
        %v2046 = vmax.f32 %v1607, %v2038
        %v2047 = vmax.f32 %v1608, %v2039
        %v2048 = vmax.f32 %v1609, %v2040
        %vm2049 = vcmask 490496
        %v2051 = vsel %vm2049, %v439, 0
        %v2054 = vsel %vm2049, %v440, 0
        %v2057 = vsel %vm2049, %v441, 0
        %v2060 = vsel %vm2049, %v442, 0
        %vm2062 = vcmask 1043456
        %v2064 = vsel %vm2062, %v2048, 0
        %2066 = vmatprep.subr.mxu0 0.0
        %2067 = vmatpush1.msra.mxu0 %v2041
        %2068 = vmatprep.subr.mxu0 0.0
        %2069 = vmatpush1.msra.mxu0 %v2042
        %2070 = vmatprep.subr.mxu0 0.0
        %2071 = vmatpush1.msra.mxu0 %v2043
        %2072 = vmatprep.subr.mxu0 0.0
        %2073 = vmatpush1.msra.mxu0 %v2044
        %2074 = vmatprep.subr.mxu0 0.0
        %2075 = vmatpush1.msra.mxu0 %v2045
        %2076 = vmatprep.subr.mxu0 0.0
        %2077 = vmatpush1.msra.mxu0 %v2046
        %2078 = vmatprep.subr.mxu0 0.0
        %2079 = vmatpush1.msra.mxu0 %v2047
        %2080 = vmatprep.subr.mxu0 0.0
        %2081 = vmatpush1.msra.mxu0 %v2064
        %2082 = vmatprep.subr.mxu0 0.0
        %2083 = vmatpush1.msra.mxu0 0.0
        %2084 = vmatprep.subr.mxu0 0.0
        %2085 = vmatpush1.msra.mxu0 0.0
        %2086 = vmatprep.subr.mxu0 0.0
        %2087 = vmatpush1.msra.mxu0 0.0
        %2088 = vmatprep.subr.mxu0 0.0
        %2089 = vmatpush1.msra.mxu0 0.0
        %2090 = vmatprep.subr.mxu0 0.0
        %2091 = vmatpush1.msra.mxu0 0.0
        %2092 = vmatprep.subr.mxu0 0.0
        %2093 = vmatpush1.msra.mxu0 0.0
        %2094 = vmatprep.subr.mxu0 0.0
        %2095 = vmatpush1.msra.mxu0 0.0
        %2096 = vmatprep.subr.mxu0 0.0
        %2097 = vmatpush1.msra.mxu0 0.0
        %2098 = vmatprep.subr.mxu0 0.0
        %2099 = vmatpush1.msra.mxu0 0.0
        %2100 = vmatprep.subr.mxu0 0.0
        %2101 = vmatpush1.msra.mxu0 0.0
        %2102 = vmatprep.subr.mxu0 0.0
        %2103 = vmatpush1.msra.mxu0 0.0
        %2104 = vmatprep.subr.mxu0 0.0
        %2105 = vmatpush1.msra.mxu0 0.0
        %2106 = vmatprep.subr.mxu0 0.0
        %2107 = vmatpush1.msra.mxu0 0.0
        %2108 = vmatprep.subr.mxu0 0.0
        %2109 = vmatpush1.msra.mxu0 0.0
        %2110 = vmatprep.subr.mxu0 0.0
        %2111 = vmatpush1.msra.mxu0 0.0
        %2112 = vmatprep.subr.mxu0 0.0
        %2113 = vmatpush1.msra.mxu0 0.0
        %2114 = vmatprep.subr.mxu0 0.0
        %2115 = vmatpush1.msra.mxu0 0.0
        %2116 = vmatprep.subr.mxu0 0.0
        %2117 = vmatpush1.msra.mxu0 0.0
        %2118 = vmatprep.subr.mxu0 0.0
        %2119 = vmatpush1.msra.mxu0 0.0
        %2120 = vmatprep.subr.mxu0 0.0
        %2121 = vmatpush1.msra.mxu0 0.0
        %2122 = vmatprep.subr.mxu0 0.0
        %2123 = vmatpush1.msra.mxu0 0.0
        %2124 = vmatprep.subr.mxu0 0.0
        %2125 = vmatpush1.msra.mxu0 0.0
        %2126 = vmatprep.subr.mxu0 0.0
        %2127 = vmatpush1.msra.mxu0 0.0
        %2128 = vmatprep.subr.mxu0 0.0
        %2129 = vmatpush1.msra.mxu0 0.0
        %2130 = vmatprep.mubr.f32.mxu0 0.0
        %2131 = vmatmul.mubr.f32.gmra.mrb[0].mxu0 %v2051
        %v2132 = vpop.f32.mrb[0].mxu0
        %v2133 = vadd.f32 0.0, %v2132
        %v2134 = vpop.f32.mrb[0].mxu0
        %2135 = vmatprep.mubr.f32.mxu0 0.0
        %2136 = vmatmul.mubr.f32.gmra.mrb[0].mxu0 %v2054
        %v2137 = vpop.f32.mrb[0].mxu0
        %v2138 = vadd.f32 0.0, %v2137
        %v2139 = vpop.f32.mrb[0].mxu0
        %2140 = vmatprep.mubr.f32.mxu0 0.0
        %2141 = vmatmul.mubr.f32.gmra.mrb[0].mxu0 %v2057
        %v2142 = vpop.f32.mrb[0].mxu0
        %v2143 = vadd.f32 0.0, %v2142
        %v2144 = vpop.f32.mrb[0].mxu0
        %2145 = vmatprep.mubr.f32.mxu0 0.0
        %2146 = vmatmul.mubr.f32.gmra.mrb[0].mxu0 %v2060
        %v2147 = vpop.f32.mrb[0].mxu0
        %v2148 = vadd.f32 0.0, %v2147
        %v2149 = vpop.f32.mrb[0].mxu0
        %2150 = vdwg.mxu0
        %v2152 = vsel %vm2049, %v455, 0
        %v2155 = vsel %vm2049, %v456, 0
        %v2158 = vsel %vm2049, %v457, 0
        %v2161 = vsel %vm2049, %v458, 0
        %2163 = vmatprep.subr.mxu0 0.0
        %2164 = vmatpush1.msra.mxu0 %v2041
        %2165 = vmatprep.subr.mxu0 0.0
        %2166 = vmatpush1.msra.mxu0 %v2042
        %2167 = vmatprep.subr.mxu0 0.0
        %2168 = vmatpush1.msra.mxu0 %v2043
        %2169 = vmatprep.subr.mxu0 0.0
        %2170 = vmatpush1.msra.mxu0 %v2044
        %2171 = vmatprep.subr.mxu0 0.0
        %2172 = vmatpush1.msra.mxu0 %v2045
        %2173 = vmatprep.subr.mxu0 0.0
        %2174 = vmatpush1.msra.mxu0 %v2046
        %2175 = vmatprep.subr.mxu0 0.0
        %2176 = vmatpush1.msra.mxu0 %v2047
        %2177 = vmatprep.subr.mxu0 0.0
        %2178 = vmatpush1.msra.mxu0 %v2064
        %2179 = vmatprep.subr.mxu0 0.0
        %2180 = vmatpush1.msra.mxu0 0.0
        %2181 = vmatprep.subr.mxu0 0.0
        %2182 = vmatpush1.msra.mxu0 0.0
        %2183 = vmatprep.subr.mxu0 0.0
        %2184 = vmatpush1.msra.mxu0 0.0
        %2185 = vmatprep.subr.mxu0 0.0
        %2186 = vmatpush1.msra.mxu0 0.0
        %2187 = vmatprep.subr.mxu0 0.0
        %2188 = vmatpush1.msra.mxu0 0.0
        %2189 = vmatprep.subr.mxu0 0.0
        %2190 = vmatpush1.msra.mxu0 0.0
        %2191 = vmatprep.subr.mxu0 0.0
        %2192 = vmatpush1.msra.mxu0 0.0
        %2193 = vmatprep.subr.mxu0 0.0
        %2194 = vmatpush1.msra.mxu0 0.0
        %2195 = vmatprep.subr.mxu0 0.0
        %2196 = vmatpush1.msra.mxu0 0.0
        %2197 = vmatprep.subr.mxu0 0.0
        %2198 = vmatpush1.msra.mxu0 0.0
        %2199 = vmatprep.subr.mxu0 0.0
        %2200 = vmatpush1.msra.mxu0 0.0
        %2201 = vmatprep.subr.mxu0 0.0
        %2202 = vmatpush1.msra.mxu0 0.0
        %2203 = vmatprep.subr.mxu0 0.0
        %2204 = vmatpush1.msra.mxu0 0.0
        %2205 = vmatprep.subr.mxu0 0.0
        %2206 = vmatpush1.msra.mxu0 0.0
        %2207 = vmatprep.subr.mxu0 0.0
        %2208 = vmatpush1.msra.mxu0 0.0
        %2209 = vmatprep.subr.mxu0 0.0
        %2210 = vmatpush1.msra.mxu0 0.0
        %2211 = vmatprep.subr.mxu0 0.0
        %2212 = vmatpush1.msra.mxu0 0.0
        %2213 = vmatprep.subr.mxu0 0.0
        %2214 = vmatpush1.msra.mxu0 0.0
        %2215 = vmatprep.subr.mxu0 0.0
        %2216 = vmatpush1.msra.mxu0 0.0
        %2217 = vmatprep.subr.mxu0 0.0
        %2218 = vmatpush1.msra.mxu0 0.0
        %2219 = vmatprep.subr.mxu0 0.0
        %2220 = vmatpush1.msra.mxu0 0.0
        %2221 = vmatprep.subr.mxu0 0.0
        %2222 = vmatpush1.msra.mxu0 0.0
        %2223 = vmatprep.subr.mxu0 0.0
        %2224 = vmatpush1.msra.mxu0 0.0
        %2225 = vmatprep.subr.mxu0 0.0
        %2226 = vmatpush1.msra.mxu0 0.0
        %2227 = vmatprep.mubr.f32.mxu0 0.0
        %2228 = vmatmul.mubr.f32.gmra.mrb[0].mxu0 %v2152
        %v2229 = vpop.f32.mrb[0].mxu0
        %v2230 = vadd.f32 0.0, %v2229
        %v2231 = vpop.f32.mrb[0].mxu0
        %2232 = vmatprep.mubr.f32.mxu0 0.0
        %2233 = vmatmul.mubr.f32.gmra.mrb[0].mxu0 %v2155
        %v2234 = vpop.f32.mrb[0].mxu0
        %v2235 = vadd.f32 0.0, %v2234
        %v2236 = vpop.f32.mrb[0].mxu0
        %2237 = vmatprep.mubr.f32.mxu0 0.0
        %2238 = vmatmul.mubr.f32.gmra.mrb[0].mxu0 %v2158
        %v2239 = vpop.f32.mrb[0].mxu0
        %v2240 = vadd.f32 0.0, %v2239
        %v2241 = vpop.f32.mrb[0].mxu0
        %2242 = vmatprep.mubr.f32.mxu0 0.0
        %2243 = vmatmul.mubr.f32.gmra.mrb[0].mxu0 %v2161
        %v2244 = vpop.f32.mrb[0].mxu0
        %v2245 = vadd.f32 0.0, %v2244
        %v2246 = vpop.f32.mrb[0].mxu0
        %2247 = vdwg.mxu0
        %v2248 = vmax.f32 %v2133, %v2230
        %v2249 = vmax.f32 %v2138, %v2235
        %v2250 = vmax.f32 %v2143, %v2240
        %v2251 = vmax.f32 %v2148, %v2245
        %s2252 = smul.u32 %s1037, 32
        %s2253 = scalar_lea.vmem [#allocation3], %s2252
        %2254 = vst.msk [vmem:[%s2253] sm:$0xff] %vm1394, %v2248
        %2255 = vst.msk [vmem:[%s2253 + $0x8] sm:$0xff] %vm1394, %v2249
        %2256 = vst.msk [vmem:[%s2253 + $0x10] sm:$0xff] %vm1394, %v2250
        %vm2257 = vcmask 62464
        %2258 = vst.msk [vmem:[%s2253 + $0x18] sm:$0x3f] %vm2257, %v2251
      $region76: #{tinyvgg_forward.1} parent=63 // loop_footer
        %s1041 = sadd.s32 1, %s1037
      $region77: #{tinyvgg_forward.1} parent=63 // loop_footer_branch
        %1036 = sbr.rel target = $region73
      $region78: #{tinyvgg_forward.1} parent=63 // loop_exit
        _
      loop: start=0, step=1, limit=28
      $region79: #{tinyvgg_forward.1} parent=63 // loop_pre_header
        _
      $region80: #{tinyvgg_forward.1} parent=63 // loop_header
        %s2260 = sphi 0, %s2264
        %p2261 = scmp.ge.s32.totalorder %s2260, 28
      $region81: #{tinyvgg_forward.1} parent=63 // loop_header_branch
        %2263 = sbr.rel (%p2261) target = $region85
      $region82: #{tinyvgg_forward.1} parent=63 // loop_body
        %s2265 = smul.u32 %s2260, 32
        %s2266 = scalar_lea.vmem [#allocation3], %s2265
        %v2267 = vld [vmem:[%s2266] sm:$0xff]
        %v2268 = vld [vmem:[%s2266 + $0x8] sm:$0xff]
        %v2269 = vld [vmem:[%s2266 + $0x10] sm:$0xff]
        %v2270 = vld [vmem:[%s2266 + $0x18] sm:$0x3f]
        %s2271 = sadd.s32 %s2260, 1
        %s2272 = smul.u32 %s2271, 32
        %s2273 = scalar_lea.vmem [#allocation3], %s2272
        %v2274 = vld [vmem:[%s2273] sm:$0xff]
        %v2275 = vld [vmem:[%s2273 + $0x8] sm:$0xff]
        %v2276 = vld [vmem:[%s2273 + $0x10] sm:$0xff]
        %v2277 = vld [vmem:[%s2273 + $0x18] sm:$0x3f]
        %s2278 = sadd.s32 %s2260, 2
        %s2279 = smul.u32 %s2278, 32
        %s2280 = scalar_lea.vmem [#allocation3], %s2279
        %v2281 = vld [vmem:[%s2280] sm:$0xff]
        %v2282 = vld [vmem:[%s2280 + $0x8] sm:$0xff]
        %v2283 = vld [vmem:[%s2280 + $0x10] sm:$0xff]
        %v2284 = vld [vmem:[%s2280 + $0x18] sm:$0x3f]
        %vm2289 = vcmask 1046528
        %v2290 = vrot.slane %v2267, 1
        %v2291 = vrot.slane %v2268, 1
        %v2292 = vsel %vm2289, %v2290, %v2291
        %v2293 = vrot.slane %v2269, 1
        %v2294 = vsel %vm2289, %v2291, %v2293
        %v2295 = vrot.slane %v2270, 1
        %v2296 = vsel %vm2289, %v2293, %v2295
        %2297 = vrot.lane.b32.xlu0 %v2292, 8
        %v2298 = vpop.permute.xlu0 %2297
        %2299 = vrot.lane.b32.xlu0 %v2294, 8
        %v2300 = vpop.permute.xlu0 %2299
        %2301 = vrot.lane.b32.xlu0 %v2296, 8
        %v2302 = vpop.permute.xlu0 %2301
        %2303 = vrot.lane.b32.xlu0 %v2295, 8
        %v2304 = vpop.permute.xlu0 %2303
        %vm2309 = vcmask 1045504
        %v2310 = vrot.slane %v2267, 2
        %v2311 = vrot.slane %v2268, 2
        %v2312 = vsel %vm2309, %v2310, %v2311
        %v2313 = vrot.slane %v2269, 2
        %v2314 = vsel %vm2309, %v2311, %v2313
        %v2315 = vrot.slane %v2270, 2
        %v2316 = vsel %vm2309, %v2313, %v2315
        %2317 = vrot.lane.b32.xlu0 %v2312, 16
        %v2318 = vpop.permute.xlu0 %2317
        %2319 = vrot.lane.b32.xlu0 %v2314, 16
        %v2320 = vpop.permute.xlu0 %2319
        %2321 = vrot.lane.b32.xlu0 %v2316, 16
        %v2322 = vpop.permute.xlu0 %2321
        %2323 = vrot.lane.b32.xlu0 %v2315, 16
        %v2324 = vpop.permute.xlu0 %2323
        %2333 = vrot.lane.b32.xlu0 %v2274, 24
        %v2334 = vpop.permute.xlu0 %2333
        %2335 = vrot.lane.b32.xlu0 %v2275, 24
        %v2336 = vpop.permute.xlu0 %2335
        %2337 = vrot.lane.b32.xlu0 %v2276, 24
        %v2338 = vpop.permute.xlu0 %2337
        %2339 = vrot.lane.b32.xlu0 %v2277, 24
        %v2340 = vpop.permute.xlu0 %2339
        %v2345 = vrot.slane %v2274, 1
        %v2346 = vrot.slane %v2275, 1
        %v2347 = vsel %vm2289, %v2345, %v2346
        %v2348 = vrot.slane %v2276, 1
        %v2349 = vsel %vm2289, %v2346, %v2348
        %v2350 = vrot.slane %v2277, 1
        %v2351 = vsel %vm2289, %v2348, %v2350
        %2352 = vrot.lane.b32.xlu0 %v2347, 32
        %v2353 = vpop.permute.xlu0 %2352
        %2354 = vrot.lane.b32.xlu0 %v2349, 32
        %v2355 = vpop.permute.xlu0 %2354
        %2356 = vrot.lane.b32.xlu0 %v2351, 32
        %v2357 = vpop.permute.xlu0 %2356
        %2358 = vrot.lane.b32.xlu0 %v2350, 32
        %v2359 = vpop.permute.xlu0 %2358
        %v2364 = vrot.slane %v2274, 2
        %v2365 = vrot.slane %v2275, 2
        %v2366 = vsel %vm2309, %v2364, %v2365
        %v2367 = vrot.slane %v2276, 2
        %v2368 = vsel %vm2309, %v2365, %v2367
        %v2369 = vrot.slane %v2277, 2
        %v2370 = vsel %vm2309, %v2367, %v2369
        %2371 = vrot.lane.b32.xlu0 %v2366, 40
        %v2372 = vpop.permute.xlu0 %2371
        %2373 = vrot.lane.b32.xlu0 %v2368, 40
        %v2374 = vpop.permute.xlu0 %2373
        %2375 = vrot.lane.b32.xlu0 %v2370, 40
        %v2376 = vpop.permute.xlu0 %2375
        %2377 = vrot.lane.b32.xlu0 %v2369, 40
        %v2378 = vpop.permute.xlu0 %2377
        %2387 = vrot.lane.b32.xlu0 %v2281, 48
        %v2388 = vpop.permute.xlu0 %2387
        %2389 = vrot.lane.b32.xlu0 %v2282, 48
        %v2390 = vpop.permute.xlu0 %2389
        %2391 = vrot.lane.b32.xlu0 %v2283, 48
        %v2392 = vpop.permute.xlu0 %2391
        %2393 = vrot.lane.b32.xlu0 %v2284, 48
        %v2394 = vpop.permute.xlu0 %2393
        %v2399 = vrot.slane %v2281, 1
        %v2400 = vrot.slane %v2282, 1
        %v2401 = vsel %vm2289, %v2399, %v2400
        %v2402 = vrot.slane %v2283, 1
        %v2403 = vsel %vm2289, %v2400, %v2402
        %v2404 = vrot.slane %v2284, 1
        %v2405 = vsel %vm2289, %v2402, %v2404
        %2406 = vrot.lane.b32.xlu0 %v2401, 56
        %v2407 = vpop.permute.xlu0 %2406
        %2408 = vrot.lane.b32.xlu0 %v2403, 56
        %v2409 = vpop.permute.xlu0 %2408
        %2410 = vrot.lane.b32.xlu0 %v2405, 56
        %v2411 = vpop.permute.xlu0 %2410
        %2412 = vrot.lane.b32.xlu0 %v2404, 56
        %v2413 = vpop.permute.xlu0 %2412
        %v2418 = vrot.slane %v2281, 2
        %v2419 = vrot.slane %v2282, 2
        %v2420 = vsel %vm2309, %v2418, %v2419
        %v2421 = vrot.slane %v2283, 2
        %v2422 = vsel %vm2309, %v2419, %v2421
        %v2423 = vrot.slane %v2284, 2
        %v2424 = vsel %vm2309, %v2421, %v2423
        %2425 = vrot.lane.b32.xlu0 %v2420, 64
        %v2426 = vpop.permute.xlu0 %2425
        %2427 = vrot.lane.b32.xlu0 %v2422, 64
        %v2428 = vpop.permute.xlu0 %2427
        %2429 = vrot.lane.b32.xlu0 %v2424, 64
        %v2430 = vpop.permute.xlu0 %2429
        %2431 = vrot.lane.b32.xlu0 %v2423, 64
        %v2432 = vpop.permute.xlu0 %2431
        %vm2437 = vcmask 64512
        %v2438 = vsel %vm2437, %v2267, %v2298
        %v2439 = vsel %vm2437, %v2268, %v2300
        %v2440 = vsel %vm2437, %v2269, %v2302
        %v2441 = vsel %vm2437, %v2270, %v2304
        %vm2442 = vcmask 130048
        %v2443 = vsel %vm2442, %v2438, %v2318
        %v2444 = vsel %vm2442, %v2439, %v2320
        %v2445 = vsel %vm2442, %v2440, %v2322
        %v2446 = vsel %vm2442, %v2441, %v2324
        %vm2447 = vcmask 195584
        %v2448 = vsel %vm2447, %v2443, %v2334
        %v2449 = vsel %vm2447, %v2444, %v2336
        %v2450 = vsel %vm2447, %v2445, %v2338
        %v2451 = vsel %vm2447, %v2446, %v2340
        %vm2452 = vcmask 261120
        %v2453 = vsel %vm2452, %v2448, %v2353
        %v2454 = vsel %vm2452, %v2449, %v2355
        %v2455 = vsel %vm2452, %v2450, %v2357
        %v2456 = vsel %vm2452, %v2451, %v2359
        %vm2457 = vcmask 326656
        %v2458 = vsel %vm2457, %v2453, %v2372
        %v2459 = vsel %vm2457, %v2454, %v2374
        %v2460 = vsel %vm2457, %v2455, %v2376
        %v2461 = vsel %vm2457, %v2456, %v2378
        %vm2462 = vcmask 392192
        %v2463 = vsel %vm2462, %v2458, %v2388
        %v2464 = vsel %vm2462, %v2459, %v2390
        %v2465 = vsel %vm2462, %v2460, %v2392
        %v2466 = vsel %vm2462, %v2461, %v2394
        %vm2467 = vcmask 457728
        %v2468 = vsel %vm2467, %v2463, %v2407
        %v2469 = vsel %vm2467, %v2464, %v2409
        %v2470 = vsel %vm2467, %v2465, %v2411
        %v2471 = vsel %vm2467, %v2466, %v2413
        %vm2472 = vcmask 523264
        %v2473 = vsel %vm2472, %v2468, %v2426
        %v2474 = vsel %vm2472, %v2469, %v2428
        %v2475 = vsel %vm2472, %v2470, %v2430
        %v2476 = vsel %vm2472, %v2471, %v2432
        %v2478 = vlaneseq
        %v2479 = vshrl.u32 %v2478, 7
        %v2480 = vsub.s32 0, %v2479
        %v2481 = vrot.slane %v409, %v2480
        %vm2483 = vcmask 588800
        %v2485 = vsel %vm2483, %v2473, 0
        %v2488 = vsel %vm2483, %v2474, 0
        %v2491 = vsel %vm2483, %v2475, 0
        %v2494 = vsel %vm2483, %v2476, 0
        %2496 = vmatprep.subr.mxu0 0.0
        %2497 = vmatpush1.msra.mxu0 %v400
        %2498 = vmatprep.subr.mxu0 0.0
        %2499 = vmatpush1.msra.mxu0 %v401
        %2500 = vmatprep.subr.mxu0 0.0
        %2501 = vmatpush1.msra.mxu0 %v402
        %2502 = vmatprep.subr.mxu0 0.0
        %2503 = vmatpush1.msra.mxu0 %v403
        %2504 = vmatprep.subr.mxu0 0.0
        %2505 = vmatpush1.msra.mxu0 %v404
        %2506 = vmatprep.subr.mxu0 0.0
        %2507 = vmatpush1.msra.mxu0 %v405
        %2508 = vmatprep.subr.mxu0 0.0
        %2509 = vmatpush1.msra.mxu0 %v406
        %2510 = vmatprep.subr.mxu0 0.0
        %2511 = vmatpush1.msra.mxu0 %v407
        %2512 = vmatprep.subr.mxu0 0.0
        %2513 = vmatpush1.msra.mxu0 %v408
        %2514 = vmatprep.subr.mxu0 0.0
        %2515 = vmatpush1.msra.mxu0 0.0
        %2516 = vmatprep.subr.mxu0 0.0
        %2517 = vmatpush1.msra.mxu0 0.0
        %2518 = vmatprep.subr.mxu0 0.0
        %2519 = vmatpush1.msra.mxu0 0.0
        %2520 = vmatprep.subr.mxu0 0.0
        %2521 = vmatpush1.msra.mxu0 0.0
        %2522 = vmatprep.subr.mxu0 0.0
        %2523 = vmatpush1.msra.mxu0 0.0
        %2524 = vmatprep.subr.mxu0 0.0
        %2525 = vmatpush1.msra.mxu0 0.0
        %2526 = vmatprep.subr.mxu0 0.0
        %2527 = vmatpush1.msra.mxu0 0.0
        %2528 = vmatprep.subr.mxu0 0.0
        %2529 = vmatpush1.msra.mxu0 0.0
        %2530 = vmatprep.subr.mxu0 0.0
        %2531 = vmatpush1.msra.mxu0 0.0
        %2532 = vmatprep.subr.mxu0 0.0
        %2533 = vmatpush1.msra.mxu0 0.0
        %2534 = vmatprep.subr.mxu0 0.0
        %2535 = vmatpush1.msra.mxu0 0.0
        %2536 = vmatprep.subr.mxu0 0.0
        %2537 = vmatpush1.msra.mxu0 0.0
        %2538 = vmatprep.subr.mxu0 0.0
        %2539 = vmatpush1.msra.mxu0 0.0
        %2540 = vmatprep.subr.mxu0 0.0
        %2541 = vmatpush1.msra.mxu0 0.0
        %2542 = vmatprep.subr.mxu0 0.0
        %2543 = vmatpush1.msra.mxu0 0.0
        %2544 = vmatprep.subr.mxu0 0.0
        %2545 = vmatpush1.msra.mxu0 0.0
        %2546 = vmatprep.subr.mxu0 0.0
        %2547 = vmatpush1.msra.mxu0 0.0
        %2548 = vmatprep.subr.mxu0 0.0
        %2549 = vmatpush1.msra.mxu0 0.0
        %2550 = vmatprep.subr.mxu0 0.0
        %2551 = vmatpush1.msra.mxu0 0.0
        %2552 = vmatprep.subr.mxu0 0.0
        %2553 = vmatpush1.msra.mxu0 0.0
        %2554 = vmatprep.subr.mxu0 0.0
        %2555 = vmatpush1.msra.mxu0 0.0
        %2556 = vmatprep.subr.mxu0 0.0
        %2557 = vmatpush1.msra.mxu0 0.0
        %2558 = vmatprep.subr.mxu0 0.0
        %2559 = vmatpush1.msra.mxu0 0.0
        %2560 = vmatprep.mubr.f32.mxu0 0.0
        %2561 = vmatmul.mubr.f32.gmra.mrb[0].mxu0 %v2485
        %v2562 = vpop.f32.mrb[0].mxu0
        %v2563 = vadd.f32 %v2481, %v2562
        %v2564 = vpop.f32.mrb[0].mxu0
        %2565 = vmatprep.mubr.f32.mxu0 0.0
        %2566 = vmatmul.mubr.f32.gmra.mrb[0].mxu0 %v2488
        %v2567 = vpop.f32.mrb[0].mxu0
        %v2568 = vadd.f32 %v2481, %v2567
        %v2569 = vpop.f32.mrb[0].mxu0
        %2570 = vmatprep.mubr.f32.mxu0 0.0
        %2571 = vmatmul.mubr.f32.gmra.mrb[0].mxu0 %v2491
        %v2572 = vpop.f32.mrb[0].mxu0
        %v2573 = vadd.f32 %v2481, %v2572
        %v2574 = vpop.f32.mrb[0].mxu0
        %2575 = vmatprep.mubr.f32.mxu0 0.0
        %2576 = vmatmul.mubr.f32.gmra.mrb[0].mxu0 %v2494
        %v2577 = vpop.f32.mrb[0].mxu0
        %v2578 = vadd.f32 %v2481, %v2577
        %v2579 = vpop.f32.mrb[0].mxu0
        %2580 = vdwg.mxu0
        %v2581 = vmax.f32 %v2563, 0.0
        %v2582 = vmax.f32 %v2568, 0.0
        %v2583 = vmax.f32 %v2573, 0.0
        %v2584 = vmax.f32 %v2578, 0.0
        %s2585 = scalar_lea.vmem [#allocation4], %s2265
        %2586 = vst.msk [vmem:[%s2585] sm:$0xff] %vm2437, %v2581
        %2587 = vst.msk [vmem:[%s2585 + $0x8] sm:$0xff] %vm2437, %v2582
        %2588 = vst.msk [vmem:[%s2585 + $0x10] sm:$0xff] %vm2437, %v2583
        %vm2589 = vcmask 60416
        %2590 = vst.msk [vmem:[%s2585 + $0x18] sm:$0xf] %vm2589, %v2584
      $region83: #{tinyvgg_forward.1} parent=63 // loop_footer
        %s2264 = sadd.s32 1, %s2260
      $region84: #{tinyvgg_forward.1} parent=63 // loop_footer_branch
        %2259 = sbr.rel target = $region80
      $region85: #{tinyvgg_forward.1} parent=63 // loop_exit
        _
      loop: start=0, step=1, limit=13
      $region86: #{tinyvgg_forward.1} parent=63 // loop_pre_header
        _
      $region87: #{tinyvgg_forward.1} parent=63 // loop_header
        %s2592 = sphi 0, %s2596
        %p2593 = scmp.ge.s32.totalorder %s2592, 13
      $region88: #{tinyvgg_forward.1} parent=63 // loop_header_branch
        %2595 = sbr.rel (%p2593) target = $region92
      $region89: #{tinyvgg_forward.1} parent=63 // loop_body
        %s2597 = smul.u32 %s2592, 2
        %s2598 = smul.u32 %s2597, 32
        %s2599 = scalar_lea.vmem [#allocation4], %s2598
        %v2600 = vld [vmem:[%s2599] sm:$0xff]
        %v2601 = vld [vmem:[%s2599 + $0x8] sm:$0xff]
        %v2602 = vld [vmem:[%s2599 + $0x10] sm:$0xff]
        %v2603 = vld [vmem:[%s2599 + $0x18] sm:$0xf]
        %s2604 = sadd.s32 %s2597, 1
        %s2605 = smul.u32 %s2604, 32
        %s2606 = scalar_lea.vmem [#allocation4], %s2605
        %v2607 = vld [vmem:[%s2606] sm:$0xff]
        %v2608 = vld [vmem:[%s2606 + $0x8] sm:$0xff]
        %v2609 = vld [vmem:[%s2606 + $0x10] sm:$0xff]
        %v2610 = vld [vmem:[%s2606 + $0x18] sm:$0xf]
        %s2611 = sadd.s32 %s2597, 2
        %s2612 = smul.u32 %s2611, 32
        %s2613 = scalar_lea.vmem [#allocation4], %s2612
        %v2614 = vld [vmem:[%s2613] sm:$0xff]
        %v2615 = vld [vmem:[%s2613 + $0x8] sm:$0xff]
        %v2616 = vld [vmem:[%s2613 + $0x10] sm:$0xff]
        %v2617 = vld [vmem:[%s2613 + $0x18] sm:$0xf]
        %s2618 = sadd.s32 %s2597, 3
        %s2619 = smul.u32 %s2618, 32
        %s2620 = scalar_lea.vmem [#allocation4], %s2619
        %v2621 = vld [vmem:[%s2620] sm:$0xff]
        %v2622 = vld [vmem:[%s2620 + $0x8] sm:$0xff]
        %v2623 = vld [vmem:[%s2620 + $0x10] sm:$0xff]
        %v2624 = vld [vmem:[%s2620 + $0x18] sm:$0xf]
        %vm2629 = vcmask 1046528
        %v2630 = vrot.slane %v2600, 1
        %v2631 = vrot.slane %v2601, 1
        %v2632 = vsel %vm2629, %v2630, %v2631
        %v2633 = vrot.slane %v2602, 1
        %v2634 = vsel %vm2629, %v2631, %v2633
        %v2635 = vrot.slane %v2603, 1
        %v2636 = vsel %vm2629, %v2633, %v2635
        %2637 = vrot.lane.b32.xlu0 %v2632, 8
        %v2638 = vpop.permute.xlu0 %2637
        %2639 = vrot.lane.b32.xlu0 %v2634, 8
        %v2640 = vpop.permute.xlu0 %2639
        %2641 = vrot.lane.b32.xlu0 %v2636, 8
        %v2642 = vpop.permute.xlu0 %2641
        %2643 = vrot.lane.b32.xlu0 %v2635, 8
        %v2644 = vpop.permute.xlu0 %2643
        %vm2649 = vcmask 1045504
        %v2650 = vrot.slane %v2600, 2
        %v2651 = vrot.slane %v2601, 2
        %v2652 = vsel %vm2649, %v2650, %v2651
        %v2653 = vrot.slane %v2602, 2
        %v2654 = vsel %vm2649, %v2651, %v2653
        %v2655 = vrot.slane %v2603, 2
        %v2656 = vsel %vm2649, %v2653, %v2655
        %2657 = vrot.lane.b32.xlu0 %v2652, 16
        %v2658 = vpop.permute.xlu0 %2657
        %2659 = vrot.lane.b32.xlu0 %v2654, 16
        %v2660 = vpop.permute.xlu0 %2659
        %2661 = vrot.lane.b32.xlu0 %v2656, 16
        %v2662 = vpop.permute.xlu0 %2661
        %2663 = vrot.lane.b32.xlu0 %v2655, 16
        %v2664 = vpop.permute.xlu0 %2663
        %2673 = vrot.lane.b32.xlu0 %v2607, 24
        %v2674 = vpop.permute.xlu0 %2673
        %2675 = vrot.lane.b32.xlu0 %v2608, 24
        %v2676 = vpop.permute.xlu0 %2675
        %2677 = vrot.lane.b32.xlu0 %v2609, 24
        %v2678 = vpop.permute.xlu0 %2677
        %2679 = vrot.lane.b32.xlu0 %v2610, 24
        %v2680 = vpop.permute.xlu0 %2679
        %v2685 = vrot.slane %v2607, 1
        %v2686 = vrot.slane %v2608, 1
        %v2687 = vsel %vm2629, %v2685, %v2686
        %v2688 = vrot.slane %v2609, 1
        %v2689 = vsel %vm2629, %v2686, %v2688
        %v2690 = vrot.slane %v2610, 1
        %v2691 = vsel %vm2629, %v2688, %v2690
        %2692 = vrot.lane.b32.xlu0 %v2687, 32
        %v2693 = vpop.permute.xlu0 %2692
        %2694 = vrot.lane.b32.xlu0 %v2689, 32
        %v2695 = vpop.permute.xlu0 %2694
        %2696 = vrot.lane.b32.xlu0 %v2691, 32
        %v2697 = vpop.permute.xlu0 %2696
        %2698 = vrot.lane.b32.xlu0 %v2690, 32
        %v2699 = vpop.permute.xlu0 %2698
        %v2704 = vrot.slane %v2607, 2
        %v2705 = vrot.slane %v2608, 2
        %v2706 = vsel %vm2649, %v2704, %v2705
        %v2707 = vrot.slane %v2609, 2
        %v2708 = vsel %vm2649, %v2705, %v2707
        %v2709 = vrot.slane %v2610, 2
        %v2710 = vsel %vm2649, %v2707, %v2709
        %2711 = vrot.lane.b32.xlu0 %v2706, 40
        %v2712 = vpop.permute.xlu0 %2711
        %2713 = vrot.lane.b32.xlu0 %v2708, 40
        %v2714 = vpop.permute.xlu0 %2713
        %2715 = vrot.lane.b32.xlu0 %v2710, 40
        %v2716 = vpop.permute.xlu0 %2715
        %2717 = vrot.lane.b32.xlu0 %v2709, 40
        %v2718 = vpop.permute.xlu0 %2717
        %2727 = vrot.lane.b32.xlu0 %v2614, 48
        %v2728 = vpop.permute.xlu0 %2727
        %2729 = vrot.lane.b32.xlu0 %v2615, 48
        %v2730 = vpop.permute.xlu0 %2729
        %2731 = vrot.lane.b32.xlu0 %v2616, 48
        %v2732 = vpop.permute.xlu0 %2731
        %2733 = vrot.lane.b32.xlu0 %v2617, 48
        %v2734 = vpop.permute.xlu0 %2733
        %v2739 = vrot.slane %v2614, 1
        %v2740 = vrot.slane %v2615, 1
        %v2741 = vsel %vm2629, %v2739, %v2740
        %v2742 = vrot.slane %v2616, 1
        %v2743 = vsel %vm2629, %v2740, %v2742
        %v2744 = vrot.slane %v2617, 1
        %v2745 = vsel %vm2629, %v2742, %v2744
        %2746 = vrot.lane.b32.xlu0 %v2741, 56
        %v2747 = vpop.permute.xlu0 %2746
        %2748 = vrot.lane.b32.xlu0 %v2743, 56
        %v2749 = vpop.permute.xlu0 %2748
        %2750 = vrot.lane.b32.xlu0 %v2745, 56
        %v2751 = vpop.permute.xlu0 %2750
        %2752 = vrot.lane.b32.xlu0 %v2744, 56
        %v2753 = vpop.permute.xlu0 %2752
        %v2758 = vrot.slane %v2614, 2
        %v2759 = vrot.slane %v2615, 2
        %v2760 = vsel %vm2649, %v2758, %v2759
        %v2761 = vrot.slane %v2616, 2
        %v2762 = vsel %vm2649, %v2759, %v2761
        %v2763 = vrot.slane %v2617, 2
        %v2764 = vsel %vm2649, %v2761, %v2763
        %2765 = vrot.lane.b32.xlu0 %v2760, 64
        %v2766 = vpop.permute.xlu0 %2765
        %2767 = vrot.lane.b32.xlu0 %v2762, 64
        %v2768 = vpop.permute.xlu0 %2767
        %2769 = vrot.lane.b32.xlu0 %v2764, 64
        %v2770 = vpop.permute.xlu0 %2769
        %2771 = vrot.lane.b32.xlu0 %v2763, 64
        %v2772 = vpop.permute.xlu0 %2771
        %vm2777 = vcmask 64512
        %v2778 = vsel %vm2777, %v2600, %v2638
        %v2779 = vsel %vm2777, %v2601, %v2640
        %v2780 = vsel %vm2777, %v2602, %v2642
        %v2781 = vsel %vm2777, %v2603, %v2644
        %vm2782 = vcmask 130048
        %v2783 = vsel %vm2782, %v2778, %v2658
        %v2784 = vsel %vm2782, %v2779, %v2660
        %v2785 = vsel %vm2782, %v2780, %v2662
        %v2786 = vsel %vm2782, %v2781, %v2664
        %vm2787 = vcmask 195584
        %v2788 = vsel %vm2787, %v2783, %v2674
        %v2789 = vsel %vm2787, %v2784, %v2676
        %v2790 = vsel %vm2787, %v2785, %v2678
        %v2791 = vsel %vm2787, %v2786, %v2680
        %vm2792 = vcmask 261120
        %v2793 = vsel %vm2792, %v2788, %v2693
        %v2794 = vsel %vm2792, %v2789, %v2695
        %v2795 = vsel %vm2792, %v2790, %v2697
        %v2796 = vsel %vm2792, %v2791, %v2699
        %vm2797 = vcmask 326656
        %v2798 = vsel %vm2797, %v2793, %v2712
        %v2799 = vsel %vm2797, %v2794, %v2714
        %v2800 = vsel %vm2797, %v2795, %v2716
        %v2801 = vsel %vm2797, %v2796, %v2718
        %vm2802 = vcmask 392192
        %v2803 = vsel %vm2802, %v2798, %v2728
        %v2804 = vsel %vm2802, %v2799, %v2730
        %v2805 = vsel %vm2802, %v2800, %v2732
        %v2806 = vsel %vm2802, %v2801, %v2734
        %vm2807 = vcmask 457728
        %v2808 = vsel %vm2807, %v2803, %v2747
        %v2809 = vsel %vm2807, %v2804, %v2749
        %v2810 = vsel %vm2807, %v2805, %v2751
        %v2811 = vsel %vm2807, %v2806, %v2753
        %vm2812 = vcmask 523264
        %v2813 = vsel %vm2812, %v2808, %v2766
        %v2814 = vsel %vm2812, %v2809, %v2768
        %v2815 = vsel %vm2812, %v2810, %v2770
        %v2816 = vsel %vm2812, %v2811, %v2772
        %v2818 = vlaneseq
        %v2819 = vshrl.u32 %v2818, 7
        %v2820 = vsub.s32 0, %v2819
        %v2821 = vrot.slane %v419, %v2820
        %vm2823 = vcmask 588800
        %v2825 = vsel %vm2823, %v2813, 0
        %v2828 = vsel %vm2823, %v2814, 0
        %v2831 = vsel %vm2823, %v2815, 0
        %v2834 = vsel %vm2823, %v2816, 0
        %2836 = vmatprep.subr.mxu0 0.0
        %2837 = vmatpush1.msra.mxu0 %v410
        %2838 = vmatprep.subr.mxu0 0.0
        %2839 = vmatpush1.msra.mxu0 %v411
        %2840 = vmatprep.subr.mxu0 0.0
        %2841 = vmatpush1.msra.mxu0 %v412
        %2842 = vmatprep.subr.mxu0 0.0
        %2843 = vmatpush1.msra.mxu0 %v413
        %2844 = vmatprep.subr.mxu0 0.0
        %2845 = vmatpush1.msra.mxu0 %v414
        %2846 = vmatprep.subr.mxu0 0.0
        %2847 = vmatpush1.msra.mxu0 %v415
        %2848 = vmatprep.subr.mxu0 0.0
        %2849 = vmatpush1.msra.mxu0 %v416
        %2850 = vmatprep.subr.mxu0 0.0
        %2851 = vmatpush1.msra.mxu0 %v417
        %2852 = vmatprep.subr.mxu0 0.0
        %2853 = vmatpush1.msra.mxu0 %v418
        %2854 = vmatprep.subr.mxu0 0.0
        %2855 = vmatpush1.msra.mxu0 0.0
        %2856 = vmatprep.subr.mxu0 0.0
        %2857 = vmatpush1.msra.mxu0 0.0
        %2858 = vmatprep.subr.mxu0 0.0
        %2859 = vmatpush1.msra.mxu0 0.0
        %2860 = vmatprep.subr.mxu0 0.0
        %2861 = vmatpush1.msra.mxu0 0.0
        %2862 = vmatprep.subr.mxu0 0.0
        %2863 = vmatpush1.msra.mxu0 0.0
        %2864 = vmatprep.subr.mxu0 0.0
        %2865 = vmatpush1.msra.mxu0 0.0
        %2866 = vmatprep.subr.mxu0 0.0
        %2867 = vmatpush1.msra.mxu0 0.0
        %2868 = vmatprep.subr.mxu0 0.0
        %2869 = vmatpush1.msra.mxu0 0.0
        %2870 = vmatprep.subr.mxu0 0.0
        %2871 = vmatpush1.msra.mxu0 0.0
        %2872 = vmatprep.subr.mxu0 0.0
        %2873 = vmatpush1.msra.mxu0 0.0
        %2874 = vmatprep.subr.mxu0 0.0
        %2875 = vmatpush1.msra.mxu0 0.0
        %2876 = vmatprep.subr.mxu0 0.0
        %2877 = vmatpush1.msra.mxu0 0.0
        %2878 = vmatprep.subr.mxu0 0.0
        %2879 = vmatpush1.msra.mxu0 0.0
        %2880 = vmatprep.subr.mxu0 0.0
        %2881 = vmatpush1.msra.mxu0 0.0
        %2882 = vmatprep.subr.mxu0 0.0
        %2883 = vmatpush1.msra.mxu0 0.0
        %2884 = vmatprep.subr.mxu0 0.0
        %2885 = vmatpush1.msra.mxu0 0.0
        %2886 = vmatprep.subr.mxu0 0.0
        %2887 = vmatpush1.msra.mxu0 0.0
        %2888 = vmatprep.subr.mxu0 0.0
        %2889 = vmatpush1.msra.mxu0 0.0
        %2890 = vmatprep.subr.mxu0 0.0
        %2891 = vmatpush1.msra.mxu0 0.0
        %2892 = vmatprep.subr.mxu0 0.0
        %2893 = vmatpush1.msra.mxu0 0.0
        %2894 = vmatprep.subr.mxu0 0.0
        %2895 = vmatpush1.msra.mxu0 0.0
        %2896 = vmatprep.subr.mxu0 0.0
        %2897 = vmatpush1.msra.mxu0 0.0
        %2898 = vmatprep.subr.mxu0 0.0
        %2899 = vmatpush1.msra.mxu0 0.0
        %2900 = vmatprep.mubr.f32.mxu0 0.0
        %2901 = vmatmul.mubr.f32.gmra.mrb[0].mxu0 %v2825
        %v2902 = vpop.f32.mrb[0].mxu0
        %v2903 = vadd.f32 %v2821, %v2902
        %v2904 = vpop.f32.mrb[0].mxu0
        %2905 = vmatprep.mubr.f32.mxu0 0.0
        %2906 = vmatmul.mubr.f32.gmra.mrb[0].mxu0 %v2828
        %v2907 = vpop.f32.mrb[0].mxu0
        %v2908 = vadd.f32 %v2821, %v2907
        %v2909 = vpop.f32.mrb[0].mxu0
        %2910 = vmatprep.mubr.f32.mxu0 0.0
        %2911 = vmatmul.mubr.f32.gmra.mrb[0].mxu0 %v2831
        %v2912 = vpop.f32.mrb[0].mxu0
        %v2913 = vadd.f32 %v2821, %v2912
        %v2914 = vpop.f32.mrb[0].mxu0
        %2915 = vmatprep.mubr.f32.mxu0 0.0
        %2916 = vmatmul.mubr.f32.gmra.mrb[0].mxu0 %v2834
        %v2917 = vpop.f32.mrb[0].mxu0
        %v2918 = vadd.f32 %v2821, %v2917
        %v2919 = vpop.f32.mrb[0].mxu0
        %2920 = vdwg.mxu0
        %v2921 = vmax.f32 %v2903, 0.0
        %v2922 = vmax.f32 %v2908, 0.0
        %v2923 = vmax.f32 %v2913, 0.0
        %v2924 = vmax.f32 %v2918, 0.0
        %2925 = vrot.lane.b32.xlu0 %v2687, 8
        %v2926 = vpop.permute.xlu0 %2925
        %2927 = vrot.lane.b32.xlu0 %v2689, 8
        %v2928 = vpop.permute.xlu0 %2927
        %2929 = vrot.lane.b32.xlu0 %v2691, 8
        %v2930 = vpop.permute.xlu0 %2929
        %2931 = vrot.lane.b32.xlu0 %v2690, 8
        %v2932 = vpop.permute.xlu0 %2931
        %2937 = vrot.lane.b32.xlu0 %v2706, 16
        %v2938 = vpop.permute.xlu0 %2937
        %2939 = vrot.lane.b32.xlu0 %v2708, 16
        %v2940 = vpop.permute.xlu0 %2939
        %2941 = vrot.lane.b32.xlu0 %v2710, 16
        %v2942 = vpop.permute.xlu0 %2941
        %2943 = vrot.lane.b32.xlu0 %v2709, 16
        %v2944 = vpop.permute.xlu0 %2943
        %2949 = vrot.lane.b32.xlu0 %v2614, 24
        %v2950 = vpop.permute.xlu0 %2949
        %2951 = vrot.lane.b32.xlu0 %v2615, 24
        %v2952 = vpop.permute.xlu0 %2951
        %2953 = vrot.lane.b32.xlu0 %v2616, 24
        %v2954 = vpop.permute.xlu0 %2953
        %2955 = vrot.lane.b32.xlu0 %v2617, 24
        %v2956 = vpop.permute.xlu0 %2955
        %2961 = vrot.lane.b32.xlu0 %v2741, 32
        %v2962 = vpop.permute.xlu0 %2961
        %2963 = vrot.lane.b32.xlu0 %v2743, 32
        %v2964 = vpop.permute.xlu0 %2963
        %2965 = vrot.lane.b32.xlu0 %v2745, 32
        %v2966 = vpop.permute.xlu0 %2965
        %2967 = vrot.lane.b32.xlu0 %v2744, 32
        %v2968 = vpop.permute.xlu0 %2967
        %2973 = vrot.lane.b32.xlu0 %v2760, 40
        %v2974 = vpop.permute.xlu0 %2973
        %2975 = vrot.lane.b32.xlu0 %v2762, 40
        %v2976 = vpop.permute.xlu0 %2975
        %2977 = vrot.lane.b32.xlu0 %v2764, 40
        %v2978 = vpop.permute.xlu0 %2977
        %2979 = vrot.lane.b32.xlu0 %v2763, 40
        %v2980 = vpop.permute.xlu0 %2979
        %2989 = vrot.lane.b32.xlu0 %v2621, 48
        %v2990 = vpop.permute.xlu0 %2989
        %2991 = vrot.lane.b32.xlu0 %v2622, 48
        %v2992 = vpop.permute.xlu0 %2991
        %2993 = vrot.lane.b32.xlu0 %v2623, 48
        %v2994 = vpop.permute.xlu0 %2993
        %2995 = vrot.lane.b32.xlu0 %v2624, 48
        %v2996 = vpop.permute.xlu0 %2995
        %v3001 = vrot.slane %v2621, 1
        %v3002 = vrot.slane %v2622, 1
        %v3003 = vsel %vm2629, %v3001, %v3002
        %v3004 = vrot.slane %v2623, 1
        %v3005 = vsel %vm2629, %v3002, %v3004
        %v3006 = vrot.slane %v2624, 1
        %v3007 = vsel %vm2629, %v3004, %v3006
        %3008 = vrot.lane.b32.xlu0 %v3003, 56
        %v3009 = vpop.permute.xlu0 %3008
        %3010 = vrot.lane.b32.xlu0 %v3005, 56
        %v3011 = vpop.permute.xlu0 %3010
        %3012 = vrot.lane.b32.xlu0 %v3007, 56
        %v3013 = vpop.permute.xlu0 %3012
        %3014 = vrot.lane.b32.xlu0 %v3006, 56
        %v3015 = vpop.permute.xlu0 %3014
        %v3020 = vrot.slane %v2621, 2
        %v3021 = vrot.slane %v2622, 2
        %v3022 = vsel %vm2649, %v3020, %v3021
        %v3023 = vrot.slane %v2623, 2
        %v3024 = vsel %vm2649, %v3021, %v3023
        %v3025 = vrot.slane %v2624, 2
        %v3026 = vsel %vm2649, %v3023, %v3025
        %3027 = vrot.lane.b32.xlu0 %v3022, 64
        %v3028 = vpop.permute.xlu0 %3027
        %3029 = vrot.lane.b32.xlu0 %v3024, 64
        %v3030 = vpop.permute.xlu0 %3029
        %3031 = vrot.lane.b32.xlu0 %v3026, 64
        %v3032 = vpop.permute.xlu0 %3031
        %3033 = vrot.lane.b32.xlu0 %v3025, 64
        %v3034 = vpop.permute.xlu0 %3033
        %v3039 = vsel %vm2777, %v2607, %v2926
        %v3040 = vsel %vm2777, %v2608, %v2928
        %v3041 = vsel %vm2777, %v2609, %v2930
        %v3042 = vsel %vm2777, %v2610, %v2932
        %v3043 = vsel %vm2782, %v3039, %v2938
        %v3044 = vsel %vm2782, %v3040, %v2940
        %v3045 = vsel %vm2782, %v3041, %v2942
        %v3046 = vsel %vm2782, %v3042, %v2944
        %v3047 = vsel %vm2787, %v3043, %v2950
        %v3048 = vsel %vm2787, %v3044, %v2952
        %v3049 = vsel %vm2787, %v3045, %v2954
        %v3050 = vsel %vm2787, %v3046, %v2956
        %v3051 = vsel %vm2792, %v3047, %v2962
        %v3052 = vsel %vm2792, %v3048, %v2964
        %v3053 = vsel %vm2792, %v3049, %v2966
        %v3054 = vsel %vm2792, %v3050, %v2968
        %v3055 = vsel %vm2797, %v3051, %v2974
        %v3056 = vsel %vm2797, %v3052, %v2976
        %v3057 = vsel %vm2797, %v3053, %v2978
        %v3058 = vsel %vm2797, %v3054, %v2980
        %v3059 = vsel %vm2802, %v3055, %v2990
        %v3060 = vsel %vm2802, %v3056, %v2992
        %v3061 = vsel %vm2802, %v3057, %v2994
        %v3062 = vsel %vm2802, %v3058, %v2996
        %v3063 = vsel %vm2807, %v3059, %v3009
        %v3064 = vsel %vm2807, %v3060, %v3011
        %v3065 = vsel %vm2807, %v3061, %v3013
        %v3066 = vsel %vm2807, %v3062, %v3015
        %v3067 = vsel %vm2812, %v3063, %v3028
        %v3068 = vsel %vm2812, %v3064, %v3030
        %v3069 = vsel %vm2812, %v3065, %v3032
        %v3070 = vsel %vm2812, %v3066, %v3034
        %v3072 = vsel %vm2823, %v3067, 0
        %v3075 = vsel %vm2823, %v3068, 0
        %v3078 = vsel %vm2823, %v3069, 0
        %v3081 = vsel %vm2823, %v3070, 0
        %3083 = vmatprep.subr.mxu0 0.0
        %3084 = vmatpush1.msra.mxu0 %v410
        %3085 = vmatprep.subr.mxu0 0.0
        %3086 = vmatpush1.msra.mxu0 %v411
        %3087 = vmatprep.subr.mxu0 0.0
        %3088 = vmatpush1.msra.mxu0 %v412
        %3089 = vmatprep.subr.mxu0 0.0
        %3090 = vmatpush1.msra.mxu0 %v413
        %3091 = vmatprep.subr.mxu0 0.0
        %3092 = vmatpush1.msra.mxu0 %v414
        %3093 = vmatprep.subr.mxu0 0.0
        %3094 = vmatpush1.msra.mxu0 %v415
        %3095 = vmatprep.subr.mxu0 0.0
        %3096 = vmatpush1.msra.mxu0 %v416
        %3097 = vmatprep.subr.mxu0 0.0
        %3098 = vmatpush1.msra.mxu0 %v417
        %3099 = vmatprep.subr.mxu0 0.0
        %3100 = vmatpush1.msra.mxu0 %v418
        %3101 = vmatprep.subr.mxu0 0.0
        %3102 = vmatpush1.msra.mxu0 0.0
        %3103 = vmatprep.subr.mxu0 0.0
        %3104 = vmatpush1.msra.mxu0 0.0
        %3105 = vmatprep.subr.mxu0 0.0
        %3106 = vmatpush1.msra.mxu0 0.0
        %3107 = vmatprep.subr.mxu0 0.0
        %3108 = vmatpush1.msra.mxu0 0.0
        %3109 = vmatprep.subr.mxu0 0.0
        %3110 = vmatpush1.msra.mxu0 0.0
        %3111 = vmatprep.subr.mxu0 0.0
        %3112 = vmatpush1.msra.mxu0 0.0
        %3113 = vmatprep.subr.mxu0 0.0
        %3114 = vmatpush1.msra.mxu0 0.0
        %3115 = vmatprep.subr.mxu0 0.0
        %3116 = vmatpush1.msra.mxu0 0.0
        %3117 = vmatprep.subr.mxu0 0.0
        %3118 = vmatpush1.msra.mxu0 0.0
        %3119 = vmatprep.subr.mxu0 0.0
        %3120 = vmatpush1.msra.mxu0 0.0
        %3121 = vmatprep.subr.mxu0 0.0
        %3122 = vmatpush1.msra.mxu0 0.0
        %3123 = vmatprep.subr.mxu0 0.0
        %3124 = vmatpush1.msra.mxu0 0.0
        %3125 = vmatprep.subr.mxu0 0.0
        %3126 = vmatpush1.msra.mxu0 0.0
        %3127 = vmatprep.subr.mxu0 0.0
        %3128 = vmatpush1.msra.mxu0 0.0
        %3129 = vmatprep.subr.mxu0 0.0
        %3130 = vmatpush1.msra.mxu0 0.0
        %3131 = vmatprep.subr.mxu0 0.0
        %3132 = vmatpush1.msra.mxu0 0.0
        %3133 = vmatprep.subr.mxu0 0.0
        %3134 = vmatpush1.msra.mxu0 0.0
        %3135 = vmatprep.subr.mxu0 0.0
        %3136 = vmatpush1.msra.mxu0 0.0
        %3137 = vmatprep.subr.mxu0 0.0
        %3138 = vmatpush1.msra.mxu0 0.0
        %3139 = vmatprep.subr.mxu0 0.0
        %3140 = vmatpush1.msra.mxu0 0.0
        %3141 = vmatprep.subr.mxu0 0.0
        %3142 = vmatpush1.msra.mxu0 0.0
        %3143 = vmatprep.subr.mxu0 0.0
        %3144 = vmatpush1.msra.mxu0 0.0
        %3145 = vmatprep.subr.mxu0 0.0
        %3146 = vmatpush1.msra.mxu0 0.0
        %3147 = vmatprep.mubr.f32.mxu0 0.0
        %3148 = vmatmul.mubr.f32.gmra.mrb[0].mxu0 %v3072
        %v3149 = vpop.f32.mrb[0].mxu0
        %v3150 = vadd.f32 %v2821, %v3149
        %v3151 = vpop.f32.mrb[0].mxu0
        %3152 = vmatprep.mubr.f32.mxu0 0.0
        %3153 = vmatmul.mubr.f32.gmra.mrb[0].mxu0 %v3075
        %v3154 = vpop.f32.mrb[0].mxu0
        %v3155 = vadd.f32 %v2821, %v3154
        %v3156 = vpop.f32.mrb[0].mxu0
        %3157 = vmatprep.mubr.f32.mxu0 0.0
        %3158 = vmatmul.mubr.f32.gmra.mrb[0].mxu0 %v3078
        %v3159 = vpop.f32.mrb[0].mxu0
        %v3160 = vadd.f32 %v2821, %v3159
        %v3161 = vpop.f32.mrb[0].mxu0
        %3162 = vmatprep.mubr.f32.mxu0 0.0
        %3163 = vmatmul.mubr.f32.gmra.mrb[0].mxu0 %v3081
        %v3164 = vpop.f32.mrb[0].mxu0
        %v3165 = vadd.f32 %v2821, %v3164
        %v3166 = vpop.f32.mrb[0].mxu0
        %3167 = vdwg.mxu0
        %v3168 = vmax.f32 %v3150, 0.0
        %v3169 = vmax.f32 %v3155, 0.0
        %v3170 = vmax.f32 %v3160, 0.0
        %v3171 = vmax.f32 %v3165, 0.0
        %v3172 = vmax.f32 %v2921, %v3168
        %v3173 = vmax.f32 %v2922, %v3169
        %v3174 = vmax.f32 %v2923, %v3170
        %v3175 = vmax.f32 %v2924, %v3171
        %vm3176 = vcmask 211968
        %v3178 = vsel %vm3176, %v439, 0
        %v3181 = vsel %vm3176, %v440, 0
        %vm3183 = vcmask 1041408
        %v3185 = vsel %vm3183, %v3175, 0
        %3187 = vmatprep.subr.mxu0 0.0
        %3188 = vmatpush1.msra.mxu0 %v3172
        %3189 = vmatprep.subr.mxu0 0.0
        %3190 = vmatpush1.msra.mxu0 %v3173
        %3191 = vmatprep.subr.mxu0 0.0
        %3192 = vmatpush1.msra.mxu0 %v3174
        %3193 = vmatprep.subr.mxu0 0.0
        %3194 = vmatpush1.msra.mxu0 %v3185
        %3195 = vmatprep.subr.mxu0 0.0
        %3196 = vmatpush1.msra.mxu0 0.0
        %3197 = vmatprep.subr.mxu0 0.0
        %3198 = vmatpush1.msra.mxu0 0.0
        %3199 = vmatprep.subr.mxu0 0.0
        %3200 = vmatpush1.msra.mxu0 0.0
        %3201 = vmatprep.subr.mxu0 0.0
        %3202 = vmatpush1.msra.mxu0 0.0
        %3203 = vmatprep.subr.mxu0 0.0
        %3204 = vmatpush1.msra.mxu0 0.0
        %3205 = vmatprep.subr.mxu0 0.0
        %3206 = vmatpush1.msra.mxu0 0.0
        %3207 = vmatprep.subr.mxu0 0.0
        %3208 = vmatpush1.msra.mxu0 0.0
        %3209 = vmatprep.subr.mxu0 0.0
        %3210 = vmatpush1.msra.mxu0 0.0
        %3211 = vmatprep.subr.mxu0 0.0
        %3212 = vmatpush1.msra.mxu0 0.0
        %3213 = vmatprep.subr.mxu0 0.0
        %3214 = vmatpush1.msra.mxu0 0.0
        %3215 = vmatprep.subr.mxu0 0.0
        %3216 = vmatpush1.msra.mxu0 0.0
        %3217 = vmatprep.subr.mxu0 0.0
        %3218 = vmatpush1.msra.mxu0 0.0
        %3219 = vmatprep.subr.mxu0 0.0
        %3220 = vmatpush1.msra.mxu0 0.0
        %3221 = vmatprep.subr.mxu0 0.0
        %3222 = vmatpush1.msra.mxu0 0.0
        %3223 = vmatprep.subr.mxu0 0.0
        %3224 = vmatpush1.msra.mxu0 0.0
        %3225 = vmatprep.subr.mxu0 0.0
        %3226 = vmatpush1.msra.mxu0 0.0
        %3227 = vmatprep.subr.mxu0 0.0
        %3228 = vmatpush1.msra.mxu0 0.0
        %3229 = vmatprep.subr.mxu0 0.0
        %3230 = vmatpush1.msra.mxu0 0.0
        %3231 = vmatprep.subr.mxu0 0.0
        %3232 = vmatpush1.msra.mxu0 0.0
        %3233 = vmatprep.subr.mxu0 0.0
        %3234 = vmatpush1.msra.mxu0 0.0
        %3235 = vmatprep.subr.mxu0 0.0
        %3236 = vmatpush1.msra.mxu0 0.0
        %3237 = vmatprep.subr.mxu0 0.0
        %3238 = vmatpush1.msra.mxu0 0.0
        %3239 = vmatprep.subr.mxu0 0.0
        %3240 = vmatpush1.msra.mxu0 0.0
        %3241 = vmatprep.subr.mxu0 0.0
        %3242 = vmatpush1.msra.mxu0 0.0
        %3243 = vmatprep.subr.mxu0 0.0
        %3244 = vmatpush1.msra.mxu0 0.0
        %3245 = vmatprep.subr.mxu0 0.0
        %3246 = vmatpush1.msra.mxu0 0.0
        %3247 = vmatprep.subr.mxu0 0.0
        %3248 = vmatpush1.msra.mxu0 0.0
        %3249 = vmatprep.subr.mxu0 0.0
        %3250 = vmatpush1.msra.mxu0 0.0
        %3251 = vmatprep.mubr.f32.mxu0 0.0
        %3252 = vmatmul.mubr.f32.gmra.mrb[0].mxu0 %v3178
        %v3253 = vpop.f32.mrb[0].mxu0
        %v3254 = vadd.f32 0.0, %v3253
        %v3255 = vpop.f32.mrb[0].mxu0
        %3256 = vmatprep.mubr.f32.mxu0 0.0
        %3257 = vmatmul.mubr.f32.gmra.mrb[0].mxu0 %v3181
        %v3258 = vpop.f32.mrb[0].mxu0
        %v3259 = vadd.f32 0.0, %v3258
        %v3260 = vpop.f32.mrb[0].mxu0
        %3261 = vdwg.mxu0
        %v3263 = vsel %vm3176, %v455, 0
        %v3266 = vsel %vm3176, %v456, 0
        %3268 = vmatprep.subr.mxu0 0.0
        %3269 = vmatpush1.msra.mxu0 %v3172
        %3270 = vmatprep.subr.mxu0 0.0
        %3271 = vmatpush1.msra.mxu0 %v3173
        %3272 = vmatprep.subr.mxu0 0.0
        %3273 = vmatpush1.msra.mxu0 %v3174
        %3274 = vmatprep.subr.mxu0 0.0
        %3275 = vmatpush1.msra.mxu0 %v3185
        %3276 = vmatprep.subr.mxu0 0.0
        %3277 = vmatpush1.msra.mxu0 0.0
        %3278 = vmatprep.subr.mxu0 0.0
        %3279 = vmatpush1.msra.mxu0 0.0
        %3280 = vmatprep.subr.mxu0 0.0
        %3281 = vmatpush1.msra.mxu0 0.0
        %3282 = vmatprep.subr.mxu0 0.0
        %3283 = vmatpush1.msra.mxu0 0.0
        %3284 = vmatprep.subr.mxu0 0.0
        %3285 = vmatpush1.msra.mxu0 0.0
        %3286 = vmatprep.subr.mxu0 0.0
        %3287 = vmatpush1.msra.mxu0 0.0
        %3288 = vmatprep.subr.mxu0 0.0
        %3289 = vmatpush1.msra.mxu0 0.0
        %3290 = vmatprep.subr.mxu0 0.0
        %3291 = vmatpush1.msra.mxu0 0.0
        %3292 = vmatprep.subr.mxu0 0.0
        %3293 = vmatpush1.msra.mxu0 0.0
        %3294 = vmatprep.subr.mxu0 0.0
        %3295 = vmatpush1.msra.mxu0 0.0
        %3296 = vmatprep.subr.mxu0 0.0
        %3297 = vmatpush1.msra.mxu0 0.0
        %3298 = vmatprep.subr.mxu0 0.0
        %3299 = vmatpush1.msra.mxu0 0.0
        %3300 = vmatprep.subr.mxu0 0.0
        %3301 = vmatpush1.msra.mxu0 0.0
        %3302 = vmatprep.subr.mxu0 0.0
        %3303 = vmatpush1.msra.mxu0 0.0
        %3304 = vmatprep.subr.mxu0 0.0
        %3305 = vmatpush1.msra.mxu0 0.0
        %3306 = vmatprep.subr.mxu0 0.0
        %3307 = vmatpush1.msra.mxu0 0.0
        %3308 = vmatprep.subr.mxu0 0.0
        %3309 = vmatpush1.msra.mxu0 0.0
        %3310 = vmatprep.subr.mxu0 0.0
        %3311 = vmatpush1.msra.mxu0 0.0
        %3312 = vmatprep.subr.mxu0 0.0
        %3313 = vmatpush1.msra.mxu0 0.0
        %3314 = vmatprep.subr.mxu0 0.0
        %3315 = vmatpush1.msra.mxu0 0.0
        %3316 = vmatprep.subr.mxu0 0.0
        %3317 = vmatpush1.msra.mxu0 0.0
        %3318 = vmatprep.subr.mxu0 0.0
        %3319 = vmatpush1.msra.mxu0 0.0
        %3320 = vmatprep.subr.mxu0 0.0
        %3321 = vmatpush1.msra.mxu0 0.0
        %3322 = vmatprep.subr.mxu0 0.0
        %3323 = vmatpush1.msra.mxu0 0.0
        %3324 = vmatprep.subr.mxu0 0.0
        %3325 = vmatpush1.msra.mxu0 0.0
        %3326 = vmatprep.subr.mxu0 0.0
        %3327 = vmatpush1.msra.mxu0 0.0
        %3328 = vmatprep.subr.mxu0 0.0
        %3329 = vmatpush1.msra.mxu0 0.0
        %3330 = vmatprep.subr.mxu0 0.0
        %3331 = vmatpush1.msra.mxu0 0.0
        %3332 = vmatprep.mubr.f32.mxu0 0.0
        %3333 = vmatmul.mubr.f32.gmra.mrb[0].mxu0 %v3263
        %v3334 = vpop.f32.mrb[0].mxu0
        %v3335 = vadd.f32 0.0, %v3334
        %v3336 = vpop.f32.mrb[0].mxu0
        %3337 = vmatprep.mubr.f32.mxu0 0.0
        %3338 = vmatmul.mubr.f32.gmra.mrb[0].mxu0 %v3266
        %v3339 = vpop.f32.mrb[0].mxu0
        %v3340 = vadd.f32 0.0, %v3339
        %v3341 = vpop.f32.mrb[0].mxu0
        %3342 = vdwg.mxu0
        %v3343 = vmax.f32 %v3254, %v3335
        %v3344 = vmax.f32 %v3259, %v3340
        %s3345 = smul.u32 %s2592, 16
        %s3346 = scalar_lea.vmem [#allocation5], %s3345
        %3347 = vst.msk [vmem:[%s3346] sm:$0xff] %vm2777, %v3343
        %vm3348 = vcmask 61440
        %3349 = vst.msk [vmem:[%s3346 + $0x8] sm:$0x1f] %vm3348, %v3344
      $region90: #{tinyvgg_forward.1} parent=63 // loop_footer
        %s2596 = sadd.s32 1, %s2592
      $region91: #{tinyvgg_forward.1} parent=63 // loop_footer_branch
        %2591 = sbr.rel target = $region87
      $region92: #{tinyvgg_forward.1} parent=63 // loop_exit
        _
      %v3350 = vld [vmem:[#allocation5] sm:$0xff]
      %v3351 = vld [vmem:[#allocation5 + $0x8] sm:$0x1f]
      %v3352 = vld [vmem:[#allocation5 + $0x10] sm:$0xff]
      %v3353 = vld [vmem:[#allocation5 + $0x18] sm:$0x1f]
      %v3354 = vld [vmem:[#allocation5 + $0x20] sm:$0xff]
      %v3355 = vld [vmem:[#allocation5 + $0x28] sm:$0x1f]
      %v3356 = vld [vmem:[#allocation5 + $0x30] sm:$0xff]
      %v3357 = vld [vmem:[#allocation5 + $0x38] sm:$0x1f]
      %v3358 = vld [vmem:[#allocation5 + $0x40] sm:$0xff]
      %v3359 = vld [vmem:[#allocation5 + $0x48] sm:$0x1f]
      %v3360 = vld [vmem:[#allocation5 + $0x50] sm:$0xff]
      %v3361 = vld [vmem:[#allocation5 + $0x58] sm:$0x1f]
      %v3362 = vld [vmem:[#allocation5 + $0x60] sm:$0xff]
      %v3363 = vld [vmem:[#allocation5 + $0x68] sm:$0x1f]
      %v3364 = vld [vmem:[#allocation5 + $0x70] sm:$0xff]
      %v3365 = vld [vmem:[#allocation5 + $0x78] sm:$0x1f]
      %v3366 = vld [vmem:[#allocation5 + $0x80] sm:$0xff]
      %v3367 = vld [vmem:[#allocation5 + $0x88] sm:$0x1f]
      %v3368 = vld [vmem:[#allocation5 + $0x90] sm:$0xff]
      %v3369 = vld [vmem:[#allocation5 + $0x98] sm:$0x1f]
      %v3370 = vld [vmem:[#allocation5 + $0xa0] sm:$0xff]
      %v3371 = vld [vmem:[#allocation5 + $0xa8] sm:$0x1f]
      %v3372 = vld [vmem:[#allocation5 + $0xb0] sm:$0xff]
      %v3373 = vld [vmem:[#allocation5 + $0xb8] sm:$0x1f]
      %v3374 = vld [vmem:[#allocation5 + $0xc0] sm:$0xff]
      %v3375 = vld [vmem:[#allocation5 + $0xc8] sm:$0x1f]
      %v3376 = vld [vmem:[%s9] sm:$0xff]
      %v3377 = vld [vmem:[%s9 + $0x8] sm:$0x1f]
      %v3378 = vld [vmem:[%s9 + $0x10] sm:$0xff]
      %v3379 = vld [vmem:[%s9 + $0x18] sm:$0x1f]
      %v3380 = vld [vmem:[%s9 + $0x20] sm:$0xff]
      %v3381 = vld [vmem:[%s9 + $0x28] sm:$0x1f]
      %v3382 = vld [vmem:[%s9 + $0x30] sm:$0xff]
      %v3383 = vld [vmem:[%s9 + $0x38] sm:$0x1f]
      %v3384 = vld [vmem:[%s9 + $0x40] sm:$0xff]
      %v3385 = vld [vmem:[%s9 + $0x48] sm:$0x1f]
      %v3386 = vld [vmem:[%s9 + $0x50] sm:$0xff]
      %v3387 = vld [vmem:[%s9 + $0x58] sm:$0x1f]
      %v3388 = vld [vmem:[%s9 + $0x60] sm:$0xff]
      %v3389 = vld [vmem:[%s9 + $0x68] sm:$0x1f]
      %v3390 = vld [vmem:[%s9 + $0x70] sm:$0xff]
      %v3391 = vld [vmem:[%s9 + $0x78] sm:$0x1f]
      %v3392 = vld [vmem:[%s9 + $0x80] sm:$0xff]
      %v3393 = vld [vmem:[%s9 + $0x88] sm:$0x1f]
      %v3394 = vld [vmem:[%s9 + $0x90] sm:$0xff]
      %v3395 = vld [vmem:[%s9 + $0x98] sm:$0x1f]
      %v3396 = vld [vmem:[%s9 + $0xa0] sm:$0xff]
      %v3397 = vld [vmem:[%s9 + $0xa8] sm:$0x1f]
      %v3398 = vld [vmem:[%s9 + $0xb0] sm:$0xff]
      %v3399 = vld [vmem:[%s9 + $0xb8] sm:$0x1f]
      %v3400 = vld [vmem:[%s9 + $0xc0] sm:$0xff]
      %v3401 = vld [vmem:[%s9 + $0xc8] sm:$0x1f]
      %v3402 = vld [vmem:[%s9 + $0xd0] sm:$0xff]
      %v3403 = vld [vmem:[%s9 + $0xd8] sm:$0x1f]
      %v3404 = vld [vmem:[%s9 + $0xe0] sm:$0xff]
      %v3405 = vld [vmem:[%s9 + $0xe8] sm:$0x1f]
      %v3406 = vld [vmem:[%s9 + $0xf0] sm:$0xff]
      %v3407 = vld [vmem:[%s9 + $0xf8] sm:$0x1f]
      %v3408 = vld [vmem:[%s9 + $0x100] sm:$0xff]
      %v3409 = vld [vmem:[%s9 + $0x108] sm:$0x1f]
      %v3410 = vld [vmem:[%s9 + $0x110] sm:$0xff]
      %v3411 = vld [vmem:[%s9 + $0x118] sm:$0x1f]
      %v3412 = vld [vmem:[%s9 + $0x120] sm:$0xff]
      %v3413 = vld [vmem:[%s9 + $0x128] sm:$0x1f]
      %v3414 = vld [vmem:[%s9 + $0x130] sm:$0xff]
      %v3415 = vld [vmem:[%s9 + $0x138] sm:$0x1f]
      %v3416 = vld [vmem:[%s9 + $0x140] sm:$0xff]
      %v3417 = vld [vmem:[%s9 + $0x148] sm:$0x1f]
      %v3418 = vld [vmem:[%s9 + $0x150] sm:$0xff]
      %v3419 = vld [vmem:[%s9 + $0x158] sm:$0x1f]
      %v3420 = vld [vmem:[%s9 + $0x160] sm:$0xff]
      %v3421 = vld [vmem:[%s9 + $0x168] sm:$0x1f]
      %v3422 = vld [vmem:[%s9 + $0x170] sm:$0xff]
      %v3423 = vld [vmem:[%s9 + $0x178] sm:$0x1f]
      %v3424 = vld [vmem:[%s9 + $0x180] sm:$0xff]
      %v3425 = vld [vmem:[%s9 + $0x188] sm:$0x1f]
      %v3426 = vld [vmem:[%s9 + $0x190] sm:$0xff]
      %v3427 = vld [vmem:[%s9 + $0x198] sm:$0x1f]
      %v3428 = vld [vmem:[%s9 + $0x1a0] sm:$0xff]
      %v3429 = vld [vmem:[%s9 + $0x1a8] sm:$0x1f]
      %v3430 = vld [vmem:[%s9 + $0x1b0] sm:$0xff]
      %v3431 = vld [vmem:[%s9 + $0x1b8] sm:$0x1f]
      %v3432 = vld [vmem:[%s9 + $0x1c0] sm:$0xff]
      %v3433 = vld [vmem:[%s9 + $0x1c8] sm:$0x1f]
      %v3434 = vld [vmem:[%s9 + $0x1d0] sm:$0xff]
      %v3435 = vld [vmem:[%s9 + $0x1d8] sm:$0x1f]
      %v3436 = vld [vmem:[%s9 + $0x1e0] sm:$0xff]
      %v3437 = vld [vmem:[%s9 + $0x1e8] sm:$0x1f]
      %v3438 = vld [vmem:[%s9 + $0x1f0] sm:$0xff]
      %v3439 = vld [vmem:[%s9 + $0x1f8] sm:$0x1f]
      %v3440 = vld [vmem:[%s9 + $0x200] sm:$0xff]
      %v3441 = vld [vmem:[%s9 + $0x208] sm:$0x1f]
      %v3442 = vld [vmem:[%s9 + $0x210] sm:$0xff]
      %v3443 = vld [vmem:[%s9 + $0x218] sm:$0x1f]
      %v3444 = vld [vmem:[%s9 + $0x220] sm:$0xff]
      %v3445 = vld [vmem:[%s9 + $0x228] sm:$0x1f]
      %v3446 = vld [vmem:[%s9 + $0x230] sm:$0xff]
      %v3447 = vld [vmem:[%s9 + $0x238] sm:$0x1f]
      %v3448 = vld [vmem:[%s9 + $0x240] sm:$0xff]
      %v3449 = vld [vmem:[%s9 + $0x248] sm:$0x1f]
      %v3450 = vld [vmem:[%s9 + $0x250] sm:$0xff]
      %v3451 = vld [vmem:[%s9 + $0x258] sm:$0x1f]
      %v3452 = vld [vmem:[%s9 + $0x260] sm:$0xff]
      %v3453 = vld [vmem:[%s9 + $0x268] sm:$0x1f]
      %v3454 = vmul.f32 %v3350, %v3376
      %v3455 = vmul.f32 %v3351, %v3377
      %v3456 = vmul.f32 %v3352, %v3378
      %v3457 = vmul.f32 %v3353, %v3379
      %v3458 = vmul.f32 %v3354, %v3380
      %v3459 = vmul.f32 %v3355, %v3381
      %v3460 = vmul.f32 %v3356, %v3382
      %v3461 = vmul.f32 %v3357, %v3383
      %v3462 = vmul.f32 %v3358, %v3384
      %v3463 = vmul.f32 %v3359, %v3385
      %v3464 = vmul.f32 %v3360, %v3386
      %v3465 = vmul.f32 %v3361, %v3387
      %v3466 = vmul.f32 %v3362, %v3388
      %v3467 = vmul.f32 %v3363, %v3389
      %v3468 = vmul.f32 %v3364, %v3390
      %v3469 = vmul.f32 %v3365, %v3391
      %v3470 = vmul.f32 %v3366, %v3392
      %v3471 = vmul.f32 %v3367, %v3393
      %v3472 = vmul.f32 %v3368, %v3394
      %v3473 = vmul.f32 %v3369, %v3395
      %v3474 = vmul.f32 %v3370, %v3396
      %v3475 = vmul.f32 %v3371, %v3397
      %v3476 = vmul.f32 %v3372, %v3398
      %v3477 = vmul.f32 %v3373, %v3399
      %v3478 = vmul.f32 %v3374, %v3400
      %v3479 = vmul.f32 %v3375, %v3401
      %v3480 = vmul.f32 %v3350, %v3402
      %v3481 = vmul.f32 %v3351, %v3403
      %v3482 = vmul.f32 %v3352, %v3404
      %v3483 = vmul.f32 %v3353, %v3405
      %v3484 = vmul.f32 %v3354, %v3406
      %v3485 = vmul.f32 %v3355, %v3407
      %v3486 = vmul.f32 %v3356, %v3408
      %v3487 = vmul.f32 %v3357, %v3409
      %v3488 = vmul.f32 %v3358, %v3410
      %v3489 = vmul.f32 %v3359, %v3411
      %v3490 = vmul.f32 %v3360, %v3412
      %v3491 = vmul.f32 %v3361, %v3413
      %v3492 = vmul.f32 %v3362, %v3414
      %v3493 = vmul.f32 %v3363, %v3415
      %v3494 = vmul.f32 %v3364, %v3416
      %v3495 = vmul.f32 %v3365, %v3417
      %v3496 = vmul.f32 %v3366, %v3418
      %v3497 = vmul.f32 %v3367, %v3419
      %v3498 = vmul.f32 %v3368, %v3420
      %v3499 = vmul.f32 %v3369, %v3421
      %v3500 = vmul.f32 %v3370, %v3422
      %v3501 = vmul.f32 %v3371, %v3423
      %v3502 = vmul.f32 %v3372, %v3424
      %v3503 = vmul.f32 %v3373, %v3425
      %v3504 = vmul.f32 %v3374, %v3426
      %v3505 = vmul.f32 %v3375, %v3427
      %v3506 = vmul.f32 %v3350, %v3428
      %v3507 = vmul.f32 %v3351, %v3429
      %v3508 = vmul.f32 %v3352, %v3430
      %v3509 = vmul.f32 %v3353, %v3431
      %v3510 = vmul.f32 %v3354, %v3432
      %v3511 = vmul.f32 %v3355, %v3433
      %v3512 = vmul.f32 %v3356, %v3434
      %v3513 = vmul.f32 %v3357, %v3435
      %v3514 = vmul.f32 %v3358, %v3436
      %v3515 = vmul.f32 %v3359, %v3437
      %v3516 = vmul.f32 %v3360, %v3438
      %v3517 = vmul.f32 %v3361, %v3439
      %v3518 = vmul.f32 %v3362, %v3440
      %v3519 = vmul.f32 %v3363, %v3441
      %v3520 = vmul.f32 %v3364, %v3442
      %v3521 = vmul.f32 %v3365, %v3443
      %v3522 = vmul.f32 %v3366, %v3444
      %v3523 = vmul.f32 %v3367, %v3445
      %v3524 = vmul.f32 %v3368, %v3446
      %v3525 = vmul.f32 %v3369, %v3447
      %v3526 = vmul.f32 %v3370, %v3448
      %v3527 = vmul.f32 %v3371, %v3449
      %v3528 = vmul.f32 %v3372, %v3450
      %v3529 = vmul.f32 %v3373, %v3451
      %v3530 = vmul.f32 %v3374, %v3452
      %v3531 = vmul.f32 %v3375, %v3453
      %vm3532 = vcmask 64512
      %v3533 = vsel %vm3532, %v3454, 0.0
      %v3534 = vsel %vm3532, %v3456, 0.0
      %v3535 = vadd.f32 %v3533, %v3534
      %v3536 = vsel %vm3532, %v3458, 0.0
      %v3537 = vadd.f32 %v3535, %v3536
      %v3538 = vsel %vm3532, %v3460, 0.0
      %v3539 = vadd.f32 %v3537, %v3538
      %v3540 = vsel %vm3532, %v3462, 0.0
      %v3541 = vadd.f32 %v3539, %v3540
      %v3542 = vsel %vm3532, %v3464, 0.0
      %v3543 = vadd.f32 %v3541, %v3542
      %v3544 = vsel %vm3532, %v3466, 0.0
      %v3545 = vadd.f32 %v3543, %v3544
      %v3546 = vsel %vm3532, %v3468, 0.0
      %v3547 = vadd.f32 %v3545, %v3546
      %v3548 = vsel %vm3532, %v3470, 0.0
      %v3549 = vadd.f32 %v3547, %v3548
      %v3550 = vsel %vm3532, %v3472, 0.0
      %v3551 = vadd.f32 %v3549, %v3550
      %v3552 = vsel %vm3532, %v3474, 0.0
      %v3553 = vadd.f32 %v3551, %v3552
      %v3554 = vsel %vm3532, %v3476, 0.0
      %v3555 = vadd.f32 %v3553, %v3554
      %v3556 = vsel %vm3532, %v3478, 0.0
      %v3557 = vadd.f32 %v3555, %v3556
      %vm3558 = vcmask 61440
      %v3559 = vsel %vm3558, %v3455, 0.0
      %v3560 = vsel %vm3558, %v3457, 0.0
      %v3561 = vadd.f32 %v3559, %v3560
      %v3562 = vsel %vm3558, %v3459, 0.0
      %v3563 = vadd.f32 %v3561, %v3562
      %v3564 = vsel %vm3558, %v3461, 0.0
      %v3565 = vadd.f32 %v3563, %v3564
      %v3566 = vsel %vm3558, %v3463, 0.0
      %v3567 = vadd.f32 %v3565, %v3566
      %v3568 = vsel %vm3558, %v3465, 0.0
      %v3569 = vadd.f32 %v3567, %v3568
      %v3570 = vsel %vm3558, %v3467, 0.0
      %v3571 = vadd.f32 %v3569, %v3570
      %v3572 = vsel %vm3558, %v3469, 0.0
      %v3573 = vadd.f32 %v3571, %v3572
      %v3574 = vsel %vm3558, %v3471, 0.0
      %v3575 = vadd.f32 %v3573, %v3574
      %v3576 = vsel %vm3558, %v3473, 0.0
      %v3577 = vadd.f32 %v3575, %v3576
      %v3578 = vsel %vm3558, %v3475, 0.0
      %v3579 = vadd.f32 %v3577, %v3578
      %v3580 = vsel %vm3558, %v3477, 0.0
      %v3581 = vadd.f32 %v3579, %v3580
      %v3582 = vsel %vm3558, %v3479, 0.0
      %v3583 = vadd.f32 %v3581, %v3582
      %v3584 = vsel %vm3532, %v3480, 0.0
      %v3585 = vsel %vm3532, %v3482, 0.0
      %v3586 = vadd.f32 %v3584, %v3585
      %v3587 = vsel %vm3532, %v3484, 0.0
      %v3588 = vadd.f32 %v3586, %v3587
      %v3589 = vsel %vm3532, %v3486, 0.0
      %v3590 = vadd.f32 %v3588, %v3589
      %v3591 = vsel %vm3532, %v3488, 0.0
      %v3592 = vadd.f32 %v3590, %v3591
      %v3593 = vsel %vm3532, %v3490, 0.0
      %v3594 = vadd.f32 %v3592, %v3593
      %v3595 = vsel %vm3532, %v3492, 0.0
      %v3596 = vadd.f32 %v3594, %v3595
      %v3597 = vsel %vm3532, %v3494, 0.0
      %v3598 = vadd.f32 %v3596, %v3597
      %v3599 = vsel %vm3532, %v3496, 0.0
      %v3600 = vadd.f32 %v3598, %v3599
      %v3601 = vsel %vm3532, %v3498, 0.0
      %v3602 = vadd.f32 %v3600, %v3601
      %v3603 = vsel %vm3532, %v3500, 0.0
      %v3604 = vadd.f32 %v3602, %v3603
      %v3605 = vsel %vm3532, %v3502, 0.0
      %v3606 = vadd.f32 %v3604, %v3605
      %v3607 = vsel %vm3532, %v3504, 0.0
      %v3608 = vadd.f32 %v3606, %v3607
      %v3609 = vsel %vm3558, %v3481, 0.0
      %v3610 = vsel %vm3558, %v3483, 0.0
      %v3611 = vadd.f32 %v3609, %v3610
      %v3612 = vsel %vm3558, %v3485, 0.0
      %v3613 = vadd.f32 %v3611, %v3612
      %v3614 = vsel %vm3558, %v3487, 0.0
      %v3615 = vadd.f32 %v3613, %v3614
      %v3616 = vsel %vm3558, %v3489, 0.0
      %v3617 = vadd.f32 %v3615, %v3616
      %v3618 = vsel %vm3558, %v3491, 0.0
      %v3619 = vadd.f32 %v3617, %v3618
      %v3620 = vsel %vm3558, %v3493, 0.0
      %v3621 = vadd.f32 %v3619, %v3620
      %v3622 = vsel %vm3558, %v3495, 0.0
      %v3623 = vadd.f32 %v3621, %v3622
      %v3624 = vsel %vm3558, %v3497, 0.0
      %v3625 = vadd.f32 %v3623, %v3624
      %v3626 = vsel %vm3558, %v3499, 0.0
      %v3627 = vadd.f32 %v3625, %v3626
      %v3628 = vsel %vm3558, %v3501, 0.0
      %v3629 = vadd.f32 %v3627, %v3628
      %v3630 = vsel %vm3558, %v3503, 0.0
      %v3631 = vadd.f32 %v3629, %v3630
      %v3632 = vsel %vm3558, %v3505, 0.0
      %v3633 = vadd.f32 %v3631, %v3632
      %v3634 = vsel %vm3532, %v3506, 0.0
      %v3635 = vsel %vm3532, %v3508, 0.0
      %v3636 = vadd.f32 %v3634, %v3635
      %v3637 = vsel %vm3532, %v3510, 0.0
      %v3638 = vadd.f32 %v3636, %v3637
      %v3639 = vsel %vm3532, %v3512, 0.0
      %v3640 = vadd.f32 %v3638, %v3639
      %v3641 = vsel %vm3532, %v3514, 0.0
      %v3642 = vadd.f32 %v3640, %v3641
      %v3643 = vsel %vm3532, %v3516, 0.0
      %v3644 = vadd.f32 %v3642, %v3643
      %v3645 = vsel %vm3532, %v3518, 0.0
      %v3646 = vadd.f32 %v3644, %v3645
      %v3647 = vsel %vm3532, %v3520, 0.0
      %v3648 = vadd.f32 %v3646, %v3647
      %v3649 = vsel %vm3532, %v3522, 0.0
      %v3650 = vadd.f32 %v3648, %v3649
      %v3651 = vsel %vm3532, %v3524, 0.0
      %v3652 = vadd.f32 %v3650, %v3651
      %v3653 = vsel %vm3532, %v3526, 0.0
      %v3654 = vadd.f32 %v3652, %v3653
      %v3655 = vsel %vm3532, %v3528, 0.0
      %v3656 = vadd.f32 %v3654, %v3655
      %v3657 = vsel %vm3532, %v3530, 0.0
      %v3658 = vadd.f32 %v3656, %v3657
      %v3659 = vsel %vm3558, %v3507, 0.0
      %v3660 = vsel %vm3558, %v3509, 0.0
      %v3661 = vadd.f32 %v3659, %v3660
      %v3662 = vsel %vm3558, %v3511, 0.0
      %v3663 = vadd.f32 %v3661, %v3662
      %v3664 = vsel %vm3558, %v3513, 0.0
      %v3665 = vadd.f32 %v3663, %v3664
      %v3666 = vsel %vm3558, %v3515, 0.0
      %v3667 = vadd.f32 %v3665, %v3666
      %v3668 = vsel %vm3558, %v3517, 0.0
      %v3669 = vadd.f32 %v3667, %v3668
      %v3670 = vsel %vm3558, %v3519, 0.0
      %v3671 = vadd.f32 %v3669, %v3670
      %v3672 = vsel %vm3558, %v3521, 0.0
      %v3673 = vadd.f32 %v3671, %v3672
      %v3674 = vsel %vm3558, %v3523, 0.0
      %v3675 = vadd.f32 %v3673, %v3674
      %v3676 = vsel %vm3558, %v3525, 0.0
      %v3677 = vadd.f32 %v3675, %v3676
      %v3678 = vsel %vm3558, %v3527, 0.0
      %v3679 = vadd.f32 %v3677, %v3678
      %v3680 = vsel %vm3558, %v3529, 0.0
      %v3681 = vadd.f32 %v3679, %v3680
      %v3682 = vsel %vm3558, %v3531, 0.0
      %v3683 = vadd.f32 %v3681, %v3682
      %v3684 = vsel %vm3532, %v3557, 0.0
      %v3685 = vsel %vm3558, %v3583, 0.0
      %v3686 = vadd.f32 %v3684, %v3685
      %v3687 = vrot.slane %v3686, 4
      %v3688 = vadd.f32 %v3686, %v3687
      %v3689 = vrot.slane %v3688, 2
      %v3690 = vadd.f32 %v3688, %v3689
      %v3691 = vrot.slane %v3690, 1
      %v3692 = vadd.f32 %v3690, %v3691
      %v3693 = vsel %vm3532, %v3608, 0.0
      %v3694 = vsel %vm3558, %v3633, 0.0
      %v3695 = vadd.f32 %v3693, %v3694
      %v3696 = vrot.slane %v3695, 4
      %v3697 = vadd.f32 %v3695, %v3696
      %v3698 = vrot.slane %v3697, 2
      %v3699 = vadd.f32 %v3697, %v3698
      %v3700 = vrot.slane %v3699, 1
      %v3701 = vadd.f32 %v3699, %v3700
      %v3702 = vsel %vm3532, %v3658, 0.0
      %v3703 = vsel %vm3558, %v3683, 0.0
      %v3704 = vadd.f32 %v3702, %v3703
      %v3705 = vrot.slane %v3704, 4
      %v3706 = vadd.f32 %v3704, %v3705
      %v3707 = vrot.slane %v3706, 2
      %v3708 = vadd.f32 %v3706, %v3707
      %v3709 = vrot.slane %v3708, 1
      %v3710 = vadd.f32 %v3708, %v3709
      %vm3714 = vcmask 1041409
      %v3715 = vsel %vm3714, %v3701, %v3692
      %vm3716 = vcmask 1042434
      %v3717 = vsel %vm3716, %v3710, %v3715
      %vm3719 = vcmask 59392
      %v3720 = vsel %vm3719, %v3717, 0.0
      %3721 = vadd.xlane.f32.xlu0 %v3720
      %v3722 = vpop.xlane.xlu0 %3721
      %v3723 = vld [vmem:[%s10] sm:$0x7]
      %v3724 = vadd.f32 %v3722, %v3723
      %vm3725 = vcmask 2048
      %3726 = vst.msk [vmem:[%s384] sm:$0x7] %vm3725, %v3724
      %p3727 = scmp.lt.s32.totalorder %s22, 1
      %s3728 = scalar_select %p3727, %s22, 1
      %s3729 = smul.addr %s3728, 4
      %s3730 = scalar_lea.vmem %s11, %s3729
      // Predicated region
      $region93: #{tinyvgg_forward.1} parent=63 // pred_check
        %p3731 = pneg %p276
      $region94: #{tinyvgg_forward.1} parent=63 // pred_check_branch
        %3733 = sbr.rel (%p3731) target = $region96
      $region95: #{tinyvgg_forward.1} parent=63 // pred_region
        _
      $region96: #{tinyvgg_forward.1} parent=63 // pred_fallthru
        _
    $region64: #{tinyvgg_forward.1} parent=5 // pred_fallthru
      _
    %p3734 = scmp.le.s32.totalorder 2, %s17
    // Predicated region
    $region97: #{tinyvgg_forward.1} parent=5 // pred_check
      %p3735 = pneg %p3734
    $region98: #{tinyvgg_forward.1} parent=5 // pred_check_branch
      %3737 = sbr.rel (%p3735) target = $region100
    $region99: #{tinyvgg_forward.1} parent=5 // pred_region
      %s3738 = ssub.s32 %s17, 2
      // Predicated region
      $region101: #{tinyvgg_forward.1} parent=99 // pred_check
        %p3739 = pneg %p282
      $region102: #{tinyvgg_forward.1} parent=99 // pred_check_branch
        %3741 = sbr.rel (%p3739) target = $region104
      $region103: #{tinyvgg_forward.1} parent=99 // pred_region
        %p3742 = scmp.lt.s32.totalorder %s23, 1
        %s3743 = scalar_select %p3742, %s23, 1
        %s3744 = smul.addr %s3743, 4
        %s3745 = scalar_lea.vmem %s11, %s3744
      $region104: #{tinyvgg_forward.1} parent=99 // pred_fallthru
        _
    $region100: #{tinyvgg_forward.1} parent=5 // pred_fallthru
      _
  $region6: #{tinyvgg_forward.1} parent=0 // loop_footer
    %s21 = sadd.s32 1, %s17
  $region7: #{tinyvgg_forward.1} parent=0 // loop_footer_branch
    %16 = sbr.rel target = $region3
  $region8: #{tinyvgg_forward.1} parent=0 // loop_exit
    _

</llo_original>
